<compile_context>
chip_gen: v7x
topology: tpu7x:2x2x1
jax: 0.10.0
libtpu: 0.0.40
codegen_flags: <defaults>
</compile_context>

<pallas_src>
import functools
import math

import jax
import jax.numpy as jnp
from jax.experimental import pallas as pl
from jax.experimental.pallas import tpu as pltpu

EPS = 1e-5  # PyTorch InstanceNorm2d default eps


# --------------------------- in-kernel atan2 (f32) ---------------------------
def _recip(x):
    # EUP approximate reciprocal + one Newton step: ~f32 accuracy while keeping
    # the divide off the VPU critical path (review: approx error ~2^-12 would
    # otherwise dominate the atan polynomial accuracy).
    r = pl.reciprocal(x, approx=True)
    return r * (jnp.float32(2.0) - x * r)


def _atan_poly(z):
    # Cephes atanf minimax polynomial, valid for |z| <= tan(pi/8).
    z2 = z * z
    p = jnp.float32(8.05374449538e-2)
    p = p * z2 - jnp.float32(1.38776856032e-1)
    p = p * z2 + jnp.float32(1.99777106478e-1)
    p = p * z2 - jnp.float32(3.33329491539e-1)
    return z + z * z2 * p


def _atan01(z):
    # atan for z in [0, 1]: single reduction step, argument never leaves the
    # polynomial's domain, no infinities anywhere.
    mid = z > jnp.float32(0.4142135623730951)          # tan(pi/8)
    zr = jnp.where(mid, (z - 1.0) * _recip(z + 1.0), z)
    base = jnp.where(mid, jnp.float32(math.pi / 4), jnp.float32(0.0))
    return base + _atan_poly(zr)


def _atan2(y, x):
    # TODO(synk): Mosaic has no guaranteed native atan2 lowering; polynomial
    # implementation (~1e-6 rad).  Matches torch.atan2 except at signed-zero
    # corner cases (e.g. atan2(+-0, -0.0)), irrelevant for real-valued data.
    pi = jnp.float32(math.pi)
    ax, ay = jnp.abs(x), jnp.abs(y)
    mx = jnp.maximum(ax, ay)
    mn = jnp.minimum(ax, ay)
    mx_safe = jnp.where(mx == 0, jnp.float32(1.0), mx)
    r = _atan01(mn * _recip(mx_safe))
    r = jnp.where(ay > ax, pi / 2 - r, r)
    r = jnp.where(x < 0, pi - r, r)
    return jnp.where(y < 0, -r, r)


# -------------------------------- fused kernel -------------------------------
def _phase_decoder_kernel(x_ref, m_ref, p_ref, o_ref, *, specs, depth, B, C, H, W):
    f32 = jnp.float32
    HW = H * W
    CB = C * B

    def getp(name):
        off, r, c = specs[name]
        return p_ref[0:r, off:off + c]                 # static slice of the slab

    # Precomputed 0/1 masks: rows 0..2 = w-validity for kw=-1/0/+1;
    # rows 3+3*i+kh = h-validity for dense block i, tap kh (dilation 2**i).
    wv = [m_ref[k:k + 1, :] for k in range(3)]         # (1, HW) each

    # ---------------- DS_DDB: dense blocks with dense skip concat ------------
    skip = x_ref[...]                                  # (C*B, HW), rows = (c, b)
    y = skip
    for i in range(depth):
        rows = CB * (i + 1)
        w9 = getp(f"dw_w{i}")                          # (rows, 9)
        dwb = getp(f"dw_b{i}")                         # (rows, 1)
        pww = getp(f"pw_w{i}")                         # (CB, rows) block-diag over batch
        pwb = getp(f"pw_b{i}")                         # (CB, 1)
        g, bt, al = getp(f"g{i}"), getp(f"bt{i}"), getp(f"al{i}")

        # Depthwise dilated 3x3, 'same' padding: static lane rotations (XLU)
        # masked at image boundaries; wrapped lanes are provably masked and
        # rolls never cross batches (batch is on the sublane axis).
        dil = 2 ** i
        acc = jnp.zeros((rows, HW), f32)
        for kh in range(3):
            hmask = m_ref[3 + 3 * i + kh:4 + 3 * i + kh, :]
            for kw in range(3):
                delta = (kh - 1) * dil * W + (kw - 1)  # tap reads lane L + delta
                tap = pltpu.roll(skip, (-delta) % HW, axis=1) if delta else skip
                acc = acc + tap * (hmask * wv[kw]) * w9[:, 3 * kh + kw:3 * kh + kw + 1]
        hdw = acc + dwb

        # 1x1 conv -> InstanceNorm2d(affine) -> PReLU (per-row stats).
        y = jnp.dot(pww, hdw, preferred_element_type=f32) + pwb   # (CB, HW)
        mean = jnp.mean(y, axis=1, keepdims=True)
        d = y - mean
        var = jnp.mean(d * d, axis=1, keepdims=True)               # biased var
        yn = d * jax.lax.rsqrt(var + f32(EPS)) * g + bt
        y = jnp.where(yn >= 0, yn, al * yn)
        skip = jnp.concatenate([y, skip], axis=0)      # channel concat == row concat

    # --------- ConvTranspose2d (1,3) stride (1,2) -> InstanceNorm -> PReLU ----
    ctw = getp("ct_w")                                 # (3*CB, CB)
    cbias, cg, cbt, ca = getp("ct_b"), getp("ct_g"), getp("ct_bt"), getp("ct_al")
    z = jnp.dot(ctw, y, preferred_element_type=f32)    # (3*CB, HW)
    y0, y1, y2 = z[0:CB, :], z[CB:2 * CB, :], z[2 * CB:3 * CB, :]

    not_col0 = wv[0]                                   # w >= 1
    last_col = f32(1.0) - wv[2]                        # w == W-1

    # De-interleaved ConvT output: ev = even cols 0..2W-2, od = odd cols,
    # lc = final col 2W (only lanes with w == W-1 are real output).
    ev = cbias + y0 + pltpu.roll(y2, 1, axis=1) * not_col0
    od = cbias + y1
    lc = cbias + y2

    # InstanceNorm over the true H*(2W+1) positions: plain per-row reductions.
    cnt = f32(H * (2 * W + 1))
    s = (jnp.sum(ev, axis=1, keepdims=True) + jnp.sum(od, axis=1, keepdims=True)
         + jnp.sum(lc * last_col, axis=1, keepdims=True))
    mean = s / cnt
    d_ev, d_od, d_lc = ev - mean, od - mean, (lc - mean) * last_col
    ss = (jnp.sum(d_ev * d_ev, axis=1, keepdims=True)
          + jnp.sum(d_od * d_od, axis=1, keepdims=True)
          + jnp.sum(d_lc * d_lc, axis=1, keepdims=True))
    inv = jax.lax.rsqrt(ss / cnt + f32(EPS))

    def norm_act(v):
        vn = (v - mean) * inv * cg + cbt
        return jnp.where(vn >= 0, vn, ca * vn)

    # Row-stack ev|od|lc -> (3*CB, HW); the head matmul is block-diagonal over
    # (part, batch), padded to 4 parts so the real/imag halves are sublane-tile
    # aligned.  The atan2 tail then runs on two FULL (4B, HW) vreg slabs.
    cat = jnp.concatenate([norm_act(ev), norm_act(od), norm_act(lc)], axis=0)
    hw_ = getp("head_w")                               # (2*4*B, 3*CB)
    hb_ = getp("head_b")                               # (2*4*B, 1)
    rv = jnp.dot(hw_, cat, preferred_element_type=f32) + hb_      # (8B, HW)
    half = 4 * B
    o_ref[...] = _atan2(rv[half:2 * half, :], rv[0:half, :]).astype(o_ref.dtype)


# --------------------------- parameters & forward ----------------------------
def init_params(key, dense_channel, depth=4, out_channel=1):
    keys = iter(jax.random.split(key, 32))
    C = dense_channel
    dense = []
    for i in range(depth):
        cin = C * (i + 1)
        dense.append(dict(
            dw_w=0.1 * jax.random.normal(next(keys), (cin, 3, 3), jnp.float32),
            dw_b=0.05 * jax.random.normal(next(keys), (cin, 1, 1), jnp.float32),
            pw_w=0.1 * jax.random.normal(next(keys), (C, cin), jnp.float32),
            pw_b=0.05 * jax.random.normal(next(keys), (C, 1), jnp.float32),
            gamma=jnp.ones((C, 1), jnp.float32),          # InstanceNorm affine
            beta=jnp.zeros((C, 1), jnp.float32),
            alpha=jnp.full((C, 1), 0.25, jnp.float32),    # PReLU default init
        ))
    phase_conv = dict(
        w0=0.1 * jax.random.normal(next(keys), (C, 1, C), jnp.float32),
        w1=0.1 * jax.random.normal(next(keys), (C, 1, C), jnp.float32),
        w2=0.1 * jax.random.normal(next(keys), (C, 1, C), jnp.float32),
        b=0.05 * jax.random.normal(next(keys), (C, 1, 1), jnp.float32),
        gamma=jnp.ones((C, 1, 1), jnp.float32),
        beta=jnp.zeros((C, 1, 1), jnp.float32),
        alpha=jnp.full((C, 1, 1), 0.25, jnp.float32),
    )
    out = dict(
        wr=0.1 * jax.random.normal(next(keys), (C, 1, 1), jnp.float32),
        br=0.05 * jax.random.normal(next(keys), (out_channel, 1, 1), jnp.float32),
        wi=0.1 * jax.random.normal(next(keys), (C, 1, 1), jnp.float32),
        bi=0.05 * jax.random.normal(next(keys), (out_channel, 1, 1), jnp.float32),
    )
    return dict(dense=dense, phase_conv=phase_conv, out=out)


def _kron_eye(w, n):
    """kron(w, I_n) built with elementwise ops (exact, no matmul rounding)."""
    r, c = w.shape
    eye = jnp.eye(n, dtype=w.dtype)
    return (w[:, None, :, None] * eye[None, :, None, :]).reshape(r * n, c * n)


def phase_decoder_forward(params, x):
    B, C, H, W = x.shape
    depth = len(params["dense"])
    HW = H * W
    CB = C * B
    f32 = jnp.float32

    # ---- activation layout: rows = (channel, batch), lanes = H*W ----
    x_flat = jnp.transpose(x, (1, 0, 2, 3)).reshape(CB, HW).astype(f32)

    # ---- one packed boundary-mask slab (replaces in-kernel h/w index math) ----
    pos = jnp.arange(HW, dtype=jnp.int32)
    h_idx, w_idx = pos // W, pos % W
    mrows = [(w_idx >= 1).astype(f32),                 # kw = -1 valid
             jnp.ones((HW,), f32),                     # kw =  0
             (w_idx <= W - 2).astype(f32)]             # kw = +1 valid
    for i in range(depth):
        dil = 2 ** i
        for kh in range(3):
            dh = (kh - 1) * dil
            mrows.append(((h_idx + dh >= 0) & (h_idx + dh < H)).astype(f32))
    masks = jnp.stack(mrows, axis=0)                   # (3 + 3*depth, HW)

    # ---- one packed parameter slab (one DMA instead of ~35 tiny ones) ----
    pieces, specs, ncol = [], {}, 0

    def add(name, a):
        nonlocal ncol
        a = a.astype(f32)
        specs[name] = (ncol, a.shape[0], a.shape[1])
        pieces.append(a)
        ncol += a.shape[1]

    for i, bp in enumerate(params["dense"]):
        cin = bp["dw_w"].shape[0]
        add(f"dw_w{i}", jnp.repeat(bp["dw_w"].reshape(cin, 9), B, axis=0))
        add(f"dw_b{i}", jnp.repeat(bp["dw_b"].reshape(cin, 1), B, axis=0))
        add(f"pw_w{i}", _kron_eye(bp["pw_w"], B))
        add(f"pw_b{i}", jnp.repeat(bp["pw_b"], B, axis=0))
        add(f"g{i}", jnp.repeat(bp["gamma"], B, axis=0))
        add(f"bt{i}", jnp.repeat(bp["beta"], B, axis=0))
        add(f"al{i}", jnp.repeat(bp["alpha"], B, axis=0))
    pc = params["phase_conv"]
    wT = jnp.concatenate([pc["w0"][:, 0, :], pc["w1"][:, 0, :], pc["w2"][:, 0, :]],
                         axis=0)                       # (3C, C)
    add("ct_w", _kron_eye(wT, B))
    add("ct_b", jnp.repeat(pc["b"].reshape(C, 1), B, axis=0))
    add("ct_g", jnp.repeat(pc["gamma"].reshape(C, 1), B, axis=0))
    add("ct_bt", jnp.repeat(pc["beta"].reshape(C, 1), B, axis=0))
    add("ct_al", jnp.repeat(pc["alpha"].reshape(C, 1), B, axis=0))
    po = params["out"]
    # TODO(synk): packed head assumes out_channel == 1 (the module default).
    whead = jnp.concatenate([po["wr"].reshape(1, C), po["wi"].reshape(1, C)], axis=0)
    part_pad = jnp.eye(4, 3, dtype=f32)                # parts (ev,od,lc) + 1 zero pad
    eyeB = jnp.eye(B, dtype=f32)
    head_w = (whead[:, None, None, None, :, None]
              * part_pad[None, :, None, :, None, None]
              * eyeB[None, None, :, None, None, :]).reshape(2 * 4 * B, 3 * CB)
    add("head_w", head_w)
    bvec = jnp.concatenate([po["br"].reshape(1), po["bi"].reshape(1)]).astype(f32)
    head_b = (bvec[:, None, None] * jnp.array([1., 1., 1., 0.], f32)[None, :, None]
              * jnp.ones((1, 1, B), f32)).reshape(2 * 4 * B, 1)
    add("head_b", head_b)

    max_rows = max(a.shape[0] for a in pieces)
    pslab = jnp.concatenate(
        [jnp.pad(a, ((0, max_rows - a.shape[0]), (0, 0))) for a in pieces], axis=1)

    kern = functools.partial(_phase_decoder_kernel, specs=specs,
                             depth=depth, B=B, C=C, H=H, W=W)
    # Single fused, gridless invocation: 3 input DMAs + 1 lane-dense output DMA,
    # everything (<1 MiB) resident in VMEM.
    # TODO(synk): for realistic spectrogram lengths (large T) tile the T axis
    # with a "parallel" grid dimension (uses both v7x TensorCores) sized against
    # v7x's 64 MiB VMEM, carrying InstanceNorm stats across tiles.
    ph = pl.pallas_call(
        kern,
        out_shape=jax.ShapeDtypeStruct((4 * B, HW), jnp.float32),
    )(x_flat, masks, pslab)

    # ---- final column interleave -> (B, 1, H, 2W+1); tiny XLA glue ----
    ev = ph[0:B].reshape(B, H, W)
    od = ph[B:2 * B].reshape(B, H, W)
    lc = ph[2 * B:3 * B].reshape(B, H, W)[..., W - 1:]
    inter = jnp.stack([ev, od], axis=-1).reshape(B, H, 2 * W)
    return jnp.concatenate([inter, lc], axis=-1)[:, None, :, :]


# -------------------------------------- main ---------------------------------
if __name__ == "__main__":
    dense_channel = 4
    B, C, T, F = 2, 4, 16, 16

    key = jax.random.PRNGKey(0)
    kx, kp = jax.random.split(key)
    x = jax.random.normal(kx, (B, C, T, F), jnp.float32)
    params = init_params(kp, dense_channel)

    out = jax.jit(phase_decoder_forward)(params, x)
    out = jax.block_until_ready(out)

    assert out.shape == (B, 1, T, 2 * F + 1), out.shape
    assert bool(jnp.all(jnp.isfinite(out)))
    assert bool(jnp.all(jnp.abs(out) <= math.pi + 1e-3))
    print("KERNEL_OK")
</pallas_src>

<mosaic_0001>
module attributes {stable_mosaic.version = 11 : i64} {
  func.func @_phase_decoder_kernel(%arg0: memref<8x256xf32, #tpu.memory_space<vmem>>, %arg1: memref<15x256xf32, #tpu.memory_space<vmem>>, %arg2: memref<32x173xf32, #tpu.memory_space<vmem>>, %arg3: memref<8x256xf32, #tpu.memory_space<vmem>>) attributes {dimension_semantics = [], scalar_prefetch = 0 : i64, scratch_operands = 0 : i64, tpu.core_type = #tpu.core_type<tc>} {
    %c0 = arith.constant 0 : index
    %c0_0 = arith.constant 0 : index
    %0 = vector.load %arg1[%c0, %c0_0] : memref<15x256xf32, #tpu.memory_space<vmem>>, vector<1x256xf32>
    %c1 = arith.constant 1 : index
    %c0_1 = arith.constant 0 : index
    %1 = vector.load %arg1[%c1, %c0_1] : memref<15x256xf32, #tpu.memory_space<vmem>>, vector<1x256xf32>
    %c2 = arith.constant 2 : index
    %c0_2 = arith.constant 0 : index
    %2 = vector.load %arg1[%c2, %c0_2] : memref<15x256xf32, #tpu.memory_space<vmem>>, vector<1x256xf32>
    %c0_3 = arith.constant 0 : index
    %c0_4 = arith.constant 0 : index
    %3 = vector.load %arg0[%c0_3, %c0_4] : memref<8x256xf32, #tpu.memory_space<vmem>>, vector<8x256xf32>
    %c0_5 = arith.constant 0 : index
    %c0_6 = arith.constant 0 : index
    %4 = vector.load %arg2[%c0_5, %c0_6] : memref<32x173xf32, #tpu.memory_space<vmem>>, vector<8x9xf32>
    %c0_7 = arith.constant 0 : index
    %c9 = arith.constant 9 : index
    %5 = vector.load %arg2[%c0_7, %c9] : memref<32x173xf32, #tpu.memory_space<vmem>>, vector<8x1xf32>
    %c0_8 = arith.constant 0 : index
    %c10 = arith.constant 10 : index
    %6 = vector.load %arg2[%c0_8, %c10] : memref<32x173xf32, #tpu.memory_space<vmem>>, vector<8x8xf32>
    %c0_9 = arith.constant 0 : index
    %c18 = arith.constant 18 : index
    %7 = vector.load %arg2[%c0_9, %c18] : memref<32x173xf32, #tpu.memory_space<vmem>>, vector<8x1xf32>
    %c0_10 = arith.constant 0 : index
    %c19 = arith.constant 19 : index
    %8 = vector.load %arg2[%c0_10, %c19] : memref<32x173xf32, #tpu.memory_space<vmem>>, vector<8x1xf32>
    %c0_11 = arith.constant 0 : index
    %c20 = arith.constant 20 : index
    %9 = vector.load %arg2[%c0_11, %c20] : memref<32x173xf32, #tpu.memory_space<vmem>>, vector<8x1xf32>
    %c0_12 = arith.constant 0 : index
    %c21 = arith.constant 21 : index
    %10 = vector.load %arg2[%c0_12, %c21] : memref<32x173xf32, #tpu.memory_space<vmem>>, vector<8x1xf32>
    %cst = arith.constant 0.000000e+00 : f32
    %11 = vector.broadcast %cst : f32 to vector<8x256xf32>
    %c3 = arith.constant 3 : index
    %c0_13 = arith.constant 0 : index
    %12 = vector.load %arg1[%c3, %c0_13] : memref<15x256xf32, #tpu.memory_space<vmem>>, vector<1x256xf32>
    %c17_i32 = arith.constant 17 : i32
    %13 = tpu.dynamic_rotate %3 by %c17_i32 dim 1 : vector<8x256xf32>, i32 -> vector<8x256xf32>
    %14 = arith.mulf %12, %0 : vector<1x256xf32>
    %15 = vector.broadcast %14 : vector<1x256xf32> to vector<8x256xf32>
    %16 = arith.mulf %13, %15 : vector<8x256xf32>
    %17 = vector.extract_strided_slice %4 {offsets = [0, 0], sizes = [8, 1], strides = [1, 1]} : vector<8x9xf32> to vector<8x1xf32>
    %18 = vector.broadcast %17 : vector<8x1xf32> to vector<8x256xf32>
    %19 = arith.mulf %16, %18 : vector<8x256xf32>
    %20 = arith.addf %11, %19 : vector<8x256xf32>
    %c16_i32 = arith.constant 16 : i32
    %21 = tpu.dynamic_rotate %3 by %c16_i32 dim 1 : vector<8x256xf32>, i32 -> vector<8x256xf32>
    %22 = arith.mulf %12, %1 : vector<1x256xf32>
    %23 = vector.broadcast %22 : vector<1x256xf32> to vector<8x256xf32>
    %24 = arith.mulf %21, %23 : vector<8x256xf32>
    %25 = vector.extract_strided_slice %4 {offsets = [0, 1], sizes = [8, 1], strides = [1, 1]} : vector<8x9xf32> to vector<8x1xf32>
    %26 = vector.broadcast %25 : vector<8x1xf32> to vector<8x256xf32>
    %27 = arith.mulf %24, %26 : vector<8x256xf32>
    %28 = arith.addf %20, %27 : vector<8x256xf32>
    %c15_i32 = arith.constant 15 : i32
    %29 = tpu.dynamic_rotate %3 by %c15_i32 dim 1 : vector<8x256xf32>, i32 -> vector<8x256xf32>
    %30 = arith.mulf %12, %2 : vector<1x256xf32>
    %31 = vector.broadcast %30 : vector<1x256xf32> to vector<8x256xf32>
    %32 = arith.mulf %29, %31 : vector<8x256xf32>
    %33 = vector.extract_strided_slice %4 {offsets = [0, 2], sizes = [8, 1], strides = [1, 1]} : vector<8x9xf32> to vector<8x1xf32>
    %34 = vector.broadcast %33 : vector<8x1xf32> to vector<8x256xf32>
    %35 = arith.mulf %32, %34 : vector<8x256xf32>
    %36 = arith.addf %28, %35 : vector<8x256xf32>
    %c4 = arith.constant 4 : index
    %c0_14 = arith.constant 0 : index
    %37 = vector.load %arg1[%c4, %c0_14] : memref<15x256xf32, #tpu.memory_space<vmem>>, vector<1x256xf32>
    %c1_i32 = arith.constant 1 : i32
    %38 = tpu.dynamic_rotate %3 by %c1_i32 dim 1 : vector<8x256xf32>, i32 -> vector<8x256xf32>
    %39 = arith.mulf %37, %0 : vector<1x256xf32>
    %40 = vector.broadcast %39 : vector<1x256xf32> to vector<8x256xf32>
    %41 = arith.mulf %38, %40 : vector<8x256xf32>
    %42 = vector.extract_strided_slice %4 {offsets = [0, 3], sizes = [8, 1], strides = [1, 1]} : vector<8x9xf32> to vector<8x1xf32>
    %43 = vector.broadcast %42 : vector<8x1xf32> to vector<8x256xf32>
    %44 = arith.mulf %41, %43 : vector<8x256xf32>
    %45 = arith.addf %36, %44 : vector<8x256xf32>
    %46 = arith.mulf %37, %1 : vector<1x256xf32>
    %47 = vector.broadcast %46 : vector<1x256xf32> to vector<8x256xf32>
    %48 = arith.mulf %3, %47 : vector<8x256xf32>
    %49 = vector.extract_strided_slice %4 {offsets = [0, 4], sizes = [8, 1], strides = [1, 1]} : vector<8x9xf32> to vector<8x1xf32>
    %50 = vector.broadcast %49 : vector<8x1xf32> to vector<8x256xf32>
    %51 = arith.mulf %48, %50 : vector<8x256xf32>
    %52 = arith.addf %45, %51 : vector<8x256xf32>
    %c255_i32 = arith.constant 255 : i32
    %53 = tpu.dynamic_rotate %3 by %c255_i32 dim 1 : vector<8x256xf32>, i32 -> vector<8x256xf32>
    %54 = arith.mulf %37, %2 : vector<1x256xf32>
    %55 = vector.broadcast %54 : vector<1x256xf32> to vector<8x256xf32>
    %56 = arith.mulf %53, %55 : vector<8x256xf32>
    %57 = vector.extract_strided_slice %4 {offsets = [0, 5], sizes = [8, 1], strides = [1, 1]} : vector<8x9xf32> to vector<8x1xf32>
    %58 = vector.broadcast %57 : vector<8x1xf32> to vector<8x256xf32>
    %59 = arith.mulf %56, %58 : vector<8x256xf32>
    %60 = arith.addf %52, %59 : vector<8x256xf32>
    %c5 = arith.constant 5 : index
    %c0_15 = arith.constant 0 : index
    %61 = vector.load %arg1[%c5, %c0_15] : memref<15x256xf32, #tpu.memory_space<vmem>>, vector<1x256xf32>
    %c241_i32 = arith.constant 241 : i32
    %62 = tpu.dynamic_rotate %3 by %c241_i32 dim 1 : vector<8x256xf32>, i32 -> vector<8x256xf32>
    %63 = arith.mulf %61, %0 : vector<1x256xf32>
    %64 = vector.broadcast %63 : vector<1x256xf32> to vector<8x256xf32>
    %65 = arith.mulf %62, %64 : vector<8x256xf32>
    %66 = vector.extract_strided_slice %4 {offsets = [0, 6], sizes = [8, 1], strides = [1, 1]} : vector<8x9xf32> to vector<8x1xf32>
    %67 = vector.broadcast %66 : vector<8x1xf32> to vector<8x256xf32>
    %68 = arith.mulf %65, %67 : vector<8x256xf32>
    %69 = arith.addf %60, %68 : vector<8x256xf32>
    %c240_i32 = arith.constant 240 : i32
    %70 = tpu.dynamic_rotate %3 by %c240_i32 dim 1 : vector<8x256xf32>, i32 -> vector<8x256xf32>
    %71 = arith.mulf %61, %1 : vector<1x256xf32>
    %72 = vector.broadcast %71 : vector<1x256xf32> to vector<8x256xf32>
    %73 = arith.mulf %70, %72 : vector<8x256xf32>
    %74 = vector.extract_strided_slice %4 {offsets = [0, 7], sizes = [8, 1], strides = [1, 1]} : vector<8x9xf32> to vector<8x1xf32>
    %75 = vector.broadcast %74 : vector<8x1xf32> to vector<8x256xf32>
    %76 = arith.mulf %73, %75 : vector<8x256xf32>
    %77 = arith.addf %69, %76 : vector<8x256xf32>
    %c239_i32 = arith.constant 239 : i32
    %78 = tpu.dynamic_rotate %3 by %c239_i32 dim 1 : vector<8x256xf32>, i32 -> vector<8x256xf32>
    %79 = arith.mulf %61, %2 : vector<1x256xf32>
    %80 = vector.broadcast %79 : vector<1x256xf32> to vector<8x256xf32>
    %81 = arith.mulf %78, %80 : vector<8x256xf32>
    %82 = vector.extract_strided_slice %4 {offsets = [0, 8], sizes = [8, 1], strides = [1, 1]} : vector<8x9xf32> to vector<8x1xf32>
    %83 = vector.broadcast %82 : vector<8x1xf32> to vector<8x256xf32>
    %84 = arith.mulf %81, %83 : vector<8x256xf32>
    %85 = arith.addf %77, %84 : vector<8x256xf32>
    %86 = vector.broadcast %5 : vector<8x1xf32> to vector<8x256xf32>
    %87 = arith.addf %85, %86 : vector<8x256xf32>
    %cst_16 = arith.constant dense<0.000000e+00> : vector<8x256xf32>
    %88 = tpu.matmul %6, %87, %cst_16 {dimension_numbers = #tpu.dot_dimension_numbers<[1], [0], [0], [1], [0, 0, 1, 1], [], []>} : vector<8x8xf32>, vector<8x256xf32>, vector<8x256xf32> -> vector<8x256xf32>
    %89 = vector.broadcast %7 : vector<8x1xf32> to vector<8x256xf32>
    %90 = arith.addf %88, %89 : vector<8x256xf32>
    %cst_17 = arith.constant dense<0.000000e+00> : vector<8xf32>
    %91 = vector.multi_reduction <add>, %90, %cst_17 [1] : vector<8x256xf32> to vector<8xf32>
    %92 = vector.shape_cast %91 : vector<8xf32> to vector<8x1xf32>
    %cst_18 = arith.constant 2.560000e+02 : f32
    %93 = vector.broadcast %cst_18 : f32 to vector<8x1xf32>
    %94 = arith.divf %92, %93 : vector<8x1xf32>
    %95 = vector.broadcast %94 : vector<8x1xf32> to vector<8x256xf32>
    %96 = arith.subf %90, %95 : vector<8x256xf32>
    %97 = arith.mulf %96, %96 : vector<8x256xf32>
    %cst_19 = arith.constant dense<0.000000e+00> : vector<8xf32>
    %98 = vector.multi_reduction <add>, %97, %cst_19 [1] : vector<8x256xf32> to vector<8xf32>
    %99 = vector.shape_cast %98 : vector<8xf32> to vector<8x1xf32>
    %cst_20 = arith.constant 2.560000e+02 : f32
    %100 = vector.broadcast %cst_20 : f32 to vector<8x1xf32>
    %101 = arith.divf %99, %100 : vector<8x1xf32>
    %cst_21 = arith.constant 9.99999974E-6 : f32
    %102 = vector.broadcast %cst_21 : f32 to vector<8x1xf32>
    %103 = arith.addf %101, %102 : vector<8x1xf32>
    %104 = math.rsqrt %103 : vector<8x1xf32>
    %105 = vector.broadcast %104 : vector<8x1xf32> to vector<8x256xf32>
    %106 = arith.mulf %96, %105 : vector<8x256xf32>
    %107 = vector.broadcast %8 : vector<8x1xf32> to vector<8x256xf32>
    %108 = arith.mulf %106, %107 : vector<8x256xf32>
    %109 = vector.broadcast %9 : vector<8x1xf32> to vector<8x256xf32>
    %110 = arith.addf %108, %109 : vector<8x256xf32>
    %cst_22 = arith.constant 0.000000e+00 : f32
    %111 = vector.broadcast %cst_22 : f32 to vector<8x256xf32>
    %112 = arith.cmpf oge, %110, %111 : vector<8x256xf32>
    %113 = vector.broadcast %10 : vector<8x1xf32> to vector<8x256xf32>
    %114 = arith.mulf %113, %110 : vector<8x256xf32>
    %115 = arith.select %112, %110, %114 : vector<8x256xi1>, vector<8x256xf32>
    %116 = tpu.concatenate %115, %3 in 0 : vector<8x256xf32>, vector<8x256xf32> -> vector<16x256xf32>
    %c0_23 = arith.constant 0 : index
    %c22 = arith.constant 22 : index
    %117 = vector.load %arg2[%c0_23, %c22] : memref<32x173xf32, #tpu.memory_space<vmem>>, vector<16x9xf32>
    %c0_24 = arith.constant 0 : index
    %c31 = arith.constant 31 : index
    %118 = vector.load %arg2[%c0_24, %c31] : memref<32x173xf32, #tpu.memory_space<vmem>>, vector<16x1xf32>
    %c0_25 = arith.constant 0 : index
    %c32 = arith.constant 32 : index
    %119 = vector.load %arg2[%c0_25, %c32] : memref<32x173xf32, #tpu.memory_space<vmem>>, vector<8x16xf32>
    %c0_26 = arith.constant 0 : index
    %c48 = arith.constant 48 : index
    %120 = vector.load %arg2[%c0_26, %c48] : memref<32x173xf32, #tpu.memory_space<vmem>>, vector<8x1xf32>
    %c0_27 = arith.constant 0 : index
    %c49 = arith.constant 49 : index
    %121 = vector.load %arg2[%c0_27, %c49] : memref<32x173xf32, #tpu.memory_space<vmem>>, vector<8x1xf32>
    %c0_28 = arith.constant 0 : index
    %c50 = arith.constant 50 : index
    %122 = vector.load %arg2[%c0_28, %c50] : memref<32x173xf32, #tpu.memory_space<vmem>>, vector<8x1xf32>
    %c0_29 = arith.constant 0 : index
    %c51 = arith.constant 51 : index
    %123 = vector.load %arg2[%c0_29, %c51] : memref<32x173xf32, #tpu.memory_space<vmem>>, vector<8x1xf32>
    %cst_30 = arith.constant 0.000000e+00 : f32
    %124 = vector.broadcast %cst_30 : f32 to vector<16x256xf32>
    %c6 = arith.constant 6 : index
    %c0_31 = arith.constant 0 : index
    %125 = vector.load %arg1[%c6, %c0_31] : memref<15x256xf32, #tpu.memory_space<vmem>>, vector<1x256xf32>
    %c33_i32 = arith.constant 33 : i32
    %126 = tpu.dynamic_rotate %116 by %c33_i32 dim 1 : vector<16x256xf32>, i32 -> vector<16x256xf32>
    %127 = arith.mulf %125, %0 : vector<1x256xf32>
    %128 = vector.broadcast %127 : vector<1x256xf32> to vector<16x256xf32>
    %129 = arith.mulf %126, %128 : vector<16x256xf32>
    %130 = vector.extract_strided_slice %117 {offsets = [0, 0], sizes = [16, 1], strides = [1, 1]} : vector<16x9xf32> to vector<16x1xf32>
    %131 = vector.broadcast %130 : vector<16x1xf32> to vector<16x256xf32>
    %132 = arith.mulf %129, %131 : vector<16x256xf32>
    %133 = arith.addf %124, %132 : vector<16x256xf32>
    %c32_i32 = arith.constant 32 : i32
    %134 = tpu.dynamic_rotate %116 by %c32_i32 dim 1 : vector<16x256xf32>, i32 -> vector<16x256xf32>
    %135 = arith.mulf %125, %1 : vector<1x256xf32>
    %136 = vector.broadcast %135 : vector<1x256xf32> to vector<16x256xf32>
    %137 = arith.mulf %134, %136 : vector<16x256xf32>
    %138 = vector.extract_strided_slice %117 {offsets = [0, 1], sizes = [16, 1], strides = [1, 1]} : vector<16x9xf32> to vector<16x1xf32>
    %139 = vector.broadcast %138 : vector<16x1xf32> to vector<16x256xf32>
    %140 = arith.mulf %137, %139 : vector<16x256xf32>
    %141 = arith.addf %133, %140 : vector<16x256xf32>
    %c31_i32 = arith.constant 31 : i32
    %142 = tpu.dynamic_rotate %116 by %c31_i32 dim 1 : vector<16x256xf32>, i32 -> vector<16x256xf32>
    %143 = arith.mulf %125, %2 : vector<1x256xf32>
    %144 = vector.broadcast %143 : vector<1x256xf32> to vector<16x256xf32>
    %145 = arith.mulf %142, %144 : vector<16x256xf32>
    %146 = vector.extract_strided_slice %117 {offsets = [0, 2], sizes = [16, 1], strides = [1, 1]} : vector<16x9xf32> to vector<16x1xf32>
    %147 = vector.broadcast %146 : vector<16x1xf32> to vector<16x256xf32>
    %148 = arith.mulf %145, %147 : vector<16x256xf32>
    %149 = arith.addf %141, %148 : vector<16x256xf32>
    %c7 = arith.constant 7 : index
    %c0_32 = arith.constant 0 : index
    %150 = vector.load %arg1[%c7, %c0_32] : memref<15x256xf32, #tpu.memory_space<vmem>>, vector<1x256xf32>
    %c1_i32_33 = arith.constant 1 : i32
    %151 = tpu.dynamic_rotate %116 by %c1_i32_33 dim 1 : vector<16x256xf32>, i32 -> vector<16x256xf32>
    %152 = arith.mulf %150, %0 : vector<1x256xf32>
    %153 = vector.broadcast %152 : vector<1x256xf32> to vector<16x256xf32>
    %154 = arith.mulf %151, %153 : vector<16x256xf32>
    %155 = vector.extract_strided_slice %117 {offsets = [0, 3], sizes = [16, 1], strides = [1, 1]} : vector<16x9xf32> to vector<16x1xf32>
    %156 = vector.broadcast %155 : vector<16x1xf32> to vector<16x256xf32>
    %157 = arith.mulf %154, %156 : vector<16x256xf32>
    %158 = arith.addf %149, %157 : vector<16x256xf32>
    %159 = arith.mulf %150, %1 : vector<1x256xf32>
    %160 = vector.broadcast %159 : vector<1x256xf32> to vector<16x256xf32>
    %161 = arith.mulf %116, %160 : vector<16x256xf32>
    %162 = vector.extract_strided_slice %117 {offsets = [0, 4], sizes = [16, 1], strides = [1, 1]} : vector<16x9xf32> to vector<16x1xf32>
    %163 = vector.broadcast %162 : vector<16x1xf32> to vector<16x256xf32>
    %164 = arith.mulf %161, %163 : vector<16x256xf32>
    %165 = arith.addf %158, %164 : vector<16x256xf32>
    %c255_i32_34 = arith.constant 255 : i32
    %166 = tpu.dynamic_rotate %116 by %c255_i32_34 dim 1 : vector<16x256xf32>, i32 -> vector<16x256xf32>
    %167 = arith.mulf %150, %2 : vector<1x256xf32>
    %168 = vector.broadcast %167 : vector<1x256xf32> to vector<16x256xf32>
    %169 = arith.mulf %166, %168 : vector<16x256xf32>
    %170 = vector.extract_strided_slice %117 {offsets = [0, 5], sizes = [16, 1], strides = [1, 1]} : vector<16x9xf32> to vector<16x1xf32>
    %171 = vector.broadcast %170 : vector<16x1xf32> to vector<16x256xf32>
    %172 = arith.mulf %169, %171 : vector<16x256xf32>
    %173 = arith.addf %165, %172 : vector<16x256xf32>
    %c8 = arith.constant 8 : index
    %c0_35 = arith.constant 0 : index
    %174 = vector.load %arg1[%c8, %c0_35] : memref<15x256xf32, #tpu.memory_space<vmem>>, vector<1x256xf32>
    %c225_i32 = arith.constant 225 : i32
    %175 = tpu.dynamic_rotate %116 by %c225_i32 dim 1 : vector<16x256xf32>, i32 -> vector<16x256xf32>
    %176 = arith.mulf %174, %0 : vector<1x256xf32>
    %177 = vector.broadcast %176 : vector<1x256xf32> to vector<16x256xf32>
    %178 = arith.mulf %175, %177 : vector<16x256xf32>
    %179 = vector.extract_strided_slice %117 {offsets = [0, 6], sizes = [16, 1], strides = [1, 1]} : vector<16x9xf32> to vector<16x1xf32>
    %180 = vector.broadcast %179 : vector<16x1xf32> to vector<16x256xf32>
    %181 = arith.mulf %178, %180 : vector<16x256xf32>
    %182 = arith.addf %173, %181 : vector<16x256xf32>
    %c224_i32 = arith.constant 224 : i32
    %183 = tpu.dynamic_rotate %116 by %c224_i32 dim 1 : vector<16x256xf32>, i32 -> vector<16x256xf32>
    %184 = arith.mulf %174, %1 : vector<1x256xf32>
    %185 = vector.broadcast %184 : vector<1x256xf32> to vector<16x256xf32>
    %186 = arith.mulf %183, %185 : vector<16x256xf32>
    %187 = vector.extract_strided_slice %117 {offsets = [0, 7], sizes = [16, 1], strides = [1, 1]} : vector<16x9xf32> to vector<16x1xf32>
    %188 = vector.broadcast %187 : vector<16x1xf32> to vector<16x256xf32>
    %189 = arith.mulf %186, %188 : vector<16x256xf32>
    %190 = arith.addf %182, %189 : vector<16x256xf32>
    %c223_i32 = arith.constant 223 : i32
    %191 = tpu.dynamic_rotate %116 by %c223_i32 dim 1 : vector<16x256xf32>, i32 -> vector<16x256xf32>
    %192 = arith.mulf %174, %2 : vector<1x256xf32>
    %193 = vector.broadcast %192 : vector<1x256xf32> to vector<16x256xf32>
    %194 = arith.mulf %191, %193 : vector<16x256xf32>
    %195 = vector.extract_strided_slice %117 {offsets = [0, 8], sizes = [16, 1], strides = [1, 1]} : vector<16x9xf32> to vector<16x1xf32>
    %196 = vector.broadcast %195 : vector<16x1xf32> to vector<16x256xf32>
    %197 = arith.mulf %194, %196 : vector<16x256xf32>
    %198 = arith.addf %190, %197 : vector<16x256xf32>
    %199 = vector.broadcast %118 : vector<16x1xf32> to vector<16x256xf32>
    %200 = arith.addf %198, %199 : vector<16x256xf32>
    %cst_36 = arith.constant dense<0.000000e+00> : vector<8x256xf32>
    %201 = tpu.matmul %119, %200, %cst_36 {dimension_numbers = #tpu.dot_dimension_numbers<[1], [0], [0], [1], [0, 0, 1, 1], [], []>} : vector<8x16xf32>, vector<16x256xf32>, vector<8x256xf32> -> vector<8x256xf32>
    %202 = vector.broadcast %120 : vector<8x1xf32> to vector<8x256xf32>
    %203 = arith.addf %201, %202 : vector<8x256xf32>
    %cst_37 = arith.constant dense<0.000000e+00> : vector<8xf32>
    %204 = vector.multi_reduction <add>, %203, %cst_37 [1] : vector<8x256xf32> to vector<8xf32>
    %205 = vector.shape_cast %204 : vector<8xf32> to vector<8x1xf32>
    %cst_38 = arith.constant 2.560000e+02 : f32
    %206 = vector.broadcast %cst_38 : f32 to vector<8x1xf32>
    %207 = arith.divf %205, %206 : vector<8x1xf32>
    %208 = vector.broadcast %207 : vector<8x1xf32> to vector<8x256xf32>
    %209 = arith.subf %203, %208 : vector<8x256xf32>
    %210 = arith.mulf %209, %209 : vector<8x256xf32>
    %cst_39 = arith.constant dense<0.000000e+00> : vector<8xf32>
    %211 = vector.multi_reduction <add>, %210, %cst_39 [1] : vector<8x256xf32> to vector<8xf32>
    %212 = vector.shape_cast %211 : vector<8xf32> to vector<8x1xf32>
    %cst_40 = arith.constant 2.560000e+02 : f32
    %213 = vector.broadcast %cst_40 : f32 to vector<8x1xf32>
    %214 = arith.divf %212, %213 : vector<8x1xf32>
    %cst_41 = arith.constant 9.99999974E-6 : f32
    %215 = vector.broadcast %cst_41 : f32 to vector<8x1xf32>
    %216 = arith.addf %214, %215 : vector<8x1xf32>
    %217 = math.rsqrt %216 : vector<8x1xf32>
    %218 = vector.broadcast %217 : vector<8x1xf32> to vector<8x256xf32>
    %219 = arith.mulf %209, %218 : vector<8x256xf32>
    %220 = vector.broadcast %121 : vector<8x1xf32> to vector<8x256xf32>
    %221 = arith.mulf %219, %220 : vector<8x256xf32>
    %222 = vector.broadcast %122 : vector<8x1xf32> to vector<8x256xf32>
    %223 = arith.addf %221, %222 : vector<8x256xf32>
    %cst_42 = arith.constant 0.000000e+00 : f32
    %224 = vector.broadcast %cst_42 : f32 to vector<8x256xf32>
    %225 = arith.cmpf oge, %223, %224 : vector<8x256xf32>
    %226 = vector.broadcast %123 : vector<8x1xf32> to vector<8x256xf32>
    %227 = arith.mulf %226, %223 : vector<8x256xf32>
    %228 = arith.select %225, %223, %227 : vector<8x256xi1>, vector<8x256xf32>
    %229 = tpu.concatenate %228, %116 in 0 : vector<8x256xf32>, vector<16x256xf32> -> vector<24x256xf32>
    %c0_43 = arith.constant 0 : index
    %c52 = arith.constant 52 : index
    %230 = vector.load %arg2[%c0_43, %c52] : memref<32x173xf32, #tpu.memory_space<vmem>>, vector<24x9xf32>
    %c0_44 = arith.constant 0 : index
    %c61 = arith.constant 61 : index
    %231 = vector.load %arg2[%c0_44, %c61] : memref<32x173xf32, #tpu.memory_space<vmem>>, vector<24x1xf32>
    %c0_45 = arith.constant 0 : index
    %c62 = arith.constant 62 : index
    %232 = vector.load %arg2[%c0_45, %c62] : memref<32x173xf32, #tpu.memory_space<vmem>>, vector<8x24xf32>
    %c0_46 = arith.constant 0 : index
    %c86 = arith.constant 86 : index
    %233 = vector.load %arg2[%c0_46, %c86] : memref<32x173xf32, #tpu.memory_space<vmem>>, vector<8x1xf32>
    %c0_47 = arith.constant 0 : index
    %c87 = arith.constant 87 : index
    %234 = vector.load %arg2[%c0_47, %c87] : memref<32x173xf32, #tpu.memory_space<vmem>>, vector<8x1xf32>
    %c0_48 = arith.constant 0 : index
    %c88 = arith.constant 88 : index
    %235 = vector.load %arg2[%c0_48, %c88] : memref<32x173xf32, #tpu.memory_space<vmem>>, vector<8x1xf32>
    %c0_49 = arith.constant 0 : index
    %c89 = arith.constant 89 : index
    %236 = vector.load %arg2[%c0_49, %c89] : memref<32x173xf32, #tpu.memory_space<vmem>>, vector<8x1xf32>
    %cst_50 = arith.constant 0.000000e+00 : f32
    %237 = vector.broadcast %cst_50 : f32 to vector<24x256xf32>
    %c9_51 = arith.constant 9 : index
    %c0_52 = arith.constant 0 : index
    %238 = vector.load %arg1[%c9_51, %c0_52] : memref<15x256xf32, #tpu.memory_space<vmem>>, vector<1x256xf32>
    %c65_i32 = arith.constant 65 : i32
    %239 = tpu.dynamic_rotate %229 by %c65_i32 dim 1 : vector<24x256xf32>, i32 -> vector<24x256xf32>
    %240 = arith.mulf %238, %0 : vector<1x256xf32>
    %241 = vector.broadcast %240 : vector<1x256xf32> to vector<24x256xf32>
    %242 = arith.mulf %239, %241 : vector<24x256xf32>
    %243 = vector.extract_strided_slice %230 {offsets = [0, 0], sizes = [24, 1], strides = [1, 1]} : vector<24x9xf32> to vector<24x1xf32>
    %244 = vector.broadcast %243 : vector<24x1xf32> to vector<24x256xf32>
    %245 = arith.mulf %242, %244 : vector<24x256xf32>
    %246 = arith.addf %237, %245 : vector<24x256xf32>
    %c64_i32 = arith.constant 64 : i32
    %247 = tpu.dynamic_rotate %229 by %c64_i32 dim 1 : vector<24x256xf32>, i32 -> vector<24x256xf32>
    %248 = arith.mulf %238, %1 : vector<1x256xf32>
    %249 = vector.broadcast %248 : vector<1x256xf32> to vector<24x256xf32>
    %250 = arith.mulf %247, %249 : vector<24x256xf32>
    %251 = vector.extract_strided_slice %230 {offsets = [0, 1], sizes = [24, 1], strides = [1, 1]} : vector<24x9xf32> to vector<24x1xf32>
    %252 = vector.broadcast %251 : vector<24x1xf32> to vector<24x256xf32>
    %253 = arith.mulf %250, %252 : vector<24x256xf32>
    %254 = arith.addf %246, %253 : vector<24x256xf32>
    %c63_i32 = arith.constant 63 : i32
    %255 = tpu.dynamic_rotate %229 by %c63_i32 dim 1 : vector<24x256xf32>, i32 -> vector<24x256xf32>
    %256 = arith.mulf %238, %2 : vector<1x256xf32>
    %257 = vector.broadcast %256 : vector<1x256xf32> to vector<24x256xf32>
    %258 = arith.mulf %255, %257 : vector<24x256xf32>
    %259 = vector.extract_strided_slice %230 {offsets = [0, 2], sizes = [24, 1], strides = [1, 1]} : vector<24x9xf32> to vector<24x1xf32>
    %260 = vector.broadcast %259 : vector<24x1xf32> to vector<24x256xf32>
    %261 = arith.mulf %258, %260 : vector<24x256xf32>
    %262 = arith.addf %254, %261 : vector<24x256xf32>
    %c10_53 = arith.constant 10 : index
    %c0_54 = arith.constant 0 : index
    %263 = vector.load %arg1[%c10_53, %c0_54] : memref<15x256xf32, #tpu.memory_space<vmem>>, vector<1x256xf32>
    %c1_i32_55 = arith.constant 1 : i32
    %264 = tpu.dynamic_rotate %229 by %c1_i32_55 dim 1 : vector<24x256xf32>, i32 -> vector<24x256xf32>
    %265 = arith.mulf %263, %0 : vector<1x256xf32>
    %266 = vector.broadcast %265 : vector<1x256xf32> to vector<24x256xf32>
    %267 = arith.mulf %264, %266 : vector<24x256xf32>
    %268 = vector.extract_strided_slice %230 {offsets = [0, 3], sizes = [24, 1], strides = [1, 1]} : vector<24x9xf32> to vector<24x1xf32>
    %269 = vector.broadcast %268 : vector<24x1xf32> to vector<24x256xf32>
    %270 = arith.mulf %267, %269 : vector<24x256xf32>
    %271 = arith.addf %262, %270 : vector<24x256xf32>
    %272 = arith.mulf %263, %1 : vector<1x256xf32>
    %273 = vector.broadcast %272 : vector<1x256xf32> to vector<24x256xf32>
    %274 = arith.mulf %229, %273 : vector<24x256xf32>
    %275 = vector.extract_strided_slice %230 {offsets = [0, 4], sizes = [24, 1], strides = [1, 1]} : vector<24x9xf32> to vector<24x1xf32>
    %276 = vector.broadcast %275 : vector<24x1xf32> to vector<24x256xf32>
    %277 = arith.mulf %274, %276 : vector<24x256xf32>
    %278 = arith.addf %271, %277 : vector<24x256xf32>
    %c255_i32_56 = arith.constant 255 : i32
    %279 = tpu.dynamic_rotate %229 by %c255_i32_56 dim 1 : vector<24x256xf32>, i32 -> vector<24x256xf32>
    %280 = arith.mulf %263, %2 : vector<1x256xf32>
    %281 = vector.broadcast %280 : vector<1x256xf32> to vector<24x256xf32>
    %282 = arith.mulf %279, %281 : vector<24x256xf32>
    %283 = vector.extract_strided_slice %230 {offsets = [0, 5], sizes = [24, 1], strides = [1, 1]} : vector<24x9xf32> to vector<24x1xf32>
    %284 = vector.broadcast %283 : vector<24x1xf32> to vector<24x256xf32>
    %285 = arith.mulf %282, %284 : vector<24x256xf32>
    %286 = arith.addf %278, %285 : vector<24x256xf32>
    %c11 = arith.constant 11 : index
    %c0_57 = arith.constant 0 : index
    %287 = vector.load %arg1[%c11, %c0_57] : memref<15x256xf32, #tpu.memory_space<vmem>>, vector<1x256xf32>
    %c193_i32 = arith.constant 193 : i32
    %288 = tpu.dynamic_rotate %229 by %c193_i32 dim 1 : vector<24x256xf32>, i32 -> vector<24x256xf32>
    %289 = arith.mulf %287, %0 : vector<1x256xf32>
    %290 = vector.broadcast %289 : vector<1x256xf32> to vector<24x256xf32>
    %291 = arith.mulf %288, %290 : vector<24x256xf32>
    %292 = vector.extract_strided_slice %230 {offsets = [0, 6], sizes = [24, 1], strides = [1, 1]} : vector<24x9xf32> to vector<24x1xf32>
    %293 = vector.broadcast %292 : vector<24x1xf32> to vector<24x256xf32>
    %294 = arith.mulf %291, %293 : vector<24x256xf32>
    %295 = arith.addf %286, %294 : vector<24x256xf32>
    %c192_i32 = arith.constant 192 : i32
    %296 = tpu.dynamic_rotate %229 by %c192_i32 dim 1 : vector<24x256xf32>, i32 -> vector<24x256xf32>
    %297 = arith.mulf %287, %1 : vector<1x256xf32>
    %298 = vector.broadcast %297 : vector<1x256xf32> to vector<24x256xf32>
    %299 = arith.mulf %296, %298 : vector<24x256xf32>
    %300 = vector.extract_strided_slice %230 {offsets = [0, 7], sizes = [24, 1], strides = [1, 1]} : vector<24x9xf32> to vector<24x1xf32>
    %301 = vector.broadcast %300 : vector<24x1xf32> to vector<24x256xf32>
    %302 = arith.mulf %299, %301 : vector<24x256xf32>
    %303 = arith.addf %295, %302 : vector<24x256xf32>
    %c191_i32 = arith.constant 191 : i32
    %304 = tpu.dynamic_rotate %229 by %c191_i32 dim 1 : vector<24x256xf32>, i32 -> vector<24x256xf32>
    %305 = arith.mulf %287, %2 : vector<1x256xf32>
    %306 = vector.broadcast %305 : vector<1x256xf32> to vector<24x256xf32>
    %307 = arith.mulf %304, %306 : vector<24x256xf32>
    %308 = vector.extract_strided_slice %230 {offsets = [0, 8], sizes = [24, 1], strides = [1, 1]} : vector<24x9xf32> to vector<24x1xf32>
    %309 = vector.broadcast %308 : vector<24x1xf32> to vector<24x256xf32>
    %310 = arith.mulf %307, %309 : vector<24x256xf32>
    %311 = arith.addf %303, %310 : vector<24x256xf32>
    %312 = vector.broadcast %231 : vector<24x1xf32> to vector<24x256xf32>
    %313 = arith.addf %311, %312 : vector<24x256xf32>
    %cst_58 = arith.constant dense<0.000000e+00> : vector<8x256xf32>
    %314 = tpu.matmul %232, %313, %cst_58 {dimension_numbers = #tpu.dot_dimension_numbers<[1], [0], [0], [1], [0, 0, 1, 1], [], []>} : vector<8x24xf32>, vector<24x256xf32>, vector<8x256xf32> -> vector<8x256xf32>
    %315 = vector.broadcast %233 : vector<8x1xf32> to vector<8x256xf32>
    %316 = arith.addf %314, %315 : vector<8x256xf32>
    %cst_59 = arith.constant dense<0.000000e+00> : vector<8xf32>
    %317 = vector.multi_reduction <add>, %316, %cst_59 [1] : vector<8x256xf32> to vector<8xf32>
    %318 = vector.shape_cast %317 : vector<8xf32> to vector<8x1xf32>
    %cst_60 = arith.constant 2.560000e+02 : f32
    %319 = vector.broadcast %cst_60 : f32 to vector<8x1xf32>
    %320 = arith.divf %318, %319 : vector<8x1xf32>
    %321 = vector.broadcast %320 : vector<8x1xf32> to vector<8x256xf32>
    %322 = arith.subf %316, %321 : vector<8x256xf32>
    %323 = arith.mulf %322, %322 : vector<8x256xf32>
    %cst_61 = arith.constant dense<0.000000e+00> : vector<8xf32>
    %324 = vector.multi_reduction <add>, %323, %cst_61 [1] : vector<8x256xf32> to vector<8xf32>
    %325 = vector.shape_cast %324 : vector<8xf32> to vector<8x1xf32>
    %cst_62 = arith.constant 2.560000e+02 : f32
    %326 = vector.broadcast %cst_62 : f32 to vector<8x1xf32>
    %327 = arith.divf %325, %326 : vector<8x1xf32>
    %cst_63 = arith.constant 9.99999974E-6 : f32
    %328 = vector.broadcast %cst_63 : f32 to vector<8x1xf32>
    %329 = arith.addf %327, %328 : vector<8x1xf32>
    %330 = math.rsqrt %329 : vector<8x1xf32>
    %331 = vector.broadcast %330 : vector<8x1xf32> to vector<8x256xf32>
    %332 = arith.mulf %322, %331 : vector<8x256xf32>
    %333 = vector.broadcast %234 : vector<8x1xf32> to vector<8x256xf32>
    %334 = arith.mulf %332, %333 : vector<8x256xf32>
    %335 = vector.broadcast %235 : vector<8x1xf32> to vector<8x256xf32>
    %336 = arith.addf %334, %335 : vector<8x256xf32>
    %cst_64 = arith.constant 0.000000e+00 : f32
    %337 = vector.broadcast %cst_64 : f32 to vector<8x256xf32>
    %338 = arith.cmpf oge, %336, %337 : vector<8x256xf32>
    %339 = vector.broadcast %236 : vector<8x1xf32> to vector<8x256xf32>
    %340 = arith.mulf %339, %336 : vector<8x256xf32>
    %341 = arith.select %338, %336, %340 : vector<8x256xi1>, vector<8x256xf32>
    %342 = tpu.concatenate %341, %229 in 0 : vector<8x256xf32>, vector<24x256xf32> -> vector<32x256xf32>
    %c0_65 = arith.constant 0 : index
    %c90 = arith.constant 90 : index
    %343 = vector.load %arg2[%c0_65, %c90] : memref<32x173xf32, #tpu.memory_space<vmem>>, vector<32x9xf32>
    %c0_66 = arith.constant 0 : index
    %c99 = arith.constant 99 : index
    %344 = vector.load %arg2[%c0_66, %c99] : memref<32x173xf32, #tpu.memory_space<vmem>>, vector<32x1xf32>
    %c0_67 = arith.constant 0 : index
    %c100 = arith.constant 100 : index
    %345 = vector.load %arg2[%c0_67, %c100] : memref<32x173xf32, #tpu.memory_space<vmem>>, vector<8x32xf32>
    %c0_68 = arith.constant 0 : index
    %c132 = arith.constant 132 : index
    %346 = vector.load %arg2[%c0_68, %c132] : memref<32x173xf32, #tpu.memory_space<vmem>>, vector<8x1xf32>
    %c0_69 = arith.constant 0 : index
    %c133 = arith.constant 133 : index
    %347 = vector.load %arg2[%c0_69, %c133] : memref<32x173xf32, #tpu.memory_space<vmem>>, vector<8x1xf32>
    %c0_70 = arith.constant 0 : index
    %c134 = arith.constant 134 : index
    %348 = vector.load %arg2[%c0_70, %c134] : memref<32x173xf32, #tpu.memory_space<vmem>>, vector<8x1xf32>
    %c0_71 = arith.constant 0 : index
    %c135 = arith.constant 135 : index
    %349 = vector.load %arg2[%c0_71, %c135] : memref<32x173xf32, #tpu.memory_space<vmem>>, vector<8x1xf32>
    %cst_72 = arith.constant 0.000000e+00 : f32
    %350 = vector.broadcast %cst_72 : f32 to vector<32x256xf32>
    %c12 = arith.constant 12 : index
    %c0_73 = arith.constant 0 : index
    %351 = vector.load %arg1[%c12, %c0_73] : memref<15x256xf32, #tpu.memory_space<vmem>>, vector<1x256xf32>
    %c129_i32 = arith.constant 129 : i32
    %352 = tpu.dynamic_rotate %342 by %c129_i32 dim 1 : vector<32x256xf32>, i32 -> vector<32x256xf32>
    %353 = arith.mulf %351, %0 : vector<1x256xf32>
    %354 = vector.broadcast %353 : vector<1x256xf32> to vector<32x256xf32>
    %355 = arith.mulf %352, %354 : vector<32x256xf32>
    %356 = vector.extract_strided_slice %343 {offsets = [0, 0], sizes = [32, 1], strides = [1, 1]} : vector<32x9xf32> to vector<32x1xf32>
    %357 = vector.broadcast %356 : vector<32x1xf32> to vector<32x256xf32>
    %358 = arith.mulf %355, %357 : vector<32x256xf32>
    %359 = arith.addf %350, %358 : vector<32x256xf32>
    %c128_i32 = arith.constant 128 : i32
    %360 = tpu.dynamic_rotate %342 by %c128_i32 dim 1 : vector<32x256xf32>, i32 -> vector<32x256xf32>
    %361 = arith.mulf %351, %1 : vector<1x256xf32>
    %362 = vector.broadcast %361 : vector<1x256xf32> to vector<32x256xf32>
    %363 = arith.mulf %360, %362 : vector<32x256xf32>
    %364 = vector.extract_strided_slice %343 {offsets = [0, 1], sizes = [32, 1], strides = [1, 1]} : vector<32x9xf32> to vector<32x1xf32>
    %365 = vector.broadcast %364 : vector<32x1xf32> to vector<32x256xf32>
    %366 = arith.mulf %363, %365 : vector<32x256xf32>
    %367 = arith.addf %359, %366 : vector<32x256xf32>
    %c127_i32 = arith.constant 127 : i32
    %368 = tpu.dynamic_rotate %342 by %c127_i32 dim 1 : vector<32x256xf32>, i32 -> vector<32x256xf32>
    %369 = arith.mulf %351, %2 : vector<1x256xf32>
    %370 = vector.broadcast %369 : vector<1x256xf32> to vector<32x256xf32>
    %371 = arith.mulf %368, %370 : vector<32x256xf32>
    %372 = vector.extract_strided_slice %343 {offsets = [0, 2], sizes = [32, 1], strides = [1, 1]} : vector<32x9xf32> to vector<32x1xf32>
    %373 = vector.broadcast %372 : vector<32x1xf32> to vector<32x256xf32>
    %374 = arith.mulf %371, %373 : vector<32x256xf32>
    %375 = arith.addf %367, %374 : vector<32x256xf32>
    %c13 = arith.constant 13 : index
    %c0_74 = arith.constant 0 : index
    %376 = vector.load %arg1[%c13, %c0_74] : memref<15x256xf32, #tpu.memory_space<vmem>>, vector<1x256xf32>
    %c1_i32_75 = arith.constant 1 : i32
    %377 = tpu.dynamic_rotate %342 by %c1_i32_75 dim 1 : vector<32x256xf32>, i32 -> vector<32x256xf32>
    %378 = arith.mulf %376, %0 : vector<1x256xf32>
    %379 = vector.broadcast %378 : vector<1x256xf32> to vector<32x256xf32>
    %380 = arith.mulf %377, %379 : vector<32x256xf32>
    %381 = vector.extract_strided_slice %343 {offsets = [0, 3], sizes = [32, 1], strides = [1, 1]} : vector<32x9xf32> to vector<32x1xf32>
    %382 = vector.broadcast %381 : vector<32x1xf32> to vector<32x256xf32>
    %383 = arith.mulf %380, %382 : vector<32x256xf32>
    %384 = arith.addf %375, %383 : vector<32x256xf32>
    %385 = arith.mulf %376, %1 : vector<1x256xf32>
    %386 = vector.broadcast %385 : vector<1x256xf32> to vector<32x256xf32>
    %387 = arith.mulf %342, %386 : vector<32x256xf32>
    %388 = vector.extract_strided_slice %343 {offsets = [0, 4], sizes = [32, 1], strides = [1, 1]} : vector<32x9xf32> to vector<32x1xf32>
    %389 = vector.broadcast %388 : vector<32x1xf32> to vector<32x256xf32>
    %390 = arith.mulf %387, %389 : vector<32x256xf32>
    %391 = arith.addf %384, %390 : vector<32x256xf32>
    %c255_i32_76 = arith.constant 255 : i32
    %392 = tpu.dynamic_rotate %342 by %c255_i32_76 dim 1 : vector<32x256xf32>, i32 -> vector<32x256xf32>
    %393 = arith.mulf %376, %2 : vector<1x256xf32>
    %394 = vector.broadcast %393 : vector<1x256xf32> to vector<32x256xf32>
    %395 = arith.mulf %392, %394 : vector<32x256xf32>
    %396 = vector.extract_strided_slice %343 {offsets = [0, 5], sizes = [32, 1], strides = [1, 1]} : vector<32x9xf32> to vector<32x1xf32>
    %397 = vector.broadcast %396 : vector<32x1xf32> to vector<32x256xf32>
    %398 = arith.mulf %395, %397 : vector<32x256xf32>
    %399 = arith.addf %391, %398 : vector<32x256xf32>
    %c14 = arith.constant 14 : index
    %c0_77 = arith.constant 0 : index
    %400 = vector.load %arg1[%c14, %c0_77] : memref<15x256xf32, #tpu.memory_space<vmem>>, vector<1x256xf32>
    %c129_i32_78 = arith.constant 129 : i32
    %401 = tpu.dynamic_rotate %342 by %c129_i32_78 dim 1 : vector<32x256xf32>, i32 -> vector<32x256xf32>
    %402 = arith.mulf %400, %0 : vector<1x256xf32>
    %403 = vector.broadcast %402 : vector<1x256xf32> to vector<32x256xf32>
    %404 = arith.mulf %401, %403 : vector<32x256xf32>
    %405 = vector.extract_strided_slice %343 {offsets = [0, 6], sizes = [32, 1], strides = [1, 1]} : vector<32x9xf32> to vector<32x1xf32>
    %406 = vector.broadcast %405 : vector<32x1xf32> to vector<32x256xf32>
    %407 = arith.mulf %404, %406 : vector<32x256xf32>
    %408 = arith.addf %399, %407 : vector<32x256xf32>
    %c128_i32_79 = arith.constant 128 : i32
    %409 = tpu.dynamic_rotate %342 by %c128_i32_79 dim 1 : vector<32x256xf32>, i32 -> vector<32x256xf32>
    %410 = arith.mulf %400, %1 : vector<1x256xf32>
    %411 = vector.broadcast %410 : vector<1x256xf32> to vector<32x256xf32>
    %412 = arith.mulf %409, %411 : vector<32x256xf32>
    %413 = vector.extract_strided_slice %343 {offsets = [0, 7], sizes = [32, 1], strides = [1, 1]} : vector<32x9xf32> to vector<32x1xf32>
    %414 = vector.broadcast %413 : vector<32x1xf32> to vector<32x256xf32>
    %415 = arith.mulf %412, %414 : vector<32x256xf32>
    %416 = arith.addf %408, %415 : vector<32x256xf32>
    %c127_i32_80 = arith.constant 127 : i32
    %417 = tpu.dynamic_rotate %342 by %c127_i32_80 dim 1 : vector<32x256xf32>, i32 -> vector<32x256xf32>
    %418 = arith.mulf %400, %2 : vector<1x256xf32>
    %419 = vector.broadcast %418 : vector<1x256xf32> to vector<32x256xf32>
    %420 = arith.mulf %417, %419 : vector<32x256xf32>
    %421 = vector.extract_strided_slice %343 {offsets = [0, 8], sizes = [32, 1], strides = [1, 1]} : vector<32x9xf32> to vector<32x1xf32>
    %422 = vector.broadcast %421 : vector<32x1xf32> to vector<32x256xf32>
    %423 = arith.mulf %420, %422 : vector<32x256xf32>
    %424 = arith.addf %416, %423 : vector<32x256xf32>
    %425 = vector.broadcast %344 : vector<32x1xf32> to vector<32x256xf32>
    %426 = arith.addf %424, %425 : vector<32x256xf32>
    %cst_81 = arith.constant dense<0.000000e+00> : vector<8x256xf32>
    %427 = tpu.matmul %345, %426, %cst_81 {dimension_numbers = #tpu.dot_dimension_numbers<[1], [0], [0], [1], [0, 0, 1, 1], [], []>} : vector<8x32xf32>, vector<32x256xf32>, vector<8x256xf32> -> vector<8x256xf32>
    %428 = vector.broadcast %346 : vector<8x1xf32> to vector<8x256xf32>
    %429 = arith.addf %427, %428 : vector<8x256xf32>
    %cst_82 = arith.constant dense<0.000000e+00> : vector<8xf32>
    %430 = vector.multi_reduction <add>, %429, %cst_82 [1] : vector<8x256xf32> to vector<8xf32>
    %431 = vector.shape_cast %430 : vector<8xf32> to vector<8x1xf32>
    %cst_83 = arith.constant 2.560000e+02 : f32
    %432 = vector.broadcast %cst_83 : f32 to vector<8x1xf32>
    %433 = arith.divf %431, %432 : vector<8x1xf32>
    %434 = vector.broadcast %433 : vector<8x1xf32> to vector<8x256xf32>
    %435 = arith.subf %429, %434 : vector<8x256xf32>
    %436 = arith.mulf %435, %435 : vector<8x256xf32>
    %cst_84 = arith.constant dense<0.000000e+00> : vector<8xf32>
    %437 = vector.multi_reduction <add>, %436, %cst_84 [1] : vector<8x256xf32> to vector<8xf32>
    %438 = vector.shape_cast %437 : vector<8xf32> to vector<8x1xf32>
    %cst_85 = arith.constant 2.560000e+02 : f32
    %439 = vector.broadcast %cst_85 : f32 to vector<8x1xf32>
    %440 = arith.divf %438, %439 : vector<8x1xf32>
    %cst_86 = arith.constant 9.99999974E-6 : f32
    %441 = vector.broadcast %cst_86 : f32 to vector<8x1xf32>
    %442 = arith.addf %440, %441 : vector<8x1xf32>
    %443 = math.rsqrt %442 : vector<8x1xf32>
    %444 = vector.broadcast %443 : vector<8x1xf32> to vector<8x256xf32>
    %445 = arith.mulf %435, %444 : vector<8x256xf32>
    %446 = vector.broadcast %347 : vector<8x1xf32> to vector<8x256xf32>
    %447 = arith.mulf %445, %446 : vector<8x256xf32>
    %448 = vector.broadcast %348 : vector<8x1xf32> to vector<8x256xf32>
    %449 = arith.addf %447, %448 : vector<8x256xf32>
    %cst_87 = arith.constant 0.000000e+00 : f32
    %450 = vector.broadcast %cst_87 : f32 to vector<8x256xf32>
    %451 = arith.cmpf oge, %449, %450 : vector<8x256xf32>
    %452 = vector.broadcast %349 : vector<8x1xf32> to vector<8x256xf32>
    %453 = arith.mulf %452, %449 : vector<8x256xf32>
    %454 = arith.select %451, %449, %453 : vector<8x256xi1>, vector<8x256xf32>
    %c0_88 = arith.constant 0 : index
    %c136 = arith.constant 136 : index
    %455 = vector.load %arg2[%c0_88, %c136] : memref<32x173xf32, #tpu.memory_space<vmem>>, vector<24x8xf32>
    %c0_89 = arith.constant 0 : index
    %c144 = arith.constant 144 : index
    %456 = vector.load %arg2[%c0_89, %c144] : memref<32x173xf32, #tpu.memory_space<vmem>>, vector<8x1xf32>
    %c0_90 = arith.constant 0 : index
    %c145 = arith.constant 145 : index
    %457 = vector.load %arg2[%c0_90, %c145] : memref<32x173xf32, #tpu.memory_space<vmem>>, vector<8x1xf32>
    %c0_91 = arith.constant 0 : index
    %c146 = arith.constant 146 : index
    %458 = vector.load %arg2[%c0_91, %c146] : memref<32x173xf32, #tpu.memory_space<vmem>>, vector<8x1xf32>
    %c0_92 = arith.constant 0 : index
    %c147 = arith.constant 147 : index
    %459 = vector.load %arg2[%c0_92, %c147] : memref<32x173xf32, #tpu.memory_space<vmem>>, vector<8x1xf32>
    %cst_93 = arith.constant dense<0.000000e+00> : vector<24x256xf32>
    %460 = tpu.matmul %455, %454, %cst_93 {dimension_numbers = #tpu.dot_dimension_numbers<[1], [0], [0], [1], [0, 0, 1, 1], [], []>} : vector<24x8xf32>, vector<8x256xf32>, vector<24x256xf32> -> vector<24x256xf32>
    %461 = vector.extract_strided_slice %460 {offsets = [0, 0], sizes = [8, 256], strides = [1, 1]} : vector<24x256xf32> to vector<8x256xf32>
    %462 = vector.extract_strided_slice %460 {offsets = [8, 0], sizes = [8, 256], strides = [1, 1]} : vector<24x256xf32> to vector<8x256xf32>
    %463 = vector.extract_strided_slice %460 {offsets = [16, 0], sizes = [8, 256], strides = [1, 1]} : vector<24x256xf32> to vector<8x256xf32>
    %cst_94 = arith.constant 1.000000e+00 : f32
    %464 = vector.broadcast %cst_94 : f32 to vector<1x256xf32>
    %465 = arith.subf %464, %2 : vector<1x256xf32>
    %466 = vector.broadcast %456 : vector<8x1xf32> to vector<8x256xf32>
    %467 = arith.addf %466, %461 : vector<8x256xf32>
    %c1_i32_95 = arith.constant 1 : i32
    %468 = tpu.dynamic_rotate %463 by %c1_i32_95 dim 1 : vector<8x256xf32>, i32 -> vector<8x256xf32>
    %469 = vector.broadcast %0 : vector<1x256xf32> to vector<8x256xf32>
    %470 = arith.mulf %468, %469 : vector<8x256xf32>
    %471 = arith.addf %467, %470 : vector<8x256xf32>
    %472 = vector.broadcast %456 : vector<8x1xf32> to vector<8x256xf32>
    %473 = arith.addf %472, %462 : vector<8x256xf32>
    %474 = vector.broadcast %456 : vector<8x1xf32> to vector<8x256xf32>
    %475 = arith.addf %474, %463 : vector<8x256xf32>
    %cst_96 = arith.constant dense<0.000000e+00> : vector<8xf32>
    %476 = vector.multi_reduction <add>, %471, %cst_96 [1] : vector<8x256xf32> to vector<8xf32>
    %477 = vector.shape_cast %476 : vector<8xf32> to vector<8x1xf32>
    %cst_97 = arith.constant dense<0.000000e+00> : vector<8xf32>
    %478 = vector.multi_reduction <add>, %473, %cst_97 [1] : vector<8x256xf32> to vector<8xf32>
    %479 = vector.shape_cast %478 : vector<8xf32> to vector<8x1xf32>
    %480 = arith.addf %477, %479 : vector<8x1xf32>
    %481 = vector.broadcast %465 : vector<1x256xf32> to vector<8x256xf32>
    %482 = arith.mulf %475, %481 : vector<8x256xf32>
    %cst_98 = arith.constant dense<0.000000e+00> : vector<8xf32>
    %483 = vector.multi_reduction <add>, %482, %cst_98 [1] : vector<8x256xf32> to vector<8xf32>
    %484 = vector.shape_cast %483 : vector<8xf32> to vector<8x1xf32>
    %485 = arith.addf %480, %484 : vector<8x1xf32>
    %cst_99 = arith.constant 5.280000e+02 : f32
    %486 = vector.broadcast %cst_99 : f32 to vector<8x1xf32>
    %487 = arith.divf %485, %486 : vector<8x1xf32>
    %488 = vector.broadcast %487 : vector<8x1xf32> to vector<8x256xf32>
    %489 = arith.subf %471, %488 : vector<8x256xf32>
    %490 = vector.broadcast %487 : vector<8x1xf32> to vector<8x256xf32>
    %491 = arith.subf %473, %490 : vector<8x256xf32>
    %492 = vector.broadcast %487 : vector<8x1xf32> to vector<8x256xf32>
    %493 = arith.subf %475, %492 : vector<8x256xf32>
    %494 = vector.broadcast %465 : vector<1x256xf32> to vector<8x256xf32>
    %495 = arith.mulf %493, %494 : vector<8x256xf32>
    %496 = arith.mulf %489, %489 : vector<8x256xf32>
    %cst_100 = arith.constant dense<0.000000e+00> : vector<8xf32>
    %497 = vector.multi_reduction <add>, %496, %cst_100 [1] : vector<8x256xf32> to vector<8xf32>
    %498 = vector.shape_cast %497 : vector<8xf32> to vector<8x1xf32>
    %499 = arith.mulf %491, %491 : vector<8x256xf32>
    %cst_101 = arith.constant dense<0.000000e+00> : vector<8xf32>
    %500 = vector.multi_reduction <add>, %499, %cst_101 [1] : vector<8x256xf32> to vector<8xf32>
    %501 = vector.shape_cast %500 : vector<8xf32> to vector<8x1xf32>
    %502 = arith.addf %498, %501 : vector<8x1xf32>
    %503 = arith.mulf %495, %495 : vector<8x256xf32>
    %cst_102 = arith.constant dense<0.000000e+00> : vector<8xf32>
    %504 = vector.multi_reduction <add>, %503, %cst_102 [1] : vector<8x256xf32> to vector<8xf32>
    %505 = vector.shape_cast %504 : vector<8xf32> to vector<8x1xf32>
    %506 = arith.addf %502, %505 : vector<8x1xf32>
    %cst_103 = arith.constant 5.280000e+02 : f32
    %507 = vector.broadcast %cst_103 : f32 to vector<8x1xf32>
    %508 = arith.divf %506, %507 : vector<8x1xf32>
    %cst_104 = arith.constant 9.99999974E-6 : f32
    %509 = vector.broadcast %cst_104 : f32 to vector<8x1xf32>
    %510 = arith.addf %508, %509 : vector<8x1xf32>
    %511 = math.rsqrt %510 : vector<8x1xf32>
    %512 = vector.broadcast %487 : vector<8x1xf32> to vector<8x256xf32>
    %513 = arith.subf %471, %512 : vector<8x256xf32>
    %514 = vector.broadcast %511 : vector<8x1xf32> to vector<8x256xf32>
    %515 = arith.mulf %513, %514 : vector<8x256xf32>
    %516 = vector.broadcast %457 : vector<8x1xf32> to vector<8x256xf32>
    %517 = arith.mulf %515, %516 : vector<8x256xf32>
    %518 = vector.broadcast %458 : vector<8x1xf32> to vector<8x256xf32>
    %519 = arith.addf %517, %518 : vector<8x256xf32>
    %cst_105 = arith.constant 0.000000e+00 : f32
    %520 = vector.broadcast %cst_105 : f32 to vector<8x256xf32>
    %521 = arith.cmpf oge, %519, %520 : vector<8x256xf32>
    %522 = vector.broadcast %459 : vector<8x1xf32> to vector<8x256xf32>
    %523 = arith.mulf %522, %519 : vector<8x256xf32>
    %524 = arith.select %521, %519, %523 : vector<8x256xi1>, vector<8x256xf32>
    %525 = vector.broadcast %487 : vector<8x1xf32> to vector<8x256xf32>
    %526 = arith.subf %473, %525 : vector<8x256xf32>
    %527 = vector.broadcast %511 : vector<8x1xf32> to vector<8x256xf32>
    %528 = arith.mulf %526, %527 : vector<8x256xf32>
    %529 = vector.broadcast %457 : vector<8x1xf32> to vector<8x256xf32>
    %530 = arith.mulf %528, %529 : vector<8x256xf32>
    %531 = vector.broadcast %458 : vector<8x1xf32> to vector<8x256xf32>
    %532 = arith.addf %530, %531 : vector<8x256xf32>
    %cst_106 = arith.constant 0.000000e+00 : f32
    %533 = vector.broadcast %cst_106 : f32 to vector<8x256xf32>
    %534 = arith.cmpf oge, %532, %533 : vector<8x256xf32>
    %535 = vector.broadcast %459 : vector<8x1xf32> to vector<8x256xf32>
    %536 = arith.mulf %535, %532 : vector<8x256xf32>
    %537 = arith.select %534, %532, %536 : vector<8x256xi1>, vector<8x256xf32>
    %538 = vector.broadcast %487 : vector<8x1xf32> to vector<8x256xf32>
    %539 = arith.subf %475, %538 : vector<8x256xf32>
    %540 = vector.broadcast %511 : vector<8x1xf32> to vector<8x256xf32>
    %541 = arith.mulf %539, %540 : vector<8x256xf32>
    %542 = vector.broadcast %457 : vector<8x1xf32> to vector<8x256xf32>
    %543 = arith.mulf %541, %542 : vector<8x256xf32>
    %544 = vector.broadcast %458 : vector<8x1xf32> to vector<8x256xf32>
    %545 = arith.addf %543, %544 : vector<8x256xf32>
    %cst_107 = arith.constant 0.000000e+00 : f32
    %546 = vector.broadcast %cst_107 : f32 to vector<8x256xf32>
    %547 = arith.cmpf oge, %545, %546 : vector<8x256xf32>
    %548 = vector.broadcast %459 : vector<8x1xf32> to vector<8x256xf32>
    %549 = arith.mulf %548, %545 : vector<8x256xf32>
    %550 = arith.select %547, %545, %549 : vector<8x256xi1>, vector<8x256xf32>
    %551 = tpu.concatenate %524, %537, %550 in 0 : vector<8x256xf32>, vector<8x256xf32>, vector<8x256xf32> -> vector<24x256xf32>
    %c0_108 = arith.constant 0 : index
    %c148 = arith.constant 148 : index
    %552 = vector.load %arg2[%c0_108, %c148] : memref<32x173xf32, #tpu.memory_space<vmem>>, vector<16x24xf32>
    %c0_109 = arith.constant 0 : index
    %c172 = arith.constant 172 : index
    %553 = vector.load %arg2[%c0_109, %c172] : memref<32x173xf32, #tpu.memory_space<vmem>>, vector<16x1xf32>
    %cst_110 = arith.constant dense<0.000000e+00> : vector<16x256xf32>
    %554 = tpu.matmul %552, %551, %cst_110 {dimension_numbers = #tpu.dot_dimension_numbers<[1], [0], [0], [1], [0, 0, 1, 1], [], []>} : vector<16x24xf32>, vector<24x256xf32>, vector<16x256xf32> -> vector<16x256xf32>
    %555 = vector.broadcast %553 : vector<16x1xf32> to vector<16x256xf32>
    %556 = arith.addf %554, %555 : vector<16x256xf32>
    %557 = vector.extract_strided_slice %556 {offsets = [8, 0], sizes = [8, 256], strides = [1, 1]} : vector<16x256xf32> to vector<8x256xf32>
    %558 = vector.extract_strided_slice %556 {offsets = [0, 0], sizes = [8, 256], strides = [1, 1]} : vector<16x256xf32> to vector<8x256xf32>
    %559 = math.absf %558 : vector<8x256xf32>
    %560 = math.absf %557 : vector<8x256xf32>
    %561 = arith.maximumf %559, %560 : vector<8x256xf32>
    %562 = arith.minimumf %559, %560 : vector<8x256xf32>
    %cst_111 = arith.constant 0.000000e+00 : f32
    %563 = vector.broadcast %cst_111 : f32 to vector<8x256xf32>
    %564 = arith.cmpf oeq, %561, %563 : vector<8x256xf32>
    %cst_112 = arith.constant 1.000000e+00 : f32
    %565 = vector.broadcast %cst_112 : f32 to vector<8x256xf32>
    %566 = arith.select %564, %565, %561 : vector<8x256xi1>, vector<8x256xf32>
    %567 = tpu.reciprocal %566 {approx = true} : vector<8x256xf32> -> vector<8x256xf32>
    %568 = arith.mulf %566, %567 : vector<8x256xf32>
    %cst_113 = arith.constant 2.000000e+00 : f32
    %569 = vector.broadcast %cst_113 : f32 to vector<8x256xf32>
    %570 = arith.subf %569, %568 : vector<8x256xf32>
    %571 = arith.mulf %567, %570 : vector<8x256xf32>
    %572 = arith.mulf %562, %571 : vector<8x256xf32>
    %cst_114 = arith.constant 0.414213568 : f32
    %573 = vector.broadcast %cst_114 : f32 to vector<8x256xf32>
    %574 = arith.cmpf ogt, %572, %573 : vector<8x256xf32>
    %cst_115 = arith.constant 1.000000e+00 : f32
    %575 = vector.broadcast %cst_115 : f32 to vector<8x256xf32>
    %576 = arith.subf %572, %575 : vector<8x256xf32>
    %cst_116 = arith.constant 1.000000e+00 : f32
    %577 = vector.broadcast %cst_116 : f32 to vector<8x256xf32>
    %578 = arith.addf %572, %577 : vector<8x256xf32>
    %579 = tpu.reciprocal %578 {approx = true} : vector<8x256xf32> -> vector<8x256xf32>
    %580 = arith.mulf %578, %579 : vector<8x256xf32>
    %cst_117 = arith.constant 2.000000e+00 : f32
    %581 = vector.broadcast %cst_117 : f32 to vector<8x256xf32>
    %582 = arith.subf %581, %580 : vector<8x256xf32>
    %583 = arith.mulf %579, %582 : vector<8x256xf32>
    %584 = arith.mulf %576, %583 : vector<8x256xf32>
    %585 = arith.select %574, %584, %572 : vector<8x256xi1>, vector<8x256xf32>
    %cst_118 = arith.constant 0.785398185 : f32
    %cst_119 = arith.constant 0.000000e+00 : f32
    %586 = vector.broadcast %cst_118 : f32 to vector<8x256xf32>
    %587 = vector.broadcast %cst_119 : f32 to vector<8x256xf32>
    %588 = arith.select %574, %586, %587 : vector<8x256xi1>, vector<8x256xf32>
    %589 = arith.mulf %585, %585 : vector<8x256xf32>
    %cst_120 = arith.constant 0.0805374458 : f32
    %590 = vector.broadcast %cst_120 : f32 to vector<8x256xf32>
    %591 = arith.mulf %590, %589 : vector<8x256xf32>
    %cst_121 = arith.constant 0.138776854 : f32
    %592 = vector.broadcast %cst_121 : f32 to vector<8x256xf32>
    %593 = arith.subf %591, %592 : vector<8x256xf32>
    %594 = arith.mulf %593, %589 : vector<8x256xf32>
    %cst_122 = arith.constant 0.199777111 : f32
    %595 = vector.broadcast %cst_122 : f32 to vector<8x256xf32>
    %596 = arith.addf %594, %595 : vector<8x256xf32>
    %597 = arith.mulf %596, %589 : vector<8x256xf32>
    %cst_123 = arith.constant 0.333329499 : f32
    %598 = vector.broadcast %cst_123 : f32 to vector<8x256xf32>
    %599 = arith.subf %597, %598 : vector<8x256xf32>
    %600 = arith.mulf %585, %589 : vector<8x256xf32>
    %601 = arith.mulf %600, %599 : vector<8x256xf32>
    %602 = arith.addf %585, %601 : vector<8x256xf32>
    %603 = arith.addf %588, %602 : vector<8x256xf32>
    %604 = arith.cmpf ogt, %560, %559 : vector<8x256xf32>
    %cst_124 = arith.constant 3.14159274 : f32
    %cst_125 = arith.constant 2.000000e+00 : f32
    %605 = arith.divf %cst_124, %cst_125 : f32
    %606 = vector.broadcast %605 : f32 to vector<8x256xf32>
    %607 = arith.subf %606, %603 : vector<8x256xf32>
    %608 = arith.select %604, %607, %603 : vector<8x256xi1>, vector<8x256xf32>
    %cst_126 = arith.constant 0.000000e+00 : f32
    %609 = vector.broadcast %cst_126 : f32 to vector<8x256xf32>
    %610 = arith.cmpf olt, %558, %609 : vector<8x256xf32>
    %cst_127 = arith.constant 3.14159274 : f32
    %611 = vector.broadcast %cst_127 : f32 to vector<8x256xf32>
    %612 = arith.subf %611, %608 : vector<8x256xf32>
    %613 = arith.select %610, %612, %608 : vector<8x256xi1>, vector<8x256xf32>
    %cst_128 = arith.constant 0.000000e+00 : f32
    %614 = vector.broadcast %cst_128 : f32 to vector<8x256xf32>
    %615 = arith.cmpf olt, %557, %614 : vector<8x256xf32>
    %cst_129 = arith.constant 0.000000e+00 : f32
    %616 = vector.broadcast %cst_129 : f32 to vector<8x256xf32>
    %617 = arith.subf %616, %613 : vector<8x256xf32>
    %618 = arith.select %615, %617, %613 : vector<8x256xi1>, vector<8x256xf32>
    %c0_130 = arith.constant 0 : index
    %c0_131 = arith.constant 0 : index
    %619 = vector.load %arg3[%c0_130, %c0_131] : memref<8x256xf32, #tpu.memory_space<vmem>>, vector<8x256xf32>
    tpu.vector_store %arg3[%c0_130, %c0_131], %618 {strides = array<i32>} : memref<8x256xf32, #tpu.memory_space<vmem>>, vector<8x256xf32>,
    return
  }
}

</mosaic_0001>

<llo_original>
// kernel: mul.117
$region0: #{mul.117}
  #allocation0 [shape = 's32[1]{0}', space=sflag, size = 0x4, scoped, tag = 'scoped memory for mul.117']
  %s0 = inlined_call_operand.vmem [shape: f32[2,4], index: 0, kind: input, shape index: {}]
  %s1 = inlined_call_operand.vmem [shape: f32[2,4,2], index: 1, kind: output, shape index: {}]
  // Predicated region
  $region2: #{mul.117} parent=0 // pred_check
    _
  $region3: #{mul.117} parent=0 // pred_check_branch
    %3 = sbr.rel (0) target = $region5
  $region4: #{mul.117} parent=0 // pred_region
    _
  $region5: #{mul.117} parent=0 // pred_fallthru
    _
  %v4 = vld [vmem:[%s0] ss:$0 sm:$0xff]
  %6 = vbcast.lane.b32.xlu0 %v4, 256
  %v7 = vpop.permute.xlu0 %6
  %8 = vst [vmem:[%s1] sm:$0xf] %v7
  %s9 = scalar_lea.vmem %s0, 1
  %v10 = vld [vmem:[%s9] ss:$0 sm:$0xff]
  %12 = vbcast.lane.b32.xlu0 %v10, 256
  %v13 = vpop.permute.xlu0 %12
  %s14 = scalar_lea.vmem %s1, 4
  %15 = vst [vmem:[%s14] sm:$0xf] %v13

// kernel: phase_decoder_forward.1
$region0: #{phase_decoder_forward.1}
  #allocation0 [shape = 'u32[]', space=smem, size = 0x4, offset = 0x4, fixed_abs, tag = 'smem constant byte address 0x4 - core index']
  #allocation1 [shape = 'u32[144,128]{1,0:T(1,128)}', space=vmem, size = 0x12000, scoped, tag = 'internal scratch']
  %s0 = inlined_call_operand.vmem [shape: f32[8,256], index: 0, kind: input, shape index: {}]
  %s1 = inlined_call_operand.vmem [shape: f32[15,256], index: 1, kind: input, shape index: {}]
  %s2 = inlined_call_operand.vmem [shape: f32[32,173], index: 2, kind: input, shape index: {}]
  %s3 = inlined_call_operand.vmem [shape: f32[8,256], index: 3, kind: output, shape index: {}]
  %s4 = sld [smem:[#allocation0]]
  $region22: #{phase_decoder_forward.1} parent=0
    _
  %s6 = ssub.s32 1, %s4
  %s7 = scalar_select 0, %s6, %s4
  // Predicated region
  $region2: #{phase_decoder_forward.1} parent=0 // pred_check
    _
  $region3: #{phase_decoder_forward.1} parent=0 // pred_check_branch
    %9 = sbr.rel (0) target = $region5
  $region4: #{phase_decoder_forward.1} parent=0 // pred_region
    _
  $region5: #{phase_decoder_forward.1} parent=0 // pred_fallthru
    _
  // Predicated region
  $region6: #{phase_decoder_forward.1} parent=0 // pred_check
    _
  $region7: #{phase_decoder_forward.1} parent=0 // pred_check_branch
    %11 = sbr.rel (0) target = $region9
  $region8: #{phase_decoder_forward.1} parent=0 // pred_region
    _
  $region9: #{phase_decoder_forward.1} parent=0 // pred_fallthru
    _
  // Predicated region
  $region10: #{phase_decoder_forward.1} parent=0 // pred_check
    _
  $region11: #{phase_decoder_forward.1} parent=0 // pred_check_branch
    %13 = sbr.rel (0) target = $region13
  $region12: #{phase_decoder_forward.1} parent=0 // pred_region
    _
  $region13: #{phase_decoder_forward.1} parent=0 // pred_fallthru
    _
  %v14 = vld [vmem:[%s1] ss:$8 sm:$0x3]
  %s15 = scalar_lea.vmem %s1, 1
  %v16 = vld [vmem:[%s15] ss:$8 sm:$0x3]
  %s17 = scalar_lea.vmem %s1, 2
  %v18 = vld [vmem:[%s17] ss:$8 sm:$0x3]
  %v19 = vld [vmem:[%s0] sm:$0xff]
  %v20 = vld [vmem:[%s0 + $0x8] sm:$0xff]
  %v21 = vld [vmem:[%s2] sm:$0xff]
  %s22 = scalar_lea.vmem %s1, 3
  %v23 = vld [vmem:[%s22] ss:$8 sm:$0x3]
  %24 = vrot.lane.b32.xlu0 %v19, 17
  %v25 = vpop.permute.xlu0 %24
  %26 = vrot.lane.b32.xlu0 %v20, 17
  %v27 = vpop.permute.xlu0 %26
  %v28 = vlaneseq
  %v29 = vand.u32 %v28, 127
  %vm30 = vcmp.lt.s32.totalorder %v29, 17
  %v31 = vsel %vm30, %v25, %v27
  %v32 = vsel %vm30, %v27, %v25
  %v33 = vmul.f32 %v23, %v14
  %v35 = vlaneseq
  %v36 = vshrl.u32 %v35, 7
  %v37 = vsub.s32 0, %v36
  %v38 = vrot.slane %v33, %v37
  %v39 = vlaneseq
  %v40 = vshrl.u32 %v39, 7
  %v41 = vsub.s32 1, %v40
  %v42 = vrot.slane %v33, %v41
  %v45 = vmul.f32 %v32, %v38
  %v46 = vmul.f32 %v31, %v42
  %48 = vset.pattern.permute.xlu0 0
  %49 = vperm.xlu0 %48, %v21
  %v50 = vpop.permute.xlu0 %49
  %v52 = vmul.f32 %v45, %v50
  %v53 = vmul.f32 %v46, %v50
  %v54 = vadd.f32 %v52, 0.0
  %v55 = vadd.f32 %v53, 0.0
  %56 = vrot.lane.b32.xlu0 %v19, 16
  %v57 = vpop.permute.xlu0 %56
  %58 = vrot.lane.b32.xlu0 %v20, 16
  %v59 = vpop.permute.xlu0 %58
  %vm60 = vcmp.lt.s32.totalorder %v29, 16
  %v61 = vsel %vm60, %v57, %v59
  %v62 = vsel %vm60, %v59, %v57
  %v63 = vmul.f32 %v23, %v16
  %v65 = vlaneseq
  %v66 = vshrl.u32 %v65, 7
  %v67 = vsub.s32 0, %v66
  %v68 = vrot.slane %v63, %v67
  %v69 = vlaneseq
  %v70 = vshrl.u32 %v69, 7
  %v71 = vsub.s32 1, %v70
  %v72 = vrot.slane %v63, %v71
  %v75 = vmul.f32 %v62, %v68
  %v76 = vmul.f32 %v61, %v72
  %77 = vset.pattern.permute.xlu0 1
  %78 = vperm.xlu0 %77, %v21
  %v79 = vpop.permute.xlu0 %78
  %v81 = vmul.f32 %v75, %v79
  %v82 = vmul.f32 %v76, %v79
  %v83 = vadd.f32 %v54, %v81
  %v84 = vadd.f32 %v55, %v82
  %85 = vrot.lane.b32.xlu0 %v19, 15
  %v86 = vpop.permute.xlu0 %85
  %87 = vrot.lane.b32.xlu0 %v20, 15
  %v88 = vpop.permute.xlu0 %87
  %vm89 = vcmp.lt.s32.totalorder %v29, 15
  %v90 = vsel %vm89, %v86, %v88
  %v91 = vsel %vm89, %v88, %v86
  %v92 = vmul.f32 %v23, %v18
  %v94 = vlaneseq
  %v95 = vshrl.u32 %v94, 7
  %v96 = vsub.s32 0, %v95
  %v97 = vrot.slane %v92, %v96
  %v98 = vlaneseq
  %v99 = vshrl.u32 %v98, 7
  %v100 = vsub.s32 1, %v99
  %v101 = vrot.slane %v92, %v100
  %v104 = vmul.f32 %v91, %v97
  %v105 = vmul.f32 %v90, %v101
  %106 = vset.pattern.permute.xlu0 2
  %107 = vperm.xlu0 %106, %v21
  %v108 = vpop.permute.xlu0 %107
  %v110 = vmul.f32 %v104, %v108
  %v111 = vmul.f32 %v105, %v108
  %v112 = vadd.f32 %v83, %v110
  %v113 = vadd.f32 %v84, %v111
  %s114 = scalar_lea.vmem %s1, 4
  %v115 = vld [vmem:[%s114] ss:$8 sm:$0x3]
  %116 = vrot.lane.b32.xlu0 %v19, 1
  %v117 = vpop.permute.xlu0 %116
  %118 = vrot.lane.b32.xlu0 %v20, 1
  %v119 = vpop.permute.xlu0 %118
  %vm120 = vcmp.lt.s32.totalorder %v29, 1
  %v121 = vsel %vm120, %v117, %v119
  %v122 = vsel %vm120, %v119, %v117
  %v123 = vmul.f32 %v115, %v14
  %v125 = vlaneseq
  %v126 = vshrl.u32 %v125, 7
  %v127 = vsub.s32 0, %v126
  %v128 = vrot.slane %v123, %v127
  %v129 = vlaneseq
  %v130 = vshrl.u32 %v129, 7
  %v131 = vsub.s32 1, %v130
  %v132 = vrot.slane %v123, %v131
  %v135 = vmul.f32 %v122, %v128
  %v136 = vmul.f32 %v121, %v132
  %137 = vset.pattern.permute.xlu0 3
  %138 = vperm.xlu0 %137, %v21
  %v139 = vpop.permute.xlu0 %138
  %v141 = vmul.f32 %v135, %v139
  %v142 = vmul.f32 %v136, %v139
  %v143 = vadd.f32 %v112, %v141
  %v144 = vadd.f32 %v113, %v142
  %v145 = vmul.f32 %v115, %v16
  %v147 = vlaneseq
  %v148 = vshrl.u32 %v147, 7
  %v149 = vsub.s32 0, %v148
  %v150 = vrot.slane %v145, %v149
  %v151 = vlaneseq
  %v152 = vshrl.u32 %v151, 7
  %v153 = vsub.s32 1, %v152
  %v154 = vrot.slane %v145, %v153
  %v157 = vmul.f32 %v19, %v150
  %v158 = vmul.f32 %v20, %v154
  %159 = vset.pattern.permute.xlu0 4
  %160 = vperm.xlu0 %159, %v21
  %v161 = vpop.permute.xlu0 %160
  %v163 = vmul.f32 %v157, %v161
  %v164 = vmul.f32 %v158, %v161
  %v165 = vadd.f32 %v143, %v163
  %v166 = vadd.f32 %v144, %v164
  %167 = vrot.lane.b32.xlu0 %v19, 127
  %v168 = vpop.permute.xlu0 %167
  %169 = vrot.lane.b32.xlu0 %v20, 127
  %v170 = vpop.permute.xlu0 %169
  %vm171 = vcmp.lt.s32.totalorder %v29, 127
  %v172 = vsel %vm171, %v168, %v170
  %v173 = vsel %vm171, %v170, %v168
  %v174 = vmul.f32 %v115, %v18
  %v176 = vlaneseq
  %v177 = vshrl.u32 %v176, 7
  %v178 = vsub.s32 0, %v177
  %v179 = vrot.slane %v174, %v178
  %v180 = vlaneseq
  %v181 = vshrl.u32 %v180, 7
  %v182 = vsub.s32 1, %v181
  %v183 = vrot.slane %v174, %v182
  %v186 = vmul.f32 %v172, %v179
  %v187 = vmul.f32 %v173, %v183
  %188 = vset.pattern.permute.xlu0 5
  %189 = vperm.xlu0 %188, %v21
  %v190 = vpop.permute.xlu0 %189
  %v192 = vmul.f32 %v186, %v190
  %v193 = vmul.f32 %v187, %v190
  %v194 = vadd.f32 %v165, %v192
  %v195 = vadd.f32 %v166, %v193
  %s196 = scalar_lea.vmem %s1, 5
  %v197 = vld [vmem:[%s196] ss:$8 sm:$0x3]
  %198 = vrot.lane.b32.xlu0 %v19, 113
  %v199 = vpop.permute.xlu0 %198
  %200 = vrot.lane.b32.xlu0 %v20, 113
  %v201 = vpop.permute.xlu0 %200
  %vm202 = vcmp.lt.s32.totalorder %v29, 113
  %v203 = vsel %vm202, %v199, %v201
  %v204 = vsel %vm202, %v201, %v199
  %v205 = vmul.f32 %v197, %v14
  %v207 = vlaneseq
  %v208 = vshrl.u32 %v207, 7
  %v209 = vsub.s32 0, %v208
  %v210 = vrot.slane %v205, %v209
  %v211 = vlaneseq
  %v212 = vshrl.u32 %v211, 7
  %v213 = vsub.s32 1, %v212
  %v214 = vrot.slane %v205, %v213
  %v217 = vmul.f32 %v203, %v210
  %v218 = vmul.f32 %v204, %v214
  %219 = vset.pattern.permute.xlu0 6
  %220 = vperm.xlu0 %219, %v21
  %v221 = vpop.permute.xlu0 %220
  %v223 = vmul.f32 %v217, %v221
  %v224 = vmul.f32 %v218, %v221
  %v225 = vadd.f32 %v194, %v223
  %v226 = vadd.f32 %v195, %v224
  %227 = vrot.lane.b32.xlu0 %v19, 112
  %v228 = vpop.permute.xlu0 %227
  %229 = vrot.lane.b32.xlu0 %v20, 112
  %v230 = vpop.permute.xlu0 %229
  %vm231 = vcmp.lt.s32.totalorder %v29, 112
  %v232 = vsel %vm231, %v228, %v230
  %v233 = vsel %vm231, %v230, %v228
  %v234 = vmul.f32 %v197, %v16
  %v236 = vlaneseq
  %v237 = vshrl.u32 %v236, 7
  %v238 = vsub.s32 0, %v237
  %v239 = vrot.slane %v234, %v238
  %v240 = vlaneseq
  %v241 = vshrl.u32 %v240, 7
  %v242 = vsub.s32 1, %v241
  %v243 = vrot.slane %v234, %v242
  %v246 = vmul.f32 %v232, %v239
  %v247 = vmul.f32 %v233, %v243
  %248 = vset.pattern.permute.xlu0 7
  %249 = vperm.xlu0 %248, %v21
  %v250 = vpop.permute.xlu0 %249
  %v252 = vmul.f32 %v246, %v250
  %v253 = vmul.f32 %v247, %v250
  %v254 = vadd.f32 %v225, %v252
  %v255 = vadd.f32 %v226, %v253
  %256 = vrot.lane.b32.xlu0 %v19, 111
  %v257 = vpop.permute.xlu0 %256
  %258 = vrot.lane.b32.xlu0 %v20, 111
  %v259 = vpop.permute.xlu0 %258
  %vm260 = vcmp.lt.s32.totalorder %v29, 111
  %v261 = vsel %vm260, %v257, %v259
  %v262 = vsel %vm260, %v259, %v257
  %v263 = vmul.f32 %v197, %v18
  %v265 = vlaneseq
  %v266 = vshrl.u32 %v265, 7
  %v267 = vsub.s32 0, %v266
  %v268 = vrot.slane %v263, %v267
  %v269 = vlaneseq
  %v270 = vshrl.u32 %v269, 7
  %v271 = vsub.s32 1, %v270
  %v272 = vrot.slane %v263, %v271
  %v275 = vmul.f32 %v261, %v268
  %v276 = vmul.f32 %v262, %v272
  %277 = vset.pattern.permute.xlu0 8
  %278 = vperm.xlu0 %277, %v21
  %v279 = vpop.permute.xlu0 %278
  %v281 = vmul.f32 %v275, %v279
  %v282 = vmul.f32 %v276, %v279
  %v283 = vadd.f32 %v254, %v281
  %v284 = vadd.f32 %v255, %v282
  %285 = vset.pattern.permute.xlu0 9
  %286 = vperm.xlu0 %285, %v21
  %v287 = vpop.permute.xlu0 %286
  %v289 = vadd.f32 %v283, %v287
  %v290 = vadd.f32 %v284, %v287
  %291 = vset.pattern.permute.xlu0 18
  %292 = vperm.xlu0 %291, %v21
  %v293 = vpop.permute.xlu0 %292
  %295 = vrot.lane.b32.xlu0 %v21, 118
  %v296 = vpop.permute.xlu0 %295
  %vm297 = vcmask 64512
  %v298 = vsel %vm297, %v296, 0
  %300 = vmatprep.subr.mxu0 %v290
  %301 = vmatpush1.msra.mxu0 %v289
  %302 = vmatprep.subr.mxu0 0.0
  %303 = vmatpush1.msra.mxu0 0.0
  %304 = vmatprep.subr.mxu0 0.0
  %305 = vmatpush1.msra.mxu0 0.0
  %306 = vmatprep.subr.mxu0 0.0
  %307 = vmatpush1.msra.mxu0 0.0
  %308 = vmatprep.subr.mxu0 0.0
  %309 = vmatpush1.msra.mxu0 0.0
  %310 = vmatprep.subr.mxu0 0.0
  %311 = vmatpush1.msra.mxu0 0.0
  %312 = vmatprep.subr.mxu0 0.0
  %313 = vmatpush1.msra.mxu0 0.0
  %314 = vmatprep.subr.mxu0 0.0
  %315 = vmatpush1.msra.mxu0 0.0
  %316 = vmatprep.subr.mxu0 0.0
  %317 = vmatpush1.msra.mxu0 0.0
  %318 = vmatprep.subr.mxu0 0.0
  %319 = vmatpush1.msra.mxu0 0.0
  %320 = vmatprep.subr.mxu0 0.0
  %321 = vmatpush1.msra.mxu0 0.0
  %322 = vmatprep.subr.mxu0 0.0
  %323 = vmatpush1.msra.mxu0 0.0
  %324 = vmatprep.subr.mxu0 0.0
  %325 = vmatpush1.msra.mxu0 0.0
  %326 = vmatprep.subr.mxu0 0.0
  %327 = vmatpush1.msra.mxu0 0.0
  %328 = vmatprep.subr.mxu0 0.0
  %329 = vmatpush1.msra.mxu0 0.0
  %330 = vmatprep.subr.mxu0 0.0
  %331 = vmatpush1.msra.mxu0 0.0
  %332 = vmatprep.subr.mxu0 0.0
  %333 = vmatpush1.msra.mxu0 0.0
  %334 = vmatprep.subr.mxu0 0.0
  %335 = vmatpush1.msra.mxu0 0.0
  %336 = vmatprep.subr.mxu0 0.0
  %337 = vmatpush1.msra.mxu0 0.0
  %338 = vmatprep.subr.mxu0 0.0
  %339 = vmatpush1.msra.mxu0 0.0
  %340 = vmatprep.subr.mxu0 0.0
  %341 = vmatpush1.msra.mxu0 0.0
  %342 = vmatprep.subr.mxu0 0.0
  %343 = vmatpush1.msra.mxu0 0.0
  %344 = vmatprep.subr.mxu0 0.0
  %345 = vmatpush1.msra.mxu0 0.0
  %346 = vmatprep.subr.mxu0 0.0
  %347 = vmatpush1.msra.mxu0 0.0
  %348 = vmatprep.subr.mxu0 0.0
  %349 = vmatpush1.msra.mxu0 0.0
  %350 = vmatprep.subr.mxu0 0.0
  %351 = vmatpush1.msra.mxu0 0.0
  %352 = vmatprep.subr.mxu0 0.0
  %353 = vmatpush1.msra.mxu0 0.0
  %354 = vmatprep.subr.mxu0 0.0
  %355 = vmatpush1.msra.mxu0 0.0
  %356 = vmatprep.subr.mxu0 0.0
  %357 = vmatpush1.msra.mxu0 0.0
  %358 = vmatprep.subr.mxu0 0.0
  %359 = vmatpush1.msra.mxu0 0.0
  %360 = vmatprep.subr.mxu0 0.0
  %361 = vmatpush1.msra.mxu0 0.0
  %362 = vmatprep.subr.mxu0 0.0
  %363 = vmatpush1.msra.mxu0 0.0
  %364 = vmatprep.mubr.f32.mxu0 0.0
  %365 = vmatmul.mubr.f32.gmra.mrb[0].mxu0 %v298
  %v366 = vpop.f32.mrb[0].mxu0
  %v367 = vadd.f32 %v293, %v366
  %v368 = vpop.f32.mrb[0].mxu0
  %v369 = vadd.f32 %v293, %v368
  %370 = vdwg.mxu0
  %v371 = vadd.f32 %v367, %v369
  %372 = vadd.xlane.f32.xlu0 %v371
  %v373 = vpop.xlane.xlu0 %372
  %v374 = vrcp.pop 256.0
  %v375 = vmul.f32 %v373, %v374
  %v376 = vsub.f32 %v367, %v375
  %v377 = vsub.f32 %v369, %v375
  %v378 = vmul.f32 %v376, %v376
  %v379 = vmul.f32 %v377, %v377
  %v380 = vadd.f32 %v378, %v379
  %381 = vadd.xlane.f32.xlu0 %v380
  %v382 = vpop.xlane.xlu0 %381
  %v383 = vmul.f32 %v382, %v374
  %v384 = vadd.f32 %v383, 1e-05
  %v385 = vrsqrt.pop %v384
  %v386 = vmul.f32 %v376, %v385
  %v387 = vmul.f32 %v377, %v385
  %388 = vset.pattern.permute.xlu0 19
  %389 = vperm.xlu0 %388, %v21
  %v390 = vpop.permute.xlu0 %389
  %v392 = vmul.f32 %v386, %v390
  %v393 = vmul.f32 %v387, %v390
  %394 = vset.pattern.permute.xlu0 20
  %395 = vperm.xlu0 %394, %v21
  %v396 = vpop.permute.xlu0 %395
  %v398 = vadd.f32 %v392, %v396
  %v399 = vadd.f32 %v393, %v396
  %vm400 = vcmp.ge.f32.partialorder %v398, 0.0
  %vm401 = vcmp.ge.f32.partialorder %v399, 0.0
  %402 = vset.pattern.permute.xlu0 21
  %403 = vperm.xlu0 %402, %v21
  %v404 = vpop.permute.xlu0 %403
  %v406 = vmul.f32 %v404, %v398
  %v407 = vmul.f32 %v404, %v399
  %v408 = vsel %vm400, %v398, %v406
  %v409 = vsel %vm401, %v399, %v407
  %v410 = vld [vmem:[%s2] sm:$0xff]
  %v411 = vld [vmem:[%s2 + $0x10] sm:$0xff]
  %s412 = scalar_lea.vmem %s1, 6
  %v413 = vld [vmem:[%s412] ss:$8 sm:$0x3]
  %414 = vrot.lane.b32.xlu0 %v408, 33
  %v415 = vpop.permute.xlu0 %414
  %416 = vrot.lane.b32.xlu0 %v19, 33
  %v417 = vpop.permute.xlu0 %416
  %418 = vrot.lane.b32.xlu0 %v409, 33
  %v419 = vpop.permute.xlu0 %418
  %420 = vrot.lane.b32.xlu0 %v20, 33
  %v421 = vpop.permute.xlu0 %420
  %vm422 = vcmp.lt.s32.totalorder %v29, 33
  %v423 = vsel %vm422, %v415, %v419
  %v424 = vsel %vm422, %v417, %v421
  %v425 = vsel %vm422, %v419, %v415
  %v426 = vsel %vm422, %v421, %v417
  %v427 = vmul.f32 %v413, %v14
  %v429 = vlaneseq
  %v430 = vshrl.u32 %v429, 7
  %v431 = vsub.s32 0, %v430
  %v432 = vrot.slane %v427, %v431
  %v433 = vlaneseq
  %v434 = vshrl.u32 %v433, 7
  %v435 = vsub.s32 1, %v434
  %v436 = vrot.slane %v427, %v435
  %v439 = vmul.f32 %v425, %v432
  %v440 = vmul.f32 %v423, %v436
  %v441 = vmul.f32 %v426, %v432
  %v442 = vmul.f32 %v424, %v436
  %444 = vset.pattern.permute.xlu0 22
  %445 = vperm.xlu0 %444, %v410
  %v446 = vpop.permute.xlu0 %445
  %449 = vset.pattern.permute.xlu0 22
  %450 = vperm.xlu0 %449, %v411
  %v451 = vpop.permute.xlu0 %450
  %v453 = vmul.f32 %v439, %v446
  %v454 = vmul.f32 %v440, %v446
  %v455 = vmul.f32 %v441, %v451
  %v456 = vmul.f32 %v442, %v451
  %v457 = vadd.f32 %v453, 0.0
  %v458 = vadd.f32 %v454, 0.0
  %v459 = vadd.f32 %v455, 0.0
  %v460 = vadd.f32 %v456, 0.0
  %461 = vrot.lane.b32.xlu0 %v408, 32
  %v462 = vpop.permute.xlu0 %461
  %463 = vrot.lane.b32.xlu0 %v19, 32
  %v464 = vpop.permute.xlu0 %463
  %465 = vrot.lane.b32.xlu0 %v409, 32
  %v466 = vpop.permute.xlu0 %465
  %467 = vrot.lane.b32.xlu0 %v20, 32
  %v468 = vpop.permute.xlu0 %467
  %vm469 = vcmp.lt.s32.totalorder %v29, 32
  %v470 = vsel %vm469, %v462, %v466
  %v471 = vsel %vm469, %v464, %v468
  %v472 = vsel %vm469, %v466, %v462
  %v473 = vsel %vm469, %v468, %v464
  %v474 = vmul.f32 %v413, %v16
  %v476 = vlaneseq
  %v477 = vshrl.u32 %v476, 7
  %v478 = vsub.s32 0, %v477
  %v479 = vrot.slane %v474, %v478
  %v480 = vlaneseq
  %v481 = vshrl.u32 %v480, 7
  %v482 = vsub.s32 1, %v481
  %v483 = vrot.slane %v474, %v482
  %v486 = vmul.f32 %v472, %v479
  %v487 = vmul.f32 %v470, %v483
  %v488 = vmul.f32 %v473, %v479
  %v489 = vmul.f32 %v471, %v483
  %490 = vset.pattern.permute.xlu0 23
  %491 = vperm.xlu0 %490, %v410
  %v492 = vpop.permute.xlu0 %491
  %494 = vset.pattern.permute.xlu0 23
  %495 = vperm.xlu0 %494, %v411
  %v496 = vpop.permute.xlu0 %495
  %v498 = vmul.f32 %v486, %v492
  %v499 = vmul.f32 %v487, %v492
  %v500 = vmul.f32 %v488, %v496
  %v501 = vmul.f32 %v489, %v496
  %v502 = vadd.f32 %v457, %v498
  %v503 = vadd.f32 %v458, %v499
  %v504 = vadd.f32 %v459, %v500
  %v505 = vadd.f32 %v460, %v501
  %506 = vrot.lane.b32.xlu0 %v408, 31
  %v507 = vpop.permute.xlu0 %506
  %508 = vrot.lane.b32.xlu0 %v19, 31
  %v509 = vpop.permute.xlu0 %508
  %510 = vrot.lane.b32.xlu0 %v409, 31
  %v511 = vpop.permute.xlu0 %510
  %512 = vrot.lane.b32.xlu0 %v20, 31
  %v513 = vpop.permute.xlu0 %512
  %vm514 = vcmp.lt.s32.totalorder %v29, 31
  %v515 = vsel %vm514, %v507, %v511
  %v516 = vsel %vm514, %v509, %v513
  %v517 = vsel %vm514, %v511, %v507
  %v518 = vsel %vm514, %v513, %v509
  %v519 = vmul.f32 %v413, %v18
  %v521 = vlaneseq
  %v522 = vshrl.u32 %v521, 7
  %v523 = vsub.s32 0, %v522
  %v524 = vrot.slane %v519, %v523
  %v525 = vlaneseq
  %v526 = vshrl.u32 %v525, 7
  %v527 = vsub.s32 1, %v526
  %v528 = vrot.slane %v519, %v527
  %v531 = vmul.f32 %v517, %v524
  %v532 = vmul.f32 %v515, %v528
  %v533 = vmul.f32 %v518, %v524
  %v534 = vmul.f32 %v516, %v528
  %535 = vset.pattern.permute.xlu0 24
  %536 = vperm.xlu0 %535, %v410
  %v537 = vpop.permute.xlu0 %536
  %539 = vset.pattern.permute.xlu0 24
  %540 = vperm.xlu0 %539, %v411
  %v541 = vpop.permute.xlu0 %540
  %v543 = vmul.f32 %v531, %v537
  %v544 = vmul.f32 %v532, %v537
  %v545 = vmul.f32 %v533, %v541
  %v546 = vmul.f32 %v534, %v541
  %v547 = vadd.f32 %v502, %v543
  %v548 = vadd.f32 %v503, %v544
  %v549 = vadd.f32 %v504, %v545
  %v550 = vadd.f32 %v505, %v546
  %s551 = scalar_lea.vmem %s1, 7
  %v552 = vld [vmem:[%s551] ss:$8 sm:$0x3]
  %553 = vrot.lane.b32.xlu0 %v408, 1
  %v554 = vpop.permute.xlu0 %553
  %555 = vrot.lane.b32.xlu0 %v409, 1
  %v556 = vpop.permute.xlu0 %555
  %v557 = vsel %vm120, %v554, %v556
  %v558 = vsel %vm120, %v556, %v554
  %v559 = vmul.f32 %v552, %v14
  %v561 = vlaneseq
  %v562 = vshrl.u32 %v561, 7
  %v563 = vsub.s32 0, %v562
  %v564 = vrot.slane %v559, %v563
  %v565 = vlaneseq
  %v566 = vshrl.u32 %v565, 7
  %v567 = vsub.s32 1, %v566
  %v568 = vrot.slane %v559, %v567
  %v571 = vmul.f32 %v558, %v564
  %v572 = vmul.f32 %v557, %v568
  %v573 = vmul.f32 %v122, %v564
  %v574 = vmul.f32 %v121, %v568
  %575 = vset.pattern.permute.xlu0 25
  %576 = vperm.xlu0 %575, %v410
  %v577 = vpop.permute.xlu0 %576
  %579 = vset.pattern.permute.xlu0 25
  %580 = vperm.xlu0 %579, %v411
  %v581 = vpop.permute.xlu0 %580
  %v583 = vmul.f32 %v571, %v577
  %v584 = vmul.f32 %v572, %v577
  %v585 = vmul.f32 %v573, %v581
  %v586 = vmul.f32 %v574, %v581
  %v587 = vadd.f32 %v547, %v583
  %v588 = vadd.f32 %v548, %v584
  %v589 = vadd.f32 %v549, %v585
  %v590 = vadd.f32 %v550, %v586
  %v591 = vmul.f32 %v552, %v16
  %v593 = vlaneseq
  %v594 = vshrl.u32 %v593, 7
  %v595 = vsub.s32 0, %v594
  %v596 = vrot.slane %v591, %v595
  %v597 = vlaneseq
  %v598 = vshrl.u32 %v597, 7
  %v599 = vsub.s32 1, %v598
  %v600 = vrot.slane %v591, %v599
  %v603 = vmul.f32 %v408, %v596
  %v604 = vmul.f32 %v409, %v600
  %v605 = vmul.f32 %v19, %v596
  %v606 = vmul.f32 %v20, %v600
  %607 = vset.pattern.permute.xlu0 26
  %608 = vperm.xlu0 %607, %v410
  %v609 = vpop.permute.xlu0 %608
  %611 = vset.pattern.permute.xlu0 26
  %612 = vperm.xlu0 %611, %v411
  %v613 = vpop.permute.xlu0 %612
  %v615 = vmul.f32 %v603, %v609
  %v616 = vmul.f32 %v604, %v609
  %v617 = vmul.f32 %v605, %v613
  %v618 = vmul.f32 %v606, %v613
  %v619 = vadd.f32 %v587, %v615
  %v620 = vadd.f32 %v588, %v616
  %v621 = vadd.f32 %v589, %v617
  %v622 = vadd.f32 %v590, %v618
  %623 = vrot.lane.b32.xlu0 %v408, 127
  %v624 = vpop.permute.xlu0 %623
  %625 = vrot.lane.b32.xlu0 %v409, 127
  %v626 = vpop.permute.xlu0 %625
  %v627 = vsel %vm171, %v624, %v626
  %v628 = vsel %vm171, %v626, %v624
  %v629 = vmul.f32 %v552, %v18
  %v631 = vlaneseq
  %v632 = vshrl.u32 %v631, 7
  %v633 = vsub.s32 0, %v632
  %v634 = vrot.slane %v629, %v633
  %v635 = vlaneseq
  %v636 = vshrl.u32 %v635, 7
  %v637 = vsub.s32 1, %v636
  %v638 = vrot.slane %v629, %v637
  %v641 = vmul.f32 %v627, %v634
  %v642 = vmul.f32 %v628, %v638
  %v643 = vmul.f32 %v172, %v634
  %v644 = vmul.f32 %v173, %v638
  %645 = vset.pattern.permute.xlu0 27
  %646 = vperm.xlu0 %645, %v410
  %v647 = vpop.permute.xlu0 %646
  %649 = vset.pattern.permute.xlu0 27
  %650 = vperm.xlu0 %649, %v411
  %v651 = vpop.permute.xlu0 %650
  %v653 = vmul.f32 %v641, %v647
  %v654 = vmul.f32 %v642, %v647
  %v655 = vmul.f32 %v643, %v651
  %v656 = vmul.f32 %v644, %v651
  %v657 = vadd.f32 %v619, %v653
  %v658 = vadd.f32 %v620, %v654
  %v659 = vadd.f32 %v621, %v655
  %v660 = vadd.f32 %v622, %v656
  %s661 = scalar_lea.vmem %s1, 16
  %v662 = vld [vmem:[%s661] ss:$8 sm:$0x3]
  %663 = vrot.lane.b32.xlu0 %v408, 97
  %v664 = vpop.permute.xlu0 %663
  %665 = vrot.lane.b32.xlu0 %v19, 97
  %v666 = vpop.permute.xlu0 %665
  %667 = vrot.lane.b32.xlu0 %v409, 97
  %v668 = vpop.permute.xlu0 %667
  %669 = vrot.lane.b32.xlu0 %v20, 97
  %v670 = vpop.permute.xlu0 %669
  %vm671 = vcmp.lt.s32.totalorder %v29, 97
  %v672 = vsel %vm671, %v664, %v668
  %v673 = vsel %vm671, %v666, %v670
  %v674 = vsel %vm671, %v668, %v664
  %v675 = vsel %vm671, %v670, %v666
  %v676 = vmul.f32 %v662, %v14
  %v678 = vlaneseq
  %v679 = vshrl.u32 %v678, 7
  %v680 = vsub.s32 0, %v679
  %v681 = vrot.slane %v676, %v680
  %v682 = vlaneseq
  %v683 = vshrl.u32 %v682, 7
  %v684 = vsub.s32 1, %v683
  %v685 = vrot.slane %v676, %v684
  %v688 = vmul.f32 %v672, %v681
  %v689 = vmul.f32 %v674, %v685
  %v690 = vmul.f32 %v673, %v681
  %v691 = vmul.f32 %v675, %v685
  %692 = vset.pattern.permute.xlu0 28
  %693 = vperm.xlu0 %692, %v410
  %v694 = vpop.permute.xlu0 %693
  %696 = vset.pattern.permute.xlu0 28
  %697 = vperm.xlu0 %696, %v411
  %v698 = vpop.permute.xlu0 %697
  %v700 = vmul.f32 %v688, %v694
  %v701 = vmul.f32 %v689, %v694
  %v702 = vmul.f32 %v690, %v698
  %v703 = vmul.f32 %v691, %v698
  %v704 = vadd.f32 %v657, %v700
  %v705 = vadd.f32 %v658, %v701
  %v706 = vadd.f32 %v659, %v702
  %v707 = vadd.f32 %v660, %v703
  %708 = vrot.lane.b32.xlu0 %v408, 96
  %v709 = vpop.permute.xlu0 %708
  %710 = vrot.lane.b32.xlu0 %v19, 96
  %v711 = vpop.permute.xlu0 %710
  %712 = vrot.lane.b32.xlu0 %v409, 96
  %v713 = vpop.permute.xlu0 %712
  %714 = vrot.lane.b32.xlu0 %v20, 96
  %v715 = vpop.permute.xlu0 %714
  %vm716 = vcmp.lt.s32.totalorder %v29, 96
  %v717 = vsel %vm716, %v709, %v713
  %v718 = vsel %vm716, %v711, %v715
  %v719 = vsel %vm716, %v713, %v709
  %v720 = vsel %vm716, %v715, %v711
  %v721 = vmul.f32 %v662, %v16
  %v723 = vlaneseq
  %v724 = vshrl.u32 %v723, 7
  %v725 = vsub.s32 0, %v724
  %v726 = vrot.slane %v721, %v725
  %v727 = vlaneseq
  %v728 = vshrl.u32 %v727, 7
  %v729 = vsub.s32 1, %v728
  %v730 = vrot.slane %v721, %v729
  %v733 = vmul.f32 %v717, %v726
  %v734 = vmul.f32 %v719, %v730
  %v735 = vmul.f32 %v718, %v726
  %v736 = vmul.f32 %v720, %v730
  %737 = vset.pattern.permute.xlu0 29
  %738 = vperm.xlu0 %737, %v410
  %v739 = vpop.permute.xlu0 %738
  %741 = vset.pattern.permute.xlu0 29
  %742 = vperm.xlu0 %741, %v411
  %v743 = vpop.permute.xlu0 %742
  %v745 = vmul.f32 %v733, %v739
  %v746 = vmul.f32 %v734, %v739
  %v747 = vmul.f32 %v735, %v743
  %v748 = vmul.f32 %v736, %v743
  %v749 = vadd.f32 %v704, %v745
  %v750 = vadd.f32 %v705, %v746
  %v751 = vadd.f32 %v706, %v747
  %v752 = vadd.f32 %v707, %v748
  %753 = vrot.lane.b32.xlu0 %v408, 95
  %v754 = vpop.permute.xlu0 %753
  %755 = vrot.lane.b32.xlu0 %v19, 95
  %v756 = vpop.permute.xlu0 %755
  %757 = vrot.lane.b32.xlu0 %v409, 95
  %v758 = vpop.permute.xlu0 %757
  %759 = vrot.lane.b32.xlu0 %v20, 95
  %v760 = vpop.permute.xlu0 %759
  %vm761 = vcmp.lt.s32.totalorder %v29, 95
  %v762 = vsel %vm761, %v754, %v758
  %v763 = vsel %vm761, %v756, %v760
  %v764 = vsel %vm761, %v758, %v754
  %v765 = vsel %vm761, %v760, %v756
  %v766 = vmul.f32 %v662, %v18
  %v768 = vlaneseq
  %v769 = vshrl.u32 %v768, 7
  %v770 = vsub.s32 0, %v769
  %v771 = vrot.slane %v766, %v770
  %v772 = vlaneseq
  %v773 = vshrl.u32 %v772, 7
  %v774 = vsub.s32 1, %v773
  %v775 = vrot.slane %v766, %v774
  %v778 = vmul.f32 %v762, %v771
  %v779 = vmul.f32 %v764, %v775
  %v780 = vmul.f32 %v763, %v771
  %v781 = vmul.f32 %v765, %v775
  %782 = vset.pattern.permute.xlu0 30
  %783 = vperm.xlu0 %782, %v410
  %v784 = vpop.permute.xlu0 %783
  %786 = vset.pattern.permute.xlu0 30
  %787 = vperm.xlu0 %786, %v411
  %v788 = vpop.permute.xlu0 %787
  %v790 = vmul.f32 %v778, %v784
  %v791 = vmul.f32 %v779, %v784
  %v792 = vmul.f32 %v780, %v788
  %v793 = vmul.f32 %v781, %v788
  %v794 = vadd.f32 %v749, %v790
  %v795 = vadd.f32 %v750, %v791
  %v796 = vadd.f32 %v751, %v792
  %v797 = vadd.f32 %v752, %v793
  %798 = vset.pattern.permute.xlu0 31
  %799 = vperm.xlu0 %798, %v410
  %v800 = vpop.permute.xlu0 %799
  %802 = vset.pattern.permute.xlu0 31
  %803 = vperm.xlu0 %802, %v411
  %v804 = vpop.permute.xlu0 %803
  %v806 = vadd.f32 %v794, %v800
  %v807 = vadd.f32 %v795, %v800
  %v808 = vadd.f32 %v796, %v804
  %v809 = vadd.f32 %v797, %v804
  %810 = vset.pattern.permute.xlu0 48
  %811 = vperm.xlu0 %810, %v21
  %v812 = vpop.permute.xlu0 %811
  %814 = vrot.lane.b32.xlu0 %v21, 96
  %v815 = vpop.permute.xlu0 %814
  %vm816 = vcmask 130048
  %v817 = vsel %vm816, %v815, 0
  %819 = vmatprep.subr.mxu0 %v807
  %820 = vmatpush1.msra.mxu0 %v806
  %821 = vmatprep.subr.mxu0 %v809
  %822 = vmatpush1.msra.mxu0 %v808
  %823 = vmatprep.subr.mxu0 0.0
  %824 = vmatpush1.msra.mxu0 0.0
  %825 = vmatprep.subr.mxu0 0.0
  %826 = vmatpush1.msra.mxu0 0.0
  %827 = vmatprep.subr.mxu0 0.0
  %828 = vmatpush1.msra.mxu0 0.0
  %829 = vmatprep.subr.mxu0 0.0
  %830 = vmatpush1.msra.mxu0 0.0
  %831 = vmatprep.subr.mxu0 0.0
  %832 = vmatpush1.msra.mxu0 0.0
  %833 = vmatprep.subr.mxu0 0.0
  %834 = vmatpush1.msra.mxu0 0.0
  %835 = vmatprep.subr.mxu0 0.0
  %836 = vmatpush1.msra.mxu0 0.0
  %837 = vmatprep.subr.mxu0 0.0
  %838 = vmatpush1.msra.mxu0 0.0
  %839 = vmatprep.subr.mxu0 0.0
  %840 = vmatpush1.msra.mxu0 0.0
  %841 = vmatprep.subr.mxu0 0.0
  %842 = vmatpush1.msra.mxu0 0.0
  %843 = vmatprep.subr.mxu0 0.0
  %844 = vmatpush1.msra.mxu0 0.0
  %845 = vmatprep.subr.mxu0 0.0
  %846 = vmatpush1.msra.mxu0 0.0
  %847 = vmatprep.subr.mxu0 0.0
  %848 = vmatpush1.msra.mxu0 0.0
  %849 = vmatprep.subr.mxu0 0.0
  %850 = vmatpush1.msra.mxu0 0.0
  %851 = vmatprep.subr.mxu0 0.0
  %852 = vmatpush1.msra.mxu0 0.0
  %853 = vmatprep.subr.mxu0 0.0
  %854 = vmatpush1.msra.mxu0 0.0
  %855 = vmatprep.subr.mxu0 0.0
  %856 = vmatpush1.msra.mxu0 0.0
  %857 = vmatprep.subr.mxu0 0.0
  %858 = vmatpush1.msra.mxu0 0.0
  %859 = vmatprep.subr.mxu0 0.0
  %860 = vmatpush1.msra.mxu0 0.0
  %861 = vmatprep.subr.mxu0 0.0
  %862 = vmatpush1.msra.mxu0 0.0
  %863 = vmatprep.subr.mxu0 0.0
  %864 = vmatpush1.msra.mxu0 0.0
  %865 = vmatprep.subr.mxu0 0.0
  %866 = vmatpush1.msra.mxu0 0.0
  %867 = vmatprep.subr.mxu0 0.0
  %868 = vmatpush1.msra.mxu0 0.0
  %869 = vmatprep.subr.mxu0 0.0
  %870 = vmatpush1.msra.mxu0 0.0
  %871 = vmatprep.subr.mxu0 0.0
  %872 = vmatpush1.msra.mxu0 0.0
  %873 = vmatprep.subr.mxu0 0.0
  %874 = vmatpush1.msra.mxu0 0.0
  %875 = vmatprep.subr.mxu0 0.0
  %876 = vmatpush1.msra.mxu0 0.0
  %877 = vmatprep.subr.mxu0 0.0
  %878 = vmatpush1.msra.mxu0 0.0
  %879 = vmatprep.subr.mxu0 0.0
  %880 = vmatpush1.msra.mxu0 0.0
  %881 = vmatprep.subr.mxu0 0.0
  %882 = vmatpush1.msra.mxu0 0.0
  %883 = vmatprep.mubr.f32.mxu0 0.0
  %884 = vmatmul.mubr.f32.gmra.mrb[0].mxu0 %v817
  %v885 = vpop.f32.mrb[0].mxu0
  %v886 = vadd.f32 %v812, %v885
  %v887 = vpop.f32.mrb[0].mxu0
  %v888 = vadd.f32 %v812, %v887
  %889 = vdwg.mxu0
  %v890 = vadd.f32 %v886, %v888
  %891 = vadd.xlane.f32.xlu0 %v890
  %v892 = vpop.xlane.xlu0 %891
  %v893 = vmul.f32 %v892, %v374
  %v894 = vsub.f32 %v886, %v893
  %v895 = vsub.f32 %v888, %v893
  %v896 = vmul.f32 %v894, %v894
  %v897 = vmul.f32 %v895, %v895
  %v898 = vadd.f32 %v896, %v897
  %899 = vadd.xlane.f32.xlu0 %v898
  %v900 = vpop.xlane.xlu0 %899
  %v901 = vmul.f32 %v900, %v374
  %v902 = vadd.f32 %v901, 1e-05
  %v903 = vrsqrt.pop %v902
  %v904 = vmul.f32 %v894, %v903
  %v905 = vmul.f32 %v895, %v903
  %906 = vset.pattern.permute.xlu0 49
  %907 = vperm.xlu0 %906, %v21
  %v908 = vpop.permute.xlu0 %907
  %v910 = vmul.f32 %v904, %v908
  %v911 = vmul.f32 %v905, %v908
  %912 = vset.pattern.permute.xlu0 50
  %913 = vperm.xlu0 %912, %v21
  %v914 = vpop.permute.xlu0 %913
  %v916 = vadd.f32 %v910, %v914
  %v917 = vadd.f32 %v911, %v914
  %vm918 = vcmp.ge.f32.partialorder %v916, 0.0
  %vm919 = vcmp.ge.f32.partialorder %v917, 0.0
  %920 = vset.pattern.permute.xlu0 51
  %921 = vperm.xlu0 %920, %v21
  %v922 = vpop.permute.xlu0 %921
  %v924 = vmul.f32 %v922, %v916
  %v925 = vmul.f32 %v922, %v917
  %v926 = vsel %vm918, %v916, %v924
  %v927 = vsel %vm919, %v917, %v925
  %v928 = vld [vmem:[%s2] sm:$0xff]
  %v929 = vld [vmem:[%s2 + $0x10] sm:$0xff]
  %v930 = vld [vmem:[%s2 + $0x20] sm:$0xff]
  %s931 = scalar_lea.vmem %s1, 17
  %v932 = vld [vmem:[%s931] ss:$8 sm:$0x3]
  %933 = vrot.lane.b32.xlu0 %v926, 65
  %v934 = vpop.permute.xlu0 %933
  %935 = vrot.lane.b32.xlu0 %v408, 65
  %v936 = vpop.permute.xlu0 %935
  %937 = vrot.lane.b32.xlu0 %v19, 65
  %v938 = vpop.permute.xlu0 %937
  %939 = vrot.lane.b32.xlu0 %v927, 65
  %v940 = vpop.permute.xlu0 %939
  %941 = vrot.lane.b32.xlu0 %v409, 65
  %v942 = vpop.permute.xlu0 %941
  %943 = vrot.lane.b32.xlu0 %v20, 65
  %v944 = vpop.permute.xlu0 %943
  %vm945 = vcmp.lt.s32.totalorder %v29, 65
  %v946 = vsel %vm945, %v934, %v940
  %v947 = vsel %vm945, %v936, %v942
  %v948 = vsel %vm945, %v938, %v944
  %v949 = vsel %vm945, %v940, %v934
  %v950 = vsel %vm945, %v942, %v936
  %v951 = vsel %vm945, %v944, %v938
  %v952 = vmul.f32 %v932, %v14
  %v954 = vlaneseq
  %v955 = vshrl.u32 %v954, 7
  %v956 = vsub.s32 0, %v955
  %v957 = vrot.slane %v952, %v956
  %v958 = vlaneseq
  %v959 = vshrl.u32 %v958, 7
  %v960 = vsub.s32 1, %v959
  %v961 = vrot.slane %v952, %v960
  %v964 = vmul.f32 %v949, %v957
  %v965 = vmul.f32 %v946, %v961
  %v966 = vmul.f32 %v950, %v957
  %v967 = vmul.f32 %v947, %v961
  %v968 = vmul.f32 %v951, %v957
  %v969 = vmul.f32 %v948, %v961
  %971 = vset.pattern.permute.xlu0 52
  %972 = vperm.xlu0 %971, %v928
  %v973 = vpop.permute.xlu0 %972
  %976 = vset.pattern.permute.xlu0 52
  %977 = vperm.xlu0 %976, %v929
  %v978 = vpop.permute.xlu0 %977
  %981 = vset.pattern.permute.xlu0 52
  %982 = vperm.xlu0 %981, %v930
  %v983 = vpop.permute.xlu0 %982
  %v985 = vmul.f32 %v964, %v973
  %v986 = vmul.f32 %v965, %v973
  %v987 = vmul.f32 %v966, %v978
  %v988 = vmul.f32 %v967, %v978
  %v989 = vmul.f32 %v968, %v983
  %v990 = vmul.f32 %v969, %v983
  %v991 = vadd.f32 %v985, 0.0
  %v992 = vadd.f32 %v986, 0.0
  %v993 = vadd.f32 %v987, 0.0
  %v994 = vadd.f32 %v988, 0.0
  %v995 = vadd.f32 %v989, 0.0
  %v996 = vadd.f32 %v990, 0.0
  %997 = vrot.lane.b32.xlu0 %v926, 64
  %v998 = vpop.permute.xlu0 %997
  %999 = vrot.lane.b32.xlu0 %v408, 64
  %v1000 = vpop.permute.xlu0 %999
  %1001 = vrot.lane.b32.xlu0 %v19, 64
  %v1002 = vpop.permute.xlu0 %1001
  %1003 = vrot.lane.b32.xlu0 %v927, 64
  %v1004 = vpop.permute.xlu0 %1003
  %1005 = vrot.lane.b32.xlu0 %v409, 64
  %v1006 = vpop.permute.xlu0 %1005
  %1007 = vrot.lane.b32.xlu0 %v20, 64
  %v1008 = vpop.permute.xlu0 %1007
  %vm1009 = vcmp.lt.s32.totalorder %v29, 64
  %v1010 = vsel %vm1009, %v998, %v1004
  %v1011 = vsel %vm1009, %v1000, %v1006
  %v1012 = vsel %vm1009, %v1002, %v1008
  %v1013 = vsel %vm1009, %v1004, %v998
  %v1014 = vsel %vm1009, %v1006, %v1000
  %v1015 = vsel %vm1009, %v1008, %v1002
  %v1016 = vmul.f32 %v932, %v16
  %v1018 = vlaneseq
  %v1019 = vshrl.u32 %v1018, 7
  %v1020 = vsub.s32 0, %v1019
  %v1021 = vrot.slane %v1016, %v1020
  %v1022 = vlaneseq
  %v1023 = vshrl.u32 %v1022, 7
  %v1024 = vsub.s32 1, %v1023
  %v1025 = vrot.slane %v1016, %v1024
  %v1028 = vmul.f32 %v1013, %v1021
  %v1029 = vmul.f32 %v1010, %v1025
  %v1030 = vmul.f32 %v1014, %v1021
  %v1031 = vmul.f32 %v1011, %v1025
  %v1032 = vmul.f32 %v1015, %v1021
  %v1033 = vmul.f32 %v1012, %v1025
  %1034 = vset.pattern.permute.xlu0 53
  %1035 = vperm.xlu0 %1034, %v928
  %v1036 = vpop.permute.xlu0 %1035
  %1038 = vset.pattern.permute.xlu0 53
  %1039 = vperm.xlu0 %1038, %v929
  %v1040 = vpop.permute.xlu0 %1039
  %1042 = vset.pattern.permute.xlu0 53
  %1043 = vperm.xlu0 %1042, %v930
  %v1044 = vpop.permute.xlu0 %1043
  %v1046 = vmul.f32 %v1028, %v1036
  %v1047 = vmul.f32 %v1029, %v1036
  %v1048 = vmul.f32 %v1030, %v1040
  %v1049 = vmul.f32 %v1031, %v1040
  %v1050 = vmul.f32 %v1032, %v1044
  %v1051 = vmul.f32 %v1033, %v1044
  %v1052 = vadd.f32 %v991, %v1046
  %v1053 = vadd.f32 %v992, %v1047
  %v1054 = vadd.f32 %v993, %v1048
  %v1055 = vadd.f32 %v994, %v1049
  %v1056 = vadd.f32 %v995, %v1050
  %v1057 = vadd.f32 %v996, %v1051
  %1058 = vrot.lane.b32.xlu0 %v926, 63
  %v1059 = vpop.permute.xlu0 %1058
  %1060 = vrot.lane.b32.xlu0 %v408, 63
  %v1061 = vpop.permute.xlu0 %1060
  %1062 = vrot.lane.b32.xlu0 %v19, 63
  %v1063 = vpop.permute.xlu0 %1062
  %1064 = vrot.lane.b32.xlu0 %v927, 63
  %v1065 = vpop.permute.xlu0 %1064
  %1066 = vrot.lane.b32.xlu0 %v409, 63
  %v1067 = vpop.permute.xlu0 %1066
  %1068 = vrot.lane.b32.xlu0 %v20, 63
  %v1069 = vpop.permute.xlu0 %1068
  %vm1070 = vcmp.lt.s32.totalorder %v29, 63
  %v1071 = vsel %vm1070, %v1059, %v1065
  %v1072 = vsel %vm1070, %v1061, %v1067
  %v1073 = vsel %vm1070, %v1063, %v1069
  %v1074 = vsel %vm1070, %v1065, %v1059
  %v1075 = vsel %vm1070, %v1067, %v1061
  %v1076 = vsel %vm1070, %v1069, %v1063
  %v1077 = vmul.f32 %v932, %v18
  %v1079 = vlaneseq
  %v1080 = vshrl.u32 %v1079, 7
  %v1081 = vsub.s32 0, %v1080
  %v1082 = vrot.slane %v1077, %v1081
  %v1083 = vlaneseq
  %v1084 = vshrl.u32 %v1083, 7
  %v1085 = vsub.s32 1, %v1084
  %v1086 = vrot.slane %v1077, %v1085
  %v1089 = vmul.f32 %v1074, %v1082
  %v1090 = vmul.f32 %v1071, %v1086
  %v1091 = vmul.f32 %v1075, %v1082
  %v1092 = vmul.f32 %v1072, %v1086
  %v1093 = vmul.f32 %v1076, %v1082
  %v1094 = vmul.f32 %v1073, %v1086
  %1095 = vset.pattern.permute.xlu0 54
  %1096 = vperm.xlu0 %1095, %v928
  %v1097 = vpop.permute.xlu0 %1096
  %1099 = vset.pattern.permute.xlu0 54
  %1100 = vperm.xlu0 %1099, %v929
  %v1101 = vpop.permute.xlu0 %1100
  %1103 = vset.pattern.permute.xlu0 54
  %1104 = vperm.xlu0 %1103, %v930
  %v1105 = vpop.permute.xlu0 %1104
  %v1107 = vmul.f32 %v1089, %v1097
  %v1108 = vmul.f32 %v1090, %v1097
  %v1109 = vmul.f32 %v1091, %v1101
  %v1110 = vmul.f32 %v1092, %v1101
  %v1111 = vmul.f32 %v1093, %v1105
  %v1112 = vmul.f32 %v1094, %v1105
  %v1113 = vadd.f32 %v1052, %v1107
  %v1114 = vadd.f32 %v1053, %v1108
  %v1115 = vadd.f32 %v1054, %v1109
  %v1116 = vadd.f32 %v1055, %v1110
  %v1117 = vadd.f32 %v1056, %v1111
  %v1118 = vadd.f32 %v1057, %v1112
  %s1119 = scalar_lea.vmem %s1, 18
  %v1120 = vld [vmem:[%s1119] ss:$8 sm:$0x3]
  %1121 = vrot.lane.b32.xlu0 %v926, 1
  %v1122 = vpop.permute.xlu0 %1121
  %1123 = vrot.lane.b32.xlu0 %v927, 1
  %v1124 = vpop.permute.xlu0 %1123
  %v1125 = vsel %vm120, %v1122, %v1124
  %v1126 = vsel %vm120, %v1124, %v1122
  %v1127 = vmul.f32 %v1120, %v14
  %v1129 = vlaneseq
  %v1130 = vshrl.u32 %v1129, 7
  %v1131 = vsub.s32 0, %v1130
  %v1132 = vrot.slane %v1127, %v1131
  %v1133 = vlaneseq
  %v1134 = vshrl.u32 %v1133, 7
  %v1135 = vsub.s32 1, %v1134
  %v1136 = vrot.slane %v1127, %v1135
  %v1139 = vmul.f32 %v1126, %v1132
  %v1140 = vmul.f32 %v1125, %v1136
  %v1141 = vmul.f32 %v558, %v1132
  %v1142 = vmul.f32 %v557, %v1136
  %v1143 = vmul.f32 %v122, %v1132
  %v1144 = vmul.f32 %v121, %v1136
  %1145 = vset.pattern.permute.xlu0 55
  %1146 = vperm.xlu0 %1145, %v928
  %v1147 = vpop.permute.xlu0 %1146
  %1149 = vset.pattern.permute.xlu0 55
  %1150 = vperm.xlu0 %1149, %v929
  %v1151 = vpop.permute.xlu0 %1150
  %1153 = vset.pattern.permute.xlu0 55
  %1154 = vperm.xlu0 %1153, %v930
  %v1155 = vpop.permute.xlu0 %1154
  %v1157 = vmul.f32 %v1139, %v1147
  %v1158 = vmul.f32 %v1140, %v1147
  %v1159 = vmul.f32 %v1141, %v1151
  %v1160 = vmul.f32 %v1142, %v1151
  %v1161 = vmul.f32 %v1143, %v1155
  %v1162 = vmul.f32 %v1144, %v1155
  %v1163 = vadd.f32 %v1113, %v1157
  %v1164 = vadd.f32 %v1114, %v1158
  %v1165 = vadd.f32 %v1115, %v1159
  %v1166 = vadd.f32 %v1116, %v1160
  %v1167 = vadd.f32 %v1117, %v1161
  %v1168 = vadd.f32 %v1118, %v1162
  %v1169 = vmul.f32 %v1120, %v16
  %v1171 = vlaneseq
  %v1172 = vshrl.u32 %v1171, 7
  %v1173 = vsub.s32 0, %v1172
  %v1174 = vrot.slane %v1169, %v1173
  %v1175 = vlaneseq
  %v1176 = vshrl.u32 %v1175, 7
  %v1177 = vsub.s32 1, %v1176
  %v1178 = vrot.slane %v1169, %v1177
  %v1181 = vmul.f32 %v926, %v1174
  %v1182 = vmul.f32 %v927, %v1178
  %v1183 = vmul.f32 %v408, %v1174
  %v1184 = vmul.f32 %v409, %v1178
  %v1185 = vmul.f32 %v19, %v1174
  %v1186 = vmul.f32 %v20, %v1178
  %1187 = vset.pattern.permute.xlu0 56
  %1188 = vperm.xlu0 %1187, %v928
  %v1189 = vpop.permute.xlu0 %1188
  %1191 = vset.pattern.permute.xlu0 56
  %1192 = vperm.xlu0 %1191, %v929
  %v1193 = vpop.permute.xlu0 %1192
  %1195 = vset.pattern.permute.xlu0 56
  %1196 = vperm.xlu0 %1195, %v930
  %v1197 = vpop.permute.xlu0 %1196
  %v1199 = vmul.f32 %v1181, %v1189
  %v1200 = vmul.f32 %v1182, %v1189
  %v1201 = vmul.f32 %v1183, %v1193
  %v1202 = vmul.f32 %v1184, %v1193
  %v1203 = vmul.f32 %v1185, %v1197
  %v1204 = vmul.f32 %v1186, %v1197
  %v1205 = vadd.f32 %v1163, %v1199
  %v1206 = vadd.f32 %v1164, %v1200
  %v1207 = vadd.f32 %v1165, %v1201
  %v1208 = vadd.f32 %v1166, %v1202
  %v1209 = vadd.f32 %v1167, %v1203
  %v1210 = vadd.f32 %v1168, %v1204
  %1211 = vrot.lane.b32.xlu0 %v926, 127
  %v1212 = vpop.permute.xlu0 %1211
  %1213 = vrot.lane.b32.xlu0 %v927, 127
  %v1214 = vpop.permute.xlu0 %1213
  %v1215 = vsel %vm171, %v1212, %v1214
  %v1216 = vsel %vm171, %v1214, %v1212
  %v1217 = vmul.f32 %v1120, %v18
  %v1219 = vlaneseq
  %v1220 = vshrl.u32 %v1219, 7
  %v1221 = vsub.s32 0, %v1220
  %v1222 = vrot.slane %v1217, %v1221
  %v1223 = vlaneseq
  %v1224 = vshrl.u32 %v1223, 7
  %v1225 = vsub.s32 1, %v1224
  %v1226 = vrot.slane %v1217, %v1225
  %v1229 = vmul.f32 %v1215, %v1222
  %v1230 = vmul.f32 %v1216, %v1226
  %v1231 = vmul.f32 %v627, %v1222
  %v1232 = vmul.f32 %v628, %v1226
  %v1233 = vmul.f32 %v172, %v1222
  %v1234 = vmul.f32 %v173, %v1226
  %1235 = vset.pattern.permute.xlu0 57
  %1236 = vperm.xlu0 %1235, %v928
  %v1237 = vpop.permute.xlu0 %1236
  %1239 = vset.pattern.permute.xlu0 57
  %1240 = vperm.xlu0 %1239, %v929
  %v1241 = vpop.permute.xlu0 %1240
  %1243 = vset.pattern.permute.xlu0 57
  %1244 = vperm.xlu0 %1243, %v930
  %v1245 = vpop.permute.xlu0 %1244
  %v1247 = vmul.f32 %v1229, %v1237
  %v1248 = vmul.f32 %v1230, %v1237
  %v1249 = vmul.f32 %v1231, %v1241
  %v1250 = vmul.f32 %v1232, %v1241
  %v1251 = vmul.f32 %v1233, %v1245
  %v1252 = vmul.f32 %v1234, %v1245
  %v1253 = vadd.f32 %v1205, %v1247
  %v1254 = vadd.f32 %v1206, %v1248
  %v1255 = vadd.f32 %v1207, %v1249
  %v1256 = vadd.f32 %v1208, %v1250
  %v1257 = vadd.f32 %v1209, %v1251
  %v1258 = vadd.f32 %v1210, %v1252
  %s1259 = scalar_lea.vmem %s1, 19
  %v1260 = vld [vmem:[%s1259] ss:$8 sm:$0x3]
  %v1261 = vmul.f32 %v1260, %v14
  %v1263 = vlaneseq
  %v1264 = vshrl.u32 %v1263, 7
  %v1265 = vsub.s32 0, %v1264
  %v1266 = vrot.slane %v1261, %v1265
  %v1267 = vlaneseq
  %v1268 = vshrl.u32 %v1267, 7
  %v1269 = vsub.s32 1, %v1268
  %v1270 = vrot.slane %v1261, %v1269
  %v1273 = vmul.f32 %v946, %v1266
  %v1274 = vmul.f32 %v949, %v1270
  %v1275 = vmul.f32 %v947, %v1266
  %v1276 = vmul.f32 %v950, %v1270
  %v1277 = vmul.f32 %v948, %v1266
  %v1278 = vmul.f32 %v951, %v1270
  %1279 = vset.pattern.permute.xlu0 58
  %1280 = vperm.xlu0 %1279, %v928
  %v1281 = vpop.permute.xlu0 %1280
  %1283 = vset.pattern.permute.xlu0 58
  %1284 = vperm.xlu0 %1283, %v929
  %v1285 = vpop.permute.xlu0 %1284
  %1287 = vset.pattern.permute.xlu0 58
  %1288 = vperm.xlu0 %1287, %v930
  %v1289 = vpop.permute.xlu0 %1288
  %v1291 = vmul.f32 %v1273, %v1281
  %v1292 = vmul.f32 %v1274, %v1281
  %v1293 = vmul.f32 %v1275, %v1285
  %v1294 = vmul.f32 %v1276, %v1285
  %v1295 = vmul.f32 %v1277, %v1289
  %v1296 = vmul.f32 %v1278, %v1289
  %v1297 = vadd.f32 %v1253, %v1291
  %v1298 = vadd.f32 %v1254, %v1292
  %v1299 = vadd.f32 %v1255, %v1293
  %v1300 = vadd.f32 %v1256, %v1294
  %v1301 = vadd.f32 %v1257, %v1295
  %v1302 = vadd.f32 %v1258, %v1296
  %v1303 = vmul.f32 %v1260, %v16
  %v1305 = vlaneseq
  %v1306 = vshrl.u32 %v1305, 7
  %v1307 = vsub.s32 0, %v1306
  %v1308 = vrot.slane %v1303, %v1307
  %v1309 = vlaneseq
  %v1310 = vshrl.u32 %v1309, 7
  %v1311 = vsub.s32 1, %v1310
  %v1312 = vrot.slane %v1303, %v1311
  %v1315 = vmul.f32 %v1010, %v1308
  %v1316 = vmul.f32 %v1013, %v1312
  %v1317 = vmul.f32 %v1011, %v1308
  %v1318 = vmul.f32 %v1014, %v1312
  %v1319 = vmul.f32 %v1012, %v1308
  %v1320 = vmul.f32 %v1015, %v1312
  %1321 = vset.pattern.permute.xlu0 59
  %1322 = vperm.xlu0 %1321, %v928
  %v1323 = vpop.permute.xlu0 %1322
  %1325 = vset.pattern.permute.xlu0 59
  %1326 = vperm.xlu0 %1325, %v929
  %v1327 = vpop.permute.xlu0 %1326
  %1329 = vset.pattern.permute.xlu0 59
  %1330 = vperm.xlu0 %1329, %v930
  %v1331 = vpop.permute.xlu0 %1330
  %v1333 = vmul.f32 %v1315, %v1323
  %v1334 = vmul.f32 %v1316, %v1323
  %v1335 = vmul.f32 %v1317, %v1327
  %v1336 = vmul.f32 %v1318, %v1327
  %v1337 = vmul.f32 %v1319, %v1331
  %v1338 = vmul.f32 %v1320, %v1331
  %v1339 = vadd.f32 %v1297, %v1333
  %v1340 = vadd.f32 %v1298, %v1334
  %v1341 = vadd.f32 %v1299, %v1335
  %v1342 = vadd.f32 %v1300, %v1336
  %v1343 = vadd.f32 %v1301, %v1337
  %v1344 = vadd.f32 %v1302, %v1338
  %v1345 = vmul.f32 %v1260, %v18
  %v1347 = vlaneseq
  %v1348 = vshrl.u32 %v1347, 7
  %v1349 = vsub.s32 0, %v1348
  %v1350 = vrot.slane %v1345, %v1349
  %v1351 = vlaneseq
  %v1352 = vshrl.u32 %v1351, 7
  %v1353 = vsub.s32 1, %v1352
  %v1354 = vrot.slane %v1345, %v1353
  %v1357 = vmul.f32 %v1071, %v1350
  %v1358 = vmul.f32 %v1074, %v1354
  %v1359 = vmul.f32 %v1072, %v1350
  %v1360 = vmul.f32 %v1075, %v1354
  %v1361 = vmul.f32 %v1073, %v1350
  %v1362 = vmul.f32 %v1076, %v1354
  %1363 = vset.pattern.permute.xlu0 60
  %1364 = vperm.xlu0 %1363, %v928
  %v1365 = vpop.permute.xlu0 %1364
  %1367 = vset.pattern.permute.xlu0 60
  %1368 = vperm.xlu0 %1367, %v929
  %v1369 = vpop.permute.xlu0 %1368
  %1371 = vset.pattern.permute.xlu0 60
  %1372 = vperm.xlu0 %1371, %v930
  %v1373 = vpop.permute.xlu0 %1372
  %v1375 = vmul.f32 %v1357, %v1365
  %v1376 = vmul.f32 %v1358, %v1365
  %v1377 = vmul.f32 %v1359, %v1369
  %v1378 = vmul.f32 %v1360, %v1369
  %v1379 = vmul.f32 %v1361, %v1373
  %v1380 = vmul.f32 %v1362, %v1373
  %v1381 = vadd.f32 %v1339, %v1375
  %v1382 = vadd.f32 %v1340, %v1376
  %v1383 = vadd.f32 %v1341, %v1377
  %v1384 = vadd.f32 %v1342, %v1378
  %v1385 = vadd.f32 %v1343, %v1379
  %v1386 = vadd.f32 %v1344, %v1380
  %1387 = vset.pattern.permute.xlu0 61
  %1388 = vperm.xlu0 %1387, %v928
  %v1389 = vpop.permute.xlu0 %1388
  %1391 = vset.pattern.permute.xlu0 61
  %1392 = vperm.xlu0 %1391, %v929
  %v1393 = vpop.permute.xlu0 %1392
  %1395 = vset.pattern.permute.xlu0 61
  %1396 = vperm.xlu0 %1395, %v930
  %v1397 = vpop.permute.xlu0 %1396
  %v1399 = vadd.f32 %v1381, %v1389
  %v1400 = vadd.f32 %v1382, %v1389
  %v1401 = vadd.f32 %v1383, %v1393
  %v1402 = vadd.f32 %v1384, %v1393
  %v1403 = vadd.f32 %v1385, %v1397
  %v1404 = vadd.f32 %v1386, %v1397
  %1405 = vset.pattern.permute.xlu0 86
  %1406 = vperm.xlu0 %1405, %v21
  %v1407 = vpop.permute.xlu0 %1406
  %1409 = vrot.lane.b32.xlu0 %v21, 66
  %v1410 = vpop.permute.xlu0 %1409
  %vm1411 = vcmask 195584
  %v1412 = vsel %vm1411, %v1410, 0
  %1414 = vmatprep.subr.mxu0 %v1400
  %1415 = vmatpush1.msra.mxu0 %v1399
  %1416 = vmatprep.subr.mxu0 %v1402
  %1417 = vmatpush1.msra.mxu0 %v1401
  %1418 = vmatprep.subr.mxu0 %v1404
  %1419 = vmatpush1.msra.mxu0 %v1403
  %1420 = vmatprep.subr.mxu0 0.0
  %1421 = vmatpush1.msra.mxu0 0.0
  %1422 = vmatprep.subr.mxu0 0.0
  %1423 = vmatpush1.msra.mxu0 0.0
  %1424 = vmatprep.subr.mxu0 0.0
  %1425 = vmatpush1.msra.mxu0 0.0
  %1426 = vmatprep.subr.mxu0 0.0
  %1427 = vmatpush1.msra.mxu0 0.0
  %1428 = vmatprep.subr.mxu0 0.0
  %1429 = vmatpush1.msra.mxu0 0.0
  %1430 = vmatprep.subr.mxu0 0.0
  %1431 = vmatpush1.msra.mxu0 0.0
  %1432 = vmatprep.subr.mxu0 0.0
  %1433 = vmatpush1.msra.mxu0 0.0
  %1434 = vmatprep.subr.mxu0 0.0
  %1435 = vmatpush1.msra.mxu0 0.0
  %1436 = vmatprep.subr.mxu0 0.0
  %1437 = vmatpush1.msra.mxu0 0.0
  %1438 = vmatprep.subr.mxu0 0.0
  %1439 = vmatpush1.msra.mxu0 0.0
  %1440 = vmatprep.subr.mxu0 0.0
  %1441 = vmatpush1.msra.mxu0 0.0
  %1442 = vmatprep.subr.mxu0 0.0
  %1443 = vmatpush1.msra.mxu0 0.0
  %1444 = vmatprep.subr.mxu0 0.0
  %1445 = vmatpush1.msra.mxu0 0.0
  %1446 = vmatprep.subr.mxu0 0.0
  %1447 = vmatpush1.msra.mxu0 0.0
  %1448 = vmatprep.subr.mxu0 0.0
  %1449 = vmatpush1.msra.mxu0 0.0
  %1450 = vmatprep.subr.mxu0 0.0
  %1451 = vmatpush1.msra.mxu0 0.0
  %1452 = vmatprep.subr.mxu0 0.0
  %1453 = vmatpush1.msra.mxu0 0.0
  %1454 = vmatprep.subr.mxu0 0.0
  %1455 = vmatpush1.msra.mxu0 0.0
  %1456 = vmatprep.subr.mxu0 0.0
  %1457 = vmatpush1.msra.mxu0 0.0
  %1458 = vmatprep.subr.mxu0 0.0
  %1459 = vmatpush1.msra.mxu0 0.0
  %1460 = vmatprep.subr.mxu0 0.0
  %1461 = vmatpush1.msra.mxu0 0.0
  %1462 = vmatprep.subr.mxu0 0.0
  %1463 = vmatpush1.msra.mxu0 0.0
  %1464 = vmatprep.subr.mxu0 0.0
  %1465 = vmatpush1.msra.mxu0 0.0
  %1466 = vmatprep.subr.mxu0 0.0
  %1467 = vmatpush1.msra.mxu0 0.0
  %1468 = vmatprep.subr.mxu0 0.0
  %1469 = vmatpush1.msra.mxu0 0.0
  %1470 = vmatprep.subr.mxu0 0.0
  %1471 = vmatpush1.msra.mxu0 0.0
  %1472 = vmatprep.subr.mxu0 0.0
  %1473 = vmatpush1.msra.mxu0 0.0
  %1474 = vmatprep.subr.mxu0 0.0
  %1475 = vmatpush1.msra.mxu0 0.0
  %1476 = vmatprep.subr.mxu0 0.0
  %1477 = vmatpush1.msra.mxu0 0.0
  %1478 = vmatprep.mubr.f32.mxu0 0.0
  %1479 = vmatmul.mubr.f32.gmra.mrb[0].mxu0 %v1412
  %v1480 = vpop.f32.mrb[0].mxu0
  %v1481 = vadd.f32 %v1407, %v1480
  %v1482 = vpop.f32.mrb[0].mxu0
  %v1483 = vadd.f32 %v1407, %v1482
  %1484 = vdwg.mxu0
  %v1485 = vadd.f32 %v1481, %v1483
  %1486 = vadd.xlane.f32.xlu0 %v1485
  %v1487 = vpop.xlane.xlu0 %1486
  %v1488 = vmul.f32 %v1487, %v374
  %v1489 = vsub.f32 %v1481, %v1488
  %v1490 = vsub.f32 %v1483, %v1488
  %v1491 = vmul.f32 %v1489, %v1489
  %v1492 = vmul.f32 %v1490, %v1490
  %v1493 = vadd.f32 %v1491, %v1492
  %1494 = vadd.xlane.f32.xlu0 %v1493
  %v1495 = vpop.xlane.xlu0 %1494
  %v1496 = vmul.f32 %v1495, %v374
  %v1497 = vadd.f32 %v1496, 1e-05
  %v1498 = vrsqrt.pop %v1497
  %v1499 = vmul.f32 %v1489, %v1498
  %v1500 = vmul.f32 %v1490, %v1498
  %1501 = vset.pattern.permute.xlu0 87
  %1502 = vperm.xlu0 %1501, %v21
  %v1503 = vpop.permute.xlu0 %1502
  %v1505 = vmul.f32 %v1499, %v1503
  %v1506 = vmul.f32 %v1500, %v1503
  %1507 = vset.pattern.permute.xlu0 88
  %1508 = vperm.xlu0 %1507, %v21
  %v1509 = vpop.permute.xlu0 %1508
  %v1511 = vadd.f32 %v1505, %v1509
  %v1512 = vadd.f32 %v1506, %v1509
  %vm1513 = vcmp.ge.f32.partialorder %v1511, 0.0
  %vm1514 = vcmp.ge.f32.partialorder %v1512, 0.0
  %1515 = vset.pattern.permute.xlu0 89
  %1516 = vperm.xlu0 %1515, %v21
  %v1517 = vpop.permute.xlu0 %1516
  %v1519 = vmul.f32 %v1517, %v1511
  %v1520 = vmul.f32 %v1517, %v1512
  %v1521 = vsel %vm1513, %v1511, %v1519
  %v1522 = vsel %vm1514, %v1512, %v1520
  %v1523 = vld [vmem:[%s2] sm:$0xff]
  %v1524 = vld [vmem:[%s2 + $0x10] sm:$0xff]
  %v1525 = vld [vmem:[%s2 + $0x20] sm:$0xff]
  %v1526 = vld [vmem:[%s2 + $0x30] sm:$0xff]
  %v1527 = vld [vmem:[%s2 + $0x8] sm:$0xff]
  %s1528 = scalar_lea.vmem %s1, 20
  %v1529 = vld [vmem:[%s1528] ss:$8 sm:$0x3]
  %1530 = vrot.lane.b32.xlu0 %v1521, 1
  %v1531 = vpop.permute.xlu0 %1530
  %1532 = vrot.lane.b32.xlu0 %v1522, 1
  %v1533 = vpop.permute.xlu0 %1532
  %v1534 = vsel %vm120, %v1531, %v1533
  %v1535 = vsel %vm120, %v1533, %v1531
  %v1536 = vmul.f32 %v1529, %v14
  %v1538 = vlaneseq
  %v1539 = vshrl.u32 %v1538, 7
  %v1540 = vsub.s32 0, %v1539
  %v1541 = vrot.slane %v1536, %v1540
  %v1542 = vlaneseq
  %v1543 = vshrl.u32 %v1542, 7
  %v1544 = vsub.s32 1, %v1543
  %v1545 = vrot.slane %v1536, %v1544
  %v1548 = vmul.f32 %v1534, %v1541
  %v1549 = vmul.f32 %v1535, %v1545
  %v1550 = vmul.f32 %v1125, %v1541
  %v1551 = vmul.f32 %v1126, %v1545
  %v1552 = vmul.f32 %v557, %v1541
  %v1553 = vmul.f32 %v558, %v1545
  %v1554 = vmul.f32 %v121, %v1541
  %v1555 = vmul.f32 %v122, %v1545
  %1557 = vset.pattern.permute.xlu0 90
  %1558 = vperm.xlu0 %1557, %v1523
  %v1559 = vpop.permute.xlu0 %1558
  %1562 = vset.pattern.permute.xlu0 90
  %1563 = vperm.xlu0 %1562, %v1524
  %v1564 = vpop.permute.xlu0 %1563
  %1567 = vset.pattern.permute.xlu0 90
  %1568 = vperm.xlu0 %1567, %v1525
  %v1569 = vpop.permute.xlu0 %1568
  %1572 = vset.pattern.permute.xlu0 90
  %1573 = vperm.xlu0 %1572, %v1526
  %v1574 = vpop.permute.xlu0 %1573
  %v1576 = vmul.f32 %v1548, %v1559
  %v1577 = vmul.f32 %v1549, %v1559
  %v1578 = vmul.f32 %v1550, %v1564
  %v1579 = vmul.f32 %v1551, %v1564
  %v1580 = vmul.f32 %v1552, %v1569
  %v1581 = vmul.f32 %v1553, %v1569
  %v1582 = vmul.f32 %v1554, %v1574
  %v1583 = vmul.f32 %v1555, %v1574
  %v1584 = vadd.f32 %v1576, 0.0
  %v1585 = vadd.f32 %v1577, 0.0
  %v1586 = vadd.f32 %v1578, 0.0
  %v1587 = vadd.f32 %v1579, 0.0
  %v1588 = vadd.f32 %v1580, 0.0
  %v1589 = vadd.f32 %v1581, 0.0
  %v1590 = vadd.f32 %v1582, 0.0
  %v1591 = vadd.f32 %v1583, 0.0
  %v1592 = vmul.f32 %v1529, %v16
  %v1594 = vlaneseq
  %v1595 = vshrl.u32 %v1594, 7
  %v1596 = vsub.s32 0, %v1595
  %v1597 = vrot.slane %v1592, %v1596
  %v1598 = vlaneseq
  %v1599 = vshrl.u32 %v1598, 7
  %v1600 = vsub.s32 1, %v1599
  %v1601 = vrot.slane %v1592, %v1600
  %v1604 = vmul.f32 %v1522, %v1597
  %v1605 = vmul.f32 %v1521, %v1601
  %v1606 = vmul.f32 %v927, %v1597
  %v1607 = vmul.f32 %v926, %v1601
  %v1608 = vmul.f32 %v409, %v1597
  %v1609 = vmul.f32 %v408, %v1601
  %v1610 = vmul.f32 %v20, %v1597
  %v1611 = vmul.f32 %v19, %v1601
  %1612 = vset.pattern.permute.xlu0 91
  %1613 = vperm.xlu0 %1612, %v1523
  %v1614 = vpop.permute.xlu0 %1613
  %1616 = vset.pattern.permute.xlu0 91
  %1617 = vperm.xlu0 %1616, %v1524
  %v1618 = vpop.permute.xlu0 %1617
  %1620 = vset.pattern.permute.xlu0 91
  %1621 = vperm.xlu0 %1620, %v1525
  %v1622 = vpop.permute.xlu0 %1621
  %1624 = vset.pattern.permute.xlu0 91
  %1625 = vperm.xlu0 %1624, %v1526
  %v1626 = vpop.permute.xlu0 %1625
  %v1628 = vmul.f32 %v1604, %v1614
  %v1629 = vmul.f32 %v1605, %v1614
  %v1630 = vmul.f32 %v1606, %v1618
  %v1631 = vmul.f32 %v1607, %v1618
  %v1632 = vmul.f32 %v1608, %v1622
  %v1633 = vmul.f32 %v1609, %v1622
  %v1634 = vmul.f32 %v1610, %v1626
  %v1635 = vmul.f32 %v1611, %v1626
  %v1636 = vadd.f32 %v1584, %v1628
  %v1637 = vadd.f32 %v1585, %v1629
  %v1638 = vadd.f32 %v1586, %v1630
  %v1639 = vadd.f32 %v1587, %v1631
  %v1640 = vadd.f32 %v1588, %v1632
  %v1641 = vadd.f32 %v1589, %v1633
  %v1642 = vadd.f32 %v1590, %v1634
  %v1643 = vadd.f32 %v1591, %v1635
  %1644 = vrot.lane.b32.xlu0 %v1521, 127
  %v1645 = vpop.permute.xlu0 %1644
  %1646 = vrot.lane.b32.xlu0 %v1522, 127
  %v1647 = vpop.permute.xlu0 %1646
  %v1648 = vsel %vm171, %v1645, %v1647
  %v1649 = vsel %vm171, %v1647, %v1645
  %v1650 = vmul.f32 %v1529, %v18
  %v1652 = vlaneseq
  %v1653 = vshrl.u32 %v1652, 7
  %v1654 = vsub.s32 0, %v1653
  %v1655 = vrot.slane %v1650, %v1654
  %v1656 = vlaneseq
  %v1657 = vshrl.u32 %v1656, 7
  %v1658 = vsub.s32 1, %v1657
  %v1659 = vrot.slane %v1650, %v1658
  %v1662 = vmul.f32 %v1649, %v1655
  %v1663 = vmul.f32 %v1648, %v1659
  %v1664 = vmul.f32 %v1216, %v1655
  %v1665 = vmul.f32 %v1215, %v1659
  %v1666 = vmul.f32 %v628, %v1655
  %v1667 = vmul.f32 %v627, %v1659
  %v1668 = vmul.f32 %v173, %v1655
  %v1669 = vmul.f32 %v172, %v1659
  %1670 = vset.pattern.permute.xlu0 92
  %1671 = vperm.xlu0 %1670, %v1523
  %v1672 = vpop.permute.xlu0 %1671
  %1674 = vset.pattern.permute.xlu0 92
  %1675 = vperm.xlu0 %1674, %v1524
  %v1676 = vpop.permute.xlu0 %1675
  %1678 = vset.pattern.permute.xlu0 92
  %1679 = vperm.xlu0 %1678, %v1525
  %v1680 = vpop.permute.xlu0 %1679
  %1682 = vset.pattern.permute.xlu0 92
  %1683 = vperm.xlu0 %1682, %v1526
  %v1684 = vpop.permute.xlu0 %1683
  %v1686 = vmul.f32 %v1662, %v1672
  %v1687 = vmul.f32 %v1663, %v1672
  %v1688 = vmul.f32 %v1664, %v1676
  %v1689 = vmul.f32 %v1665, %v1676
  %v1690 = vmul.f32 %v1666, %v1680
  %v1691 = vmul.f32 %v1667, %v1680
  %v1692 = vmul.f32 %v1668, %v1684
  %v1693 = vmul.f32 %v1669, %v1684
  %v1694 = vadd.f32 %v1636, %v1686
  %v1695 = vadd.f32 %v1637, %v1687
  %v1696 = vadd.f32 %v1638, %v1688
  %v1697 = vadd.f32 %v1639, %v1689
  %v1698 = vadd.f32 %v1640, %v1690
  %v1699 = vadd.f32 %v1641, %v1691
  %v1700 = vadd.f32 %v1642, %v1692
  %v1701 = vadd.f32 %v1643, %v1693
  %s1702 = scalar_lea.vmem %s1, 21
  %v1703 = vld [vmem:[%s1702] ss:$8 sm:$0x3]
  %v1704 = vmul.f32 %v1703, %v14
  %v1706 = vlaneseq
  %v1707 = vshrl.u32 %v1706, 7
  %v1708 = vsub.s32 0, %v1707
  %v1709 = vrot.slane %v1704, %v1708
  %v1710 = vlaneseq
  %v1711 = vshrl.u32 %v1710, 7
  %v1712 = vsub.s32 1, %v1711
  %v1713 = vrot.slane %v1704, %v1712
  %v1716 = vmul.f32 %v1535, %v1709
  %v1717 = vmul.f32 %v1534, %v1713
  %v1718 = vmul.f32 %v1126, %v1709
  %v1719 = vmul.f32 %v1125, %v1713
  %v1720 = vmul.f32 %v558, %v1709
  %v1721 = vmul.f32 %v557, %v1713
  %v1722 = vmul.f32 %v122, %v1709
  %v1723 = vmul.f32 %v121, %v1713
  %1724 = vset.pattern.permute.xlu0 93
  %1725 = vperm.xlu0 %1724, %v1523
  %v1726 = vpop.permute.xlu0 %1725
  %1728 = vset.pattern.permute.xlu0 93
  %1729 = vperm.xlu0 %1728, %v1524
  %v1730 = vpop.permute.xlu0 %1729
  %1732 = vset.pattern.permute.xlu0 93
  %1733 = vperm.xlu0 %1732, %v1525
  %v1734 = vpop.permute.xlu0 %1733
  %1736 = vset.pattern.permute.xlu0 93
  %1737 = vperm.xlu0 %1736, %v1526
  %v1738 = vpop.permute.xlu0 %1737
  %v1740 = vmul.f32 %v1716, %v1726
  %v1741 = vmul.f32 %v1717, %v1726
  %v1742 = vmul.f32 %v1718, %v1730
  %v1743 = vmul.f32 %v1719, %v1730
  %v1744 = vmul.f32 %v1720, %v1734
  %v1745 = vmul.f32 %v1721, %v1734
  %v1746 = vmul.f32 %v1722, %v1738
  %v1747 = vmul.f32 %v1723, %v1738
  %v1748 = vadd.f32 %v1694, %v1740
  %v1749 = vadd.f32 %v1695, %v1741
  %v1750 = vadd.f32 %v1696, %v1742
  %v1751 = vadd.f32 %v1697, %v1743
  %v1752 = vadd.f32 %v1698, %v1744
  %v1753 = vadd.f32 %v1699, %v1745
  %v1754 = vadd.f32 %v1700, %v1746
  %v1755 = vadd.f32 %v1701, %v1747
  %v1756 = vmul.f32 %v1703, %v16
  %v1758 = vlaneseq
  %v1759 = vshrl.u32 %v1758, 7
  %v1760 = vsub.s32 0, %v1759
  %v1761 = vrot.slane %v1756, %v1760
  %v1762 = vlaneseq
  %v1763 = vshrl.u32 %v1762, 7
  %v1764 = vsub.s32 1, %v1763
  %v1765 = vrot.slane %v1756, %v1764
  %v1768 = vmul.f32 %v1521, %v1761
  %v1769 = vmul.f32 %v1522, %v1765
  %v1770 = vmul.f32 %v926, %v1761
  %v1771 = vmul.f32 %v927, %v1765
  %v1772 = vmul.f32 %v408, %v1761
  %v1773 = vmul.f32 %v409, %v1765
  %v1774 = vmul.f32 %v19, %v1761
  %v1775 = vmul.f32 %v20, %v1765
  %1776 = vset.pattern.permute.xlu0 94
  %1777 = vperm.xlu0 %1776, %v1523
  %v1778 = vpop.permute.xlu0 %1777
  %1780 = vset.pattern.permute.xlu0 94
  %1781 = vperm.xlu0 %1780, %v1524
  %v1782 = vpop.permute.xlu0 %1781
  %1784 = vset.pattern.permute.xlu0 94
  %1785 = vperm.xlu0 %1784, %v1525
  %v1786 = vpop.permute.xlu0 %1785
  %1788 = vset.pattern.permute.xlu0 94
  %1789 = vperm.xlu0 %1788, %v1526
  %v1790 = vpop.permute.xlu0 %1789
  %v1792 = vmul.f32 %v1768, %v1778
  %v1793 = vmul.f32 %v1769, %v1778
  %v1794 = vmul.f32 %v1770, %v1782
  %v1795 = vmul.f32 %v1771, %v1782
  %v1796 = vmul.f32 %v1772, %v1786
  %v1797 = vmul.f32 %v1773, %v1786
  %v1798 = vmul.f32 %v1774, %v1790
  %v1799 = vmul.f32 %v1775, %v1790
  %v1800 = vadd.f32 %v1748, %v1792
  %v1801 = vadd.f32 %v1749, %v1793
  %v1802 = vadd.f32 %v1750, %v1794
  %v1803 = vadd.f32 %v1751, %v1795
  %v1804 = vadd.f32 %v1752, %v1796
  %v1805 = vadd.f32 %v1753, %v1797
  %v1806 = vadd.f32 %v1754, %v1798
  %v1807 = vadd.f32 %v1755, %v1799
  %v1808 = vmul.f32 %v1703, %v18
  %v1810 = vlaneseq
  %v1811 = vshrl.u32 %v1810, 7
  %v1812 = vsub.s32 0, %v1811
  %v1813 = vrot.slane %v1808, %v1812
  %v1814 = vlaneseq
  %v1815 = vshrl.u32 %v1814, 7
  %v1816 = vsub.s32 1, %v1815
  %v1817 = vrot.slane %v1808, %v1816
  %v1820 = vmul.f32 %v1648, %v1813
  %v1821 = vmul.f32 %v1649, %v1817
  %v1822 = vmul.f32 %v1215, %v1813
  %v1823 = vmul.f32 %v1216, %v1817
  %v1824 = vmul.f32 %v627, %v1813
  %v1825 = vmul.f32 %v628, %v1817
  %v1826 = vmul.f32 %v172, %v1813
  %v1827 = vmul.f32 %v173, %v1817
  %1828 = vset.pattern.permute.xlu0 95
  %1829 = vperm.xlu0 %1828, %v1523
  %v1830 = vpop.permute.xlu0 %1829
  %1832 = vset.pattern.permute.xlu0 95
  %1833 = vperm.xlu0 %1832, %v1524
  %v1834 = vpop.permute.xlu0 %1833
  %1836 = vset.pattern.permute.xlu0 95
  %1837 = vperm.xlu0 %1836, %v1525
  %v1838 = vpop.permute.xlu0 %1837
  %1840 = vset.pattern.permute.xlu0 95
  %1841 = vperm.xlu0 %1840, %v1526
  %v1842 = vpop.permute.xlu0 %1841
  %v1844 = vmul.f32 %v1820, %v1830
  %v1845 = vmul.f32 %v1821, %v1830
  %v1846 = vmul.f32 %v1822, %v1834
  %v1847 = vmul.f32 %v1823, %v1834
  %v1848 = vmul.f32 %v1824, %v1838
  %v1849 = vmul.f32 %v1825, %v1838
  %v1850 = vmul.f32 %v1826, %v1842
  %v1851 = vmul.f32 %v1827, %v1842
  %v1852 = vadd.f32 %v1800, %v1844
  %v1853 = vadd.f32 %v1801, %v1845
  %v1854 = vadd.f32 %v1802, %v1846
  %v1855 = vadd.f32 %v1803, %v1847
  %v1856 = vadd.f32 %v1804, %v1848
  %v1857 = vadd.f32 %v1805, %v1849
  %v1858 = vadd.f32 %v1806, %v1850
  %v1859 = vadd.f32 %v1807, %v1851
  %s1860 = scalar_lea.vmem %s1, 22
  %v1861 = vld [vmem:[%s1860] ss:$8 sm:$0x3]
  %v1862 = vmul.f32 %v1861, %v14
  %v1864 = vlaneseq
  %v1865 = vshrl.u32 %v1864, 7
  %v1866 = vsub.s32 0, %v1865
  %v1867 = vrot.slane %v1862, %v1866
  %v1868 = vlaneseq
  %v1869 = vshrl.u32 %v1868, 7
  %v1870 = vsub.s32 1, %v1869
  %v1871 = vrot.slane %v1862, %v1870
  %v1874 = vmul.f32 %v1534, %v1867
  %v1875 = vmul.f32 %v1535, %v1871
  %v1876 = vmul.f32 %v1125, %v1867
  %v1877 = vmul.f32 %v1126, %v1871
  %v1878 = vmul.f32 %v557, %v1867
  %v1879 = vmul.f32 %v558, %v1871
  %v1880 = vmul.f32 %v121, %v1867
  %v1881 = vmul.f32 %v122, %v1871
  %1882 = vset.pattern.permute.xlu0 96
  %1883 = vperm.xlu0 %1882, %v1523
  %v1884 = vpop.permute.xlu0 %1883
  %1886 = vset.pattern.permute.xlu0 96
  %1887 = vperm.xlu0 %1886, %v1524
  %v1888 = vpop.permute.xlu0 %1887
  %1890 = vset.pattern.permute.xlu0 96
  %1891 = vperm.xlu0 %1890, %v1525
  %v1892 = vpop.permute.xlu0 %1891
  %1894 = vset.pattern.permute.xlu0 96
  %1895 = vperm.xlu0 %1894, %v1526
  %v1896 = vpop.permute.xlu0 %1895
  %v1898 = vmul.f32 %v1874, %v1884
  %v1899 = vmul.f32 %v1875, %v1884
  %v1900 = vmul.f32 %v1876, %v1888
  %v1901 = vmul.f32 %v1877, %v1888
  %v1902 = vmul.f32 %v1878, %v1892
  %v1903 = vmul.f32 %v1879, %v1892
  %v1904 = vmul.f32 %v1880, %v1896
  %v1905 = vmul.f32 %v1881, %v1896
  %v1906 = vadd.f32 %v1852, %v1898
  %v1907 = vadd.f32 %v1853, %v1899
  %v1908 = vadd.f32 %v1854, %v1900
  %v1909 = vadd.f32 %v1855, %v1901
  %v1910 = vadd.f32 %v1856, %v1902
  %v1911 = vadd.f32 %v1857, %v1903
  %v1912 = vadd.f32 %v1858, %v1904
  %v1913 = vadd.f32 %v1859, %v1905
  %v1914 = vmul.f32 %v1861, %v16
  %v1916 = vlaneseq
  %v1917 = vshrl.u32 %v1916, 7
  %v1918 = vsub.s32 0, %v1917
  %v1919 = vrot.slane %v1914, %v1918
  %v1920 = vlaneseq
  %v1921 = vshrl.u32 %v1920, 7
  %v1922 = vsub.s32 1, %v1921
  %v1923 = vrot.slane %v1914, %v1922
  %v1926 = vmul.f32 %v1522, %v1919
  %v1927 = vmul.f32 %v1521, %v1923
  %v1928 = vmul.f32 %v927, %v1919
  %v1929 = vmul.f32 %v926, %v1923
  %v1930 = vmul.f32 %v409, %v1919
  %v1931 = vmul.f32 %v408, %v1923
  %v1932 = vmul.f32 %v20, %v1919
  %v1933 = vmul.f32 %v19, %v1923
  %1934 = vset.pattern.permute.xlu0 97
  %1935 = vperm.xlu0 %1934, %v1523
  %v1936 = vpop.permute.xlu0 %1935
  %1938 = vset.pattern.permute.xlu0 97
  %1939 = vperm.xlu0 %1938, %v1524
  %v1940 = vpop.permute.xlu0 %1939
  %1942 = vset.pattern.permute.xlu0 97
  %1943 = vperm.xlu0 %1942, %v1525
  %v1944 = vpop.permute.xlu0 %1943
  %1946 = vset.pattern.permute.xlu0 97
  %1947 = vperm.xlu0 %1946, %v1526
  %v1948 = vpop.permute.xlu0 %1947
  %v1950 = vmul.f32 %v1926, %v1936
  %v1951 = vmul.f32 %v1927, %v1936
  %v1952 = vmul.f32 %v1928, %v1940
  %v1953 = vmul.f32 %v1929, %v1940
  %v1954 = vmul.f32 %v1930, %v1944
  %v1955 = vmul.f32 %v1931, %v1944
  %v1956 = vmul.f32 %v1932, %v1948
  %v1957 = vmul.f32 %v1933, %v1948
  %v1958 = vadd.f32 %v1906, %v1950
  %v1959 = vadd.f32 %v1907, %v1951
  %v1960 = vadd.f32 %v1908, %v1952
  %v1961 = vadd.f32 %v1909, %v1953
  %v1962 = vadd.f32 %v1910, %v1954
  %v1963 = vadd.f32 %v1911, %v1955
  %v1964 = vadd.f32 %v1912, %v1956
  %v1965 = vadd.f32 %v1913, %v1957
  %v1966 = vmul.f32 %v1861, %v18
  %v1968 = vlaneseq
  %v1969 = vshrl.u32 %v1968, 7
  %v1970 = vsub.s32 0, %v1969
  %v1971 = vrot.slane %v1966, %v1970
  %v1972 = vlaneseq
  %v1973 = vshrl.u32 %v1972, 7
  %v1974 = vsub.s32 1, %v1973
  %v1975 = vrot.slane %v1966, %v1974
  %v1978 = vmul.f32 %v1649, %v1971
  %v1979 = vmul.f32 %v1648, %v1975
  %v1980 = vmul.f32 %v1216, %v1971
  %v1981 = vmul.f32 %v1215, %v1975
  %v1982 = vmul.f32 %v628, %v1971
  %v1983 = vmul.f32 %v627, %v1975
  %v1984 = vmul.f32 %v173, %v1971
  %v1985 = vmul.f32 %v172, %v1975
  %1986 = vset.pattern.permute.xlu0 98
  %1987 = vperm.xlu0 %1986, %v1523
  %v1988 = vpop.permute.xlu0 %1987
  %1990 = vset.pattern.permute.xlu0 98
  %1991 = vperm.xlu0 %1990, %v1524
  %v1992 = vpop.permute.xlu0 %1991
  %1994 = vset.pattern.permute.xlu0 98
  %1995 = vperm.xlu0 %1994, %v1525
  %v1996 = vpop.permute.xlu0 %1995
  %1998 = vset.pattern.permute.xlu0 98
  %1999 = vperm.xlu0 %1998, %v1526
  %v2000 = vpop.permute.xlu0 %1999
  %v2002 = vmul.f32 %v1978, %v1988
  %v2003 = vmul.f32 %v1979, %v1988
  %v2004 = vmul.f32 %v1980, %v1992
  %v2005 = vmul.f32 %v1981, %v1992
  %v2006 = vmul.f32 %v1982, %v1996
  %v2007 = vmul.f32 %v1983, %v1996
  %v2008 = vmul.f32 %v1984, %v2000
  %v2009 = vmul.f32 %v1985, %v2000
  %v2010 = vadd.f32 %v1958, %v2002
  %v2011 = vadd.f32 %v1959, %v2003
  %v2012 = vadd.f32 %v1960, %v2004
  %v2013 = vadd.f32 %v1961, %v2005
  %v2014 = vadd.f32 %v1962, %v2006
  %v2015 = vadd.f32 %v1963, %v2007
  %v2016 = vadd.f32 %v1964, %v2008
  %v2017 = vadd.f32 %v1965, %v2009
  %2018 = vset.pattern.permute.xlu0 99
  %2019 = vperm.xlu0 %2018, %v1523
  %v2020 = vpop.permute.xlu0 %2019
  %2022 = vset.pattern.permute.xlu0 99
  %2023 = vperm.xlu0 %2022, %v1524
  %v2024 = vpop.permute.xlu0 %2023
  %2026 = vset.pattern.permute.xlu0 99
  %2027 = vperm.xlu0 %2026, %v1525
  %v2028 = vpop.permute.xlu0 %2027
  %2030 = vset.pattern.permute.xlu0 99
  %2031 = vperm.xlu0 %2030, %v1526
  %v2032 = vpop.permute.xlu0 %2031
  %v2034 = vadd.f32 %v2010, %v2020
  %v2035 = vadd.f32 %v2011, %v2020
  %v2036 = vadd.f32 %v2012, %v2024
  %v2037 = vadd.f32 %v2013, %v2024
  %v2038 = vadd.f32 %v2014, %v2028
  %v2039 = vadd.f32 %v2015, %v2028
  %v2040 = vadd.f32 %v2016, %v2032
  %v2041 = vadd.f32 %v2017, %v2032
  %2043 = vset.pattern.permute.xlu0 4
  %2044 = vperm.xlu0 %2043, %v1527
  %v2045 = vpop.permute.xlu0 %2044
  %2047 = vrot.lane.b32.xlu0 %v1523, 28
  %v2048 = vpop.permute.xlu0 %2047
  %2049 = vrot.lane.b32.xlu0 %v1527, 28
  %v2050 = vpop.permute.xlu0 %2049
  %vm2051 = vcmask 228352
  %v2052 = vsel %vm2051, %v2048, %v2050
  %vm2053 = vcmask 261120
  %v2054 = vsel %vm2053, %v2052, 0
  %2056 = vmatprep.subr.mxu0 %v2035
  %2057 = vmatpush1.msra.mxu0 %v2034
  %2058 = vmatprep.subr.mxu0 %v2037
  %2059 = vmatpush1.msra.mxu0 %v2036
  %2060 = vmatprep.subr.mxu0 %v2039
  %2061 = vmatpush1.msra.mxu0 %v2038
  %2062 = vmatprep.subr.mxu0 %v2041
  %2063 = vmatpush1.msra.mxu0 %v2040
  %2064 = vmatprep.subr.mxu0 0.0
  %2065 = vmatpush1.msra.mxu0 0.0
  %2066 = vmatprep.subr.mxu0 0.0
  %2067 = vmatpush1.msra.mxu0 0.0
  %2068 = vmatprep.subr.mxu0 0.0
  %2069 = vmatpush1.msra.mxu0 0.0
  %2070 = vmatprep.subr.mxu0 0.0
  %2071 = vmatpush1.msra.mxu0 0.0
  %2072 = vmatprep.subr.mxu0 0.0
  %2073 = vmatpush1.msra.mxu0 0.0
  %2074 = vmatprep.subr.mxu0 0.0
  %2075 = vmatpush1.msra.mxu0 0.0
  %2076 = vmatprep.subr.mxu0 0.0
  %2077 = vmatpush1.msra.mxu0 0.0
  %2078 = vmatprep.subr.mxu0 0.0
  %2079 = vmatpush1.msra.mxu0 0.0
  %2080 = vmatprep.subr.mxu0 0.0
  %2081 = vmatpush1.msra.mxu0 0.0
  %2082 = vmatprep.subr.mxu0 0.0
  %2083 = vmatpush1.msra.mxu0 0.0
  %2084 = vmatprep.subr.mxu0 0.0
  %2085 = vmatpush1.msra.mxu0 0.0
  %2086 = vmatprep.subr.mxu0 0.0
  %2087 = vmatpush1.msra.mxu0 0.0
  %2088 = vmatprep.subr.mxu0 0.0
  %2089 = vmatpush1.msra.mxu0 0.0
  %2090 = vmatprep.subr.mxu0 0.0
  %2091 = vmatpush1.msra.mxu0 0.0
  %2092 = vmatprep.subr.mxu0 0.0
  %2093 = vmatpush1.msra.mxu0 0.0
  %2094 = vmatprep.subr.mxu0 0.0
  %2095 = vmatpush1.msra.mxu0 0.0
  %2096 = vmatprep.subr.mxu0 0.0
  %2097 = vmatpush1.msra.mxu0 0.0
  %2098 = vmatprep.subr.mxu0 0.0
  %2099 = vmatpush1.msra.mxu0 0.0
  %2100 = vmatprep.subr.mxu0 0.0
  %2101 = vmatpush1.msra.mxu0 0.0
  %2102 = vmatprep.subr.mxu0 0.0
  %2103 = vmatpush1.msra.mxu0 0.0
  %2104 = vmatprep.subr.mxu0 0.0
  %2105 = vmatpush1.msra.mxu0 0.0
  %2106 = vmatprep.subr.mxu0 0.0
  %2107 = vmatpush1.msra.mxu0 0.0
  %2108 = vmatprep.subr.mxu0 0.0
  %2109 = vmatpush1.msra.mxu0 0.0
  %2110 = vmatprep.subr.mxu0 0.0
  %2111 = vmatpush1.msra.mxu0 0.0
  %2112 = vmatprep.subr.mxu0 0.0
  %2113 = vmatpush1.msra.mxu0 0.0
  %2114 = vmatprep.subr.mxu0 0.0
  %2115 = vmatpush1.msra.mxu0 0.0
  %2116 = vmatprep.subr.mxu0 0.0
  %2117 = vmatpush1.msra.mxu0 0.0
  %2118 = vmatprep.subr.mxu0 0.0
  %2119 = vmatpush1.msra.mxu0 0.0
  %2120 = vmatprep.mubr.f32.mxu0 0.0
  %2121 = vmatmul.mubr.f32.gmra.mrb[0].mxu0 %v2054
  %v2122 = vpop.f32.mrb[0].mxu0
  %v2123 = vadd.f32 %v2045, %v2122
  %v2124 = vpop.f32.mrb[0].mxu0
  %v2125 = vadd.f32 %v2045, %v2124
  %2126 = vdwg.mxu0
  %v2127 = vadd.f32 %v2123, %v2125
  %2128 = vadd.xlane.f32.xlu0 %v2127
  %v2129 = vpop.xlane.xlu0 %2128
  %v2130 = vmul.f32 %v2129, %v374
  %v2131 = vsub.f32 %v2123, %v2130
  %v2132 = vsub.f32 %v2125, %v2130
  %v2133 = vmul.f32 %v2131, %v2131
  %v2134 = vmul.f32 %v2132, %v2132
  %v2135 = vadd.f32 %v2133, %v2134
  %2136 = vadd.xlane.f32.xlu0 %v2135
  %v2137 = vpop.xlane.xlu0 %2136
  %v2138 = vmul.f32 %v2137, %v374
  %v2139 = vadd.f32 %v2138, 1e-05
  %v2140 = vrsqrt.pop %v2139
  %v2141 = vmul.f32 %v2131, %v2140
  %v2142 = vmul.f32 %v2132, %v2140
  %2143 = vset.pattern.permute.xlu0 5
  %2144 = vperm.xlu0 %2143, %v1527
  %v2145 = vpop.permute.xlu0 %2144
  %v2147 = vmul.f32 %v2141, %v2145
  %v2148 = vmul.f32 %v2142, %v2145
  %2149 = vset.pattern.permute.xlu0 6
  %2150 = vperm.xlu0 %2149, %v1527
  %v2151 = vpop.permute.xlu0 %2150
  %v2153 = vadd.f32 %v2147, %v2151
  %v2154 = vadd.f32 %v2148, %v2151
  %vm2155 = vcmp.ge.f32.partialorder %v2153, 0.0
  %vm2156 = vcmp.ge.f32.partialorder %v2154, 0.0
  %2157 = vset.pattern.permute.xlu0 7
  %2158 = vperm.xlu0 %2157, %v1527
  %v2159 = vpop.permute.xlu0 %2158
  %v2161 = vmul.f32 %v2159, %v2153
  %v2162 = vmul.f32 %v2159, %v2154
  %v2163 = vsel %vm2155, %v2153, %v2161
  %v2164 = vsel %vm2156, %v2154, %v2162
  %v2165 = vld [vmem:[%s2 + $0x8] sm:$0xff]
  %v2166 = vld [vmem:[%s2 + $0x18] sm:$0xff]
  %v2167 = vld [vmem:[%s2 + $0x28] sm:$0xff]
  %2171 = vrot.lane.b32.xlu0 %v2165, 120
  %v2172 = vpop.permute.xlu0 %2171
  %2173 = vrot.lane.b32.xlu0 %v2166, 120
  %v2174 = vpop.permute.xlu0 %2173
  %2175 = vrot.lane.b32.xlu0 %v2167, 120
  %v2176 = vpop.permute.xlu0 %2175
  %v2177 = vsel %vm297, %v2172, 0
  %v2179 = vsel %vm297, %v2174, 0
  %v2181 = vsel %vm297, %v2176, 0
  %2183 = vmatprep.subr.mxu0 %v2164
  %2184 = vmatpush1.msra.mxu0 %v2163
  %2185 = vmatprep.subr.mxu0 0.0
  %2186 = vmatpush1.msra.mxu0 0.0
  %2187 = vmatprep.subr.mxu0 0.0
  %2188 = vmatpush1.msra.mxu0 0.0
  %2189 = vmatprep.subr.mxu0 0.0
  %2190 = vmatpush1.msra.mxu0 0.0
  %2191 = vmatprep.subr.mxu0 0.0
  %2192 = vmatpush1.msra.mxu0 0.0
  %2193 = vmatprep.subr.mxu0 0.0
  %2194 = vmatpush1.msra.mxu0 0.0
  %2195 = vmatprep.subr.mxu0 0.0
  %2196 = vmatpush1.msra.mxu0 0.0
  %2197 = vmatprep.subr.mxu0 0.0
  %2198 = vmatpush1.msra.mxu0 0.0
  %2199 = vmatprep.subr.mxu0 0.0
  %2200 = vmatpush1.msra.mxu0 0.0
  %2201 = vmatprep.subr.mxu0 0.0
  %2202 = vmatpush1.msra.mxu0 0.0
  %2203 = vmatprep.subr.mxu0 0.0
  %2204 = vmatpush1.msra.mxu0 0.0
  %2205 = vmatprep.subr.mxu0 0.0
  %2206 = vmatpush1.msra.mxu0 0.0
  %2207 = vmatprep.subr.mxu0 0.0
  %2208 = vmatpush1.msra.mxu0 0.0
  %2209 = vmatprep.subr.mxu0 0.0
  %2210 = vmatpush1.msra.mxu0 0.0
  %2211 = vmatprep.subr.mxu0 0.0
  %2212 = vmatpush1.msra.mxu0 0.0
  %2213 = vmatprep.subr.mxu0 0.0
  %2214 = vmatpush1.msra.mxu0 0.0
  %2215 = vmatprep.subr.mxu0 0.0
  %2216 = vmatpush1.msra.mxu0 0.0
  %2217 = vmatprep.subr.mxu0 0.0
  %2218 = vmatpush1.msra.mxu0 0.0
  %2219 = vmatprep.subr.mxu0 0.0
  %2220 = vmatpush1.msra.mxu0 0.0
  %2221 = vmatprep.subr.mxu0 0.0
  %2222 = vmatpush1.msra.mxu0 0.0
  %2223 = vmatprep.subr.mxu0 0.0
  %2224 = vmatpush1.msra.mxu0 0.0
  %2225 = vmatprep.subr.mxu0 0.0
  %2226 = vmatpush1.msra.mxu0 0.0
  %2227 = vmatprep.subr.mxu0 0.0
  %2228 = vmatpush1.msra.mxu0 0.0
  %2229 = vmatprep.subr.mxu0 0.0
  %2230 = vmatpush1.msra.mxu0 0.0
  %2231 = vmatprep.subr.mxu0 0.0
  %2232 = vmatpush1.msra.mxu0 0.0
  %2233 = vmatprep.subr.mxu0 0.0
  %2234 = vmatpush1.msra.mxu0 0.0
  %2235 = vmatprep.subr.mxu0 0.0
  %2236 = vmatpush1.msra.mxu0 0.0
  %2237 = vmatprep.subr.mxu0 0.0
  %2238 = vmatpush1.msra.mxu0 0.0
  %2239 = vmatprep.subr.mxu0 0.0
  %2240 = vmatpush1.msra.mxu0 0.0
  %2241 = vmatprep.subr.mxu0 0.0
  %2242 = vmatpush1.msra.mxu0 0.0
  %2243 = vmatprep.subr.mxu0 0.0
  %2244 = vmatpush1.msra.mxu0 0.0
  %2245 = vmatprep.subr.mxu0 0.0
  %2246 = vmatpush1.msra.mxu0 0.0
  %2247 = vmatprep.mubr.f32.mxu0 0.0
  %2248 = vmatmul.mubr.f32.gmra.mrb[0].mxu0 %v2177
  %v2249 = vpop.f32.mrb[0].mxu0
  %v2250 = vadd.f32 0.0, %v2249
  %v2251 = vpop.f32.mrb[0].mxu0
  %v2252 = vadd.f32 0.0, %v2251
  %2253 = vmatprep.mubr.f32.mxu0 0.0
  %2254 = vmatmul.mubr.f32.gmra.mrb[0].mxu0 %v2179
  %v2255 = vpop.f32.mrb[0].mxu0
  %v2256 = vadd.f32 0.0, %v2255
  %v2257 = vpop.f32.mrb[0].mxu0
  %v2258 = vadd.f32 0.0, %v2257
  %2259 = vmatprep.mubr.f32.mxu0 0.0
  %2260 = vmatmul.mubr.f32.gmra.mrb[0].mxu0 %v2181
  %v2261 = vpop.f32.mrb[0].mxu0
  %v2262 = vadd.f32 0.0, %v2261
  %v2263 = vpop.f32.mrb[0].mxu0
  %v2264 = vadd.f32 0.0, %v2263
  %2265 = vdwg.mxu0
  %v2266 = vsub.f32 1.0, %v18
  %2267 = vset.pattern.permute.xlu0 16
  %2268 = vperm.xlu0 %2267, %v1527
  %v2269 = vpop.permute.xlu0 %2268
  %v2271 = vadd.f32 %v2269, %v2250
  %v2272 = vadd.f32 %v2269, %v2252
  %2273 = vrot.lane.b32.xlu0 %v2262, 1
  %v2274 = vpop.permute.xlu0 %2273
  %2275 = vrot.lane.b32.xlu0 %v2264, 1
  %v2276 = vpop.permute.xlu0 %2275
  %v2277 = vsel %vm120, %v2274, %v2276
  %v2278 = vsel %vm120, %v2276, %v2274
  %v2280 = vlaneseq
  %v2281 = vshrl.u32 %v2280, 7
  %v2282 = vsub.s32 0, %v2281
  %v2283 = vrot.slane %v14, %v2282
  %v2284 = vlaneseq
  %v2285 = vshrl.u32 %v2284, 7
  %v2286 = vsub.s32 1, %v2285
  %v2287 = vrot.slane %v14, %v2286
  %v2290 = vmul.f32 %v2278, %v2283
  %v2291 = vmul.f32 %v2277, %v2287
  %v2292 = vadd.f32 %v2271, %v2290
  %v2293 = vadd.f32 %v2272, %v2291
  %v2294 = vadd.f32 %v2269, %v2256
  %v2295 = vadd.f32 %v2269, %v2258
  %v2296 = vadd.f32 %v2269, %v2262
  %v2297 = vadd.f32 %v2269, %v2264
  %v2298 = vadd.f32 %v2292, %v2293
  %2299 = vadd.xlane.f32.xlu0 %v2298
  %v2300 = vpop.xlane.xlu0 %2299
  %v2301 = vadd.f32 %v2294, %v2295
  %2302 = vadd.xlane.f32.xlu0 %v2301
  %v2303 = vpop.xlane.xlu0 %2302
  %v2304 = vadd.f32 %v2300, %v2303
  %v2306 = vlaneseq
  %v2307 = vshrl.u32 %v2306, 7
  %v2308 = vsub.s32 0, %v2307
  %v2309 = vrot.slane %v2266, %v2308
  %v2310 = vlaneseq
  %v2311 = vshrl.u32 %v2310, 7
  %v2312 = vsub.s32 1, %v2311
  %v2313 = vrot.slane %v2266, %v2312
  %v2316 = vmul.f32 %v2296, %v2309
  %v2317 = vmul.f32 %v2297, %v2313
  %v2318 = vadd.f32 %v2316, %v2317
  %2319 = vadd.xlane.f32.xlu0 %v2318
  %v2320 = vpop.xlane.xlu0 %2319
  %v2321 = vadd.f32 %v2304, %v2320
  %v2322 = vrcp.pop 528.0
  %v2323 = vmul.f32 %v2321, %v2322
  %v2324 = vsub.f32 %v2292, %v2323
  %v2325 = vsub.f32 %v2293, %v2323
  %v2326 = vsub.f32 %v2294, %v2323
  %v2327 = vsub.f32 %v2295, %v2323
  %v2328 = vsub.f32 %v2296, %v2323
  %v2329 = vsub.f32 %v2297, %v2323
  %v2330 = vmul.f32 %v2328, %v2309
  %v2331 = vmul.f32 %v2329, %v2313
  %v2332 = vmul.f32 %v2324, %v2324
  %v2333 = vmul.f32 %v2325, %v2325
  %v2334 = vadd.f32 %v2332, %v2333
  %2335 = vadd.xlane.f32.xlu0 %v2334
  %v2336 = vpop.xlane.xlu0 %2335
  %v2337 = vmul.f32 %v2326, %v2326
  %v2338 = vmul.f32 %v2327, %v2327
  %v2339 = vadd.f32 %v2337, %v2338
  %2340 = vadd.xlane.f32.xlu0 %v2339
  %v2341 = vpop.xlane.xlu0 %2340
  %v2342 = vadd.f32 %v2336, %v2341
  %v2343 = vmul.f32 %v2330, %v2330
  %v2344 = vmul.f32 %v2331, %v2331
  %v2345 = vadd.f32 %v2343, %v2344
  %2346 = vadd.xlane.f32.xlu0 %v2345
  %v2347 = vpop.xlane.xlu0 %2346
  %v2348 = vadd.f32 %v2342, %v2347
  %v2349 = vmul.f32 %v2348, %v2322
  %v2350 = vadd.f32 %v2349, 1e-05
  %v2351 = vrsqrt.pop %v2350
  %v2352 = vmul.f32 %v2324, %v2351
  %v2353 = vmul.f32 %v2325, %v2351
  %2354 = vset.pattern.permute.xlu0 17
  %2355 = vperm.xlu0 %2354, %v1527
  %v2356 = vpop.permute.xlu0 %2355
  %v2358 = vmul.f32 %v2352, %v2356
  %v2359 = vmul.f32 %v2353, %v2356
  %2360 = vset.pattern.permute.xlu0 18
  %2361 = vperm.xlu0 %2360, %v1527
  %v2362 = vpop.permute.xlu0 %2361
  %v2364 = vadd.f32 %v2358, %v2362
  %v2365 = vadd.f32 %v2359, %v2362
  %vm2366 = vcmp.ge.f32.partialorder %v2364, 0.0
  %vm2367 = vcmp.ge.f32.partialorder %v2365, 0.0
  %2368 = vset.pattern.permute.xlu0 19
  %2369 = vperm.xlu0 %2368, %v1527
  %v2370 = vpop.permute.xlu0 %2369
  %v2372 = vmul.f32 %v2370, %v2364
  %v2373 = vmul.f32 %v2370, %v2365
  %v2374 = vsel %vm2366, %v2364, %v2372
  %v2375 = vsel %vm2367, %v2365, %v2373
  %v2376 = vmul.f32 %v2326, %v2351
  %v2377 = vmul.f32 %v2327, %v2351
  %v2378 = vmul.f32 %v2376, %v2356
  %v2379 = vmul.f32 %v2377, %v2356
  %v2380 = vadd.f32 %v2378, %v2362
  %v2381 = vadd.f32 %v2379, %v2362
  %vm2382 = vcmp.ge.f32.partialorder %v2380, 0.0
  %vm2383 = vcmp.ge.f32.partialorder %v2381, 0.0
  %v2384 = vmul.f32 %v2370, %v2380
  %v2385 = vmul.f32 %v2370, %v2381
  %v2386 = vsel %vm2382, %v2380, %v2384
  %v2387 = vsel %vm2383, %v2381, %v2385
  %v2388 = vmul.f32 %v2328, %v2351
  %v2389 = vmul.f32 %v2329, %v2351
  %v2390 = vmul.f32 %v2388, %v2356
  %v2391 = vmul.f32 %v2389, %v2356
  %v2392 = vadd.f32 %v2390, %v2362
  %v2393 = vadd.f32 %v2391, %v2362
  %vm2394 = vcmp.ge.f32.partialorder %v2392, 0.0
  %vm2395 = vcmp.ge.f32.partialorder %v2393, 0.0
  %v2396 = vmul.f32 %v2370, %v2392
  %v2397 = vmul.f32 %v2370, %v2393
  %v2398 = vsel %vm2394, %v2392, %v2396
  %v2399 = vsel %vm2395, %v2393, %v2397
  %v2400 = vld [vmem:[%s2 + $0x8] sm:$0xff]
  %v2401 = vld [vmem:[%s2 + $0x18] sm:$0xff]
  %2403 = vset.pattern.permute.xlu0 44
  %2404 = vperm.xlu0 %2403, %v2400
  %v2405 = vpop.permute.xlu0 %2404
  %2408 = vset.pattern.permute.xlu0 44
  %2409 = vperm.xlu0 %2408, %v2401
  %v2410 = vpop.permute.xlu0 %2409
  %2412 = vrot.lane.b32.xlu0 %v2400, 108
  %v2413 = vpop.permute.xlu0 %2412
  %2414 = vrot.lane.b32.xlu0 %v2401, 108
  %v2415 = vpop.permute.xlu0 %2414
  %v2416 = vsel %vm1411, %v2413, 0
  %v2418 = vsel %vm1411, %v2415, 0
  %2420 = vmatprep.subr.mxu0 %v2375
  %2421 = vmatpush1.msra.mxu0 %v2374
  %2422 = vmatprep.subr.mxu0 %v2387
  %2423 = vmatpush1.msra.mxu0 %v2386
  %2424 = vmatprep.subr.mxu0 %v2399
  %2425 = vmatpush1.msra.mxu0 %v2398
  %2426 = vmatprep.subr.mxu0 0.0
  %2427 = vmatpush1.msra.mxu0 0.0
  %2428 = vmatprep.subr.mxu0 0.0
  %2429 = vmatpush1.msra.mxu0 0.0
  %2430 = vmatprep.subr.mxu0 0.0
  %2431 = vmatpush1.msra.mxu0 0.0
  %2432 = vmatprep.subr.mxu0 0.0
  %2433 = vmatpush1.msra.mxu0 0.0
  %2434 = vmatprep.subr.mxu0 0.0
  %2435 = vmatpush1.msra.mxu0 0.0
  %2436 = vmatprep.subr.mxu0 0.0
  %2437 = vmatpush1.msra.mxu0 0.0
  %2438 = vmatprep.subr.mxu0 0.0
  %2439 = vmatpush1.msra.mxu0 0.0
  %2440 = vmatprep.subr.mxu0 0.0
  %2441 = vmatpush1.msra.mxu0 0.0
  %2442 = vmatprep.subr.mxu0 0.0
  %2443 = vmatpush1.msra.mxu0 0.0
  %2444 = vmatprep.subr.mxu0 0.0
  %2445 = vmatpush1.msra.mxu0 0.0
  %2446 = vmatprep.subr.mxu0 0.0
  %2447 = vmatpush1.msra.mxu0 0.0
  %2448 = vmatprep.subr.mxu0 0.0
  %2449 = vmatpush1.msra.mxu0 0.0
  %2450 = vmatprep.subr.mxu0 0.0
  %2451 = vmatpush1.msra.mxu0 0.0
  %2452 = vmatprep.subr.mxu0 0.0
  %2453 = vmatpush1.msra.mxu0 0.0
  %2454 = vmatprep.subr.mxu0 0.0
  %2455 = vmatpush1.msra.mxu0 0.0
  %2456 = vmatprep.subr.mxu0 0.0
  %2457 = vmatpush1.msra.mxu0 0.0
  %2458 = vmatprep.subr.mxu0 0.0
  %2459 = vmatpush1.msra.mxu0 0.0
  %2460 = vmatprep.subr.mxu0 0.0
  %2461 = vmatpush1.msra.mxu0 0.0
  %2462 = vmatprep.subr.mxu0 0.0
  %2463 = vmatpush1.msra.mxu0 0.0
  %2464 = vmatprep.subr.mxu0 0.0
  %2465 = vmatpush1.msra.mxu0 0.0
  %2466 = vmatprep.subr.mxu0 0.0
  %2467 = vmatpush1.msra.mxu0 0.0
  %2468 = vmatprep.subr.mxu0 0.0
  %2469 = vmatpush1.msra.mxu0 0.0
  %2470 = vmatprep.subr.mxu0 0.0
  %2471 = vmatpush1.msra.mxu0 0.0
  %2472 = vmatprep.subr.mxu0 0.0
  %2473 = vmatpush1.msra.mxu0 0.0
  %2474 = vmatprep.subr.mxu0 0.0
  %2475 = vmatpush1.msra.mxu0 0.0
  %2476 = vmatprep.subr.mxu0 0.0
  %2477 = vmatpush1.msra.mxu0 0.0
  %2478 = vmatprep.subr.mxu0 0.0
  %2479 = vmatpush1.msra.mxu0 0.0
  %2480 = vmatprep.subr.mxu0 0.0
  %2481 = vmatpush1.msra.mxu0 0.0
  %2482 = vmatprep.subr.mxu0 0.0
  %2483 = vmatpush1.msra.mxu0 0.0
  %2484 = vmatprep.mubr.f32.mxu0 0.0
  %2485 = vmatmul.mubr.f32.gmra.mrb[0].mxu0 %v2416
  %v2486 = vpop.f32.mrb[0].mxu0
  %v2487 = vadd.f32 %v2405, %v2486
  %v2488 = vpop.f32.mrb[0].mxu0
  %v2489 = vadd.f32 %v2405, %v2488
  %2490 = vmatprep.mubr.f32.mxu0 0.0
  %2491 = vmatmul.mubr.f32.gmra.mrb[0].mxu0 %v2418
  %v2492 = vpop.f32.mrb[0].mxu0
  %v2493 = vadd.f32 %v2410, %v2492
  %v2494 = vpop.f32.mrb[0].mxu0
  %v2495 = vadd.f32 %v2410, %v2494
  %2496 = vdwg.mxu0
  %v2497 = vand.u32 2147483647, %v2487
  %v2498 = vand.u32 2147483647, %v2489
  %v2499 = vand.u32 2147483647, %v2493
  %v2500 = vand.u32 2147483647, %v2495
  %v2501 = vmax.f32 %v2497, %v2499
  %v2502 = vmax.f32 %v2498, %v2500
  %v2503 = vmin.f32 %v2497, %v2499
  %v2504 = vmin.f32 %v2498, %v2500
  %vm2505 = vcmp.eq.f32.partialorder %v2501, 0.0
  %vm2506 = vcmp.eq.f32.partialorder %v2502, 0.0
  %v2507 = vsel %vm2505, 1.0, %v2501
  %v2508 = vsel %vm2506, 1.0, %v2502
  %v2509 = vrcp.pop %v2507
  %v2510 = vrcp.pop %v2508
  %v2511 = vmul.f32 %v2507, %v2509
  %v2512 = vmul.f32 %v2508, %v2510
  %v2513 = vsub.f32 2.0, %v2511
  %v2514 = vsub.f32 2.0, %v2512
  %v2515 = vmul.f32 %v2509, %v2513
  %v2516 = vmul.f32 %v2510, %v2514
  %v2517 = vmul.f32 %v2503, %v2515
  %v2518 = vmul.f32 %v2504, %v2516
  %vm2519 = vcmp.gt.f32.partialorder %v2517, 0.41421357
  %vm2520 = vcmp.gt.f32.partialorder %v2518, 0.41421357
  %v2521 = vsub.f32 %v2517, 1.0
  %v2522 = vsub.f32 %v2518, 1.0
  %v2523 = vadd.f32 %v2517, 1.0
  %v2524 = vadd.f32 %v2518, 1.0
  %v2525 = vrcp.pop %v2523
  %v2526 = vrcp.pop %v2524
  %v2527 = vmul.f32 %v2523, %v2525
  %v2528 = vmul.f32 %v2524, %v2526
  %v2529 = vsub.f32 2.0, %v2527
  %v2530 = vsub.f32 2.0, %v2528
  %v2531 = vmul.f32 %v2525, %v2529
  %v2532 = vmul.f32 %v2526, %v2530
  %v2533 = vmul.f32 %v2521, %v2531
  %v2534 = vmul.f32 %v2522, %v2532
  %v2535 = vsel %vm2519, %v2533, %v2517
  %v2536 = vsel %vm2520, %v2534, %v2518
  %v2537 = vsel %vm2519, 0.7853982, 0.0
  %v2538 = vsel %vm2520, 0.7853982, 0.0
  %v2539 = vmul.f32 %v2535, %v2535
  %v2540 = vmul.f32 %v2536, %v2536
  %v2541 = vmul.f32 %v2539, 0.080537446
  %v2542 = vmul.f32 %v2540, 0.080537446
  %v2543 = vsub.f32 %v2541, 0.13877685
  %v2544 = vsub.f32 %v2542, 0.13877685
  %v2545 = vmul.f32 %v2543, %v2539
  %v2546 = vmul.f32 %v2544, %v2540
  %v2547 = vadd.f32 %v2545, 0.19977711
  %v2548 = vadd.f32 %v2546, 0.19977711
  %v2549 = vmul.f32 %v2547, %v2539
  %v2550 = vmul.f32 %v2548, %v2540
  %v2551 = vsub.f32 %v2549, 0.3333295
  %v2552 = vsub.f32 %v2550, 0.3333295
  %v2553 = vmul.f32 %v2535, %v2539
  %v2554 = vmul.f32 %v2536, %v2540
  %v2555 = vmul.f32 %v2553, %v2551
  %v2556 = vmul.f32 %v2554, %v2552
  %v2557 = vadd.f32 %v2535, %v2555
  %v2558 = vadd.f32 %v2536, %v2556
  %v2559 = vadd.f32 %v2537, %v2557
  %v2560 = vadd.f32 %v2538, %v2558
  %vm2561 = vcmp.gt.f32.partialorder %v2499, %v2497
  %vm2562 = vcmp.gt.f32.partialorder %v2500, %v2498
  %v2563 = vsub.f32 1.5707964, %v2559
  %v2564 = vsub.f32 1.5707964, %v2560
  %v2565 = vsel %vm2561, %v2563, %v2559
  %v2566 = vsel %vm2562, %v2564, %v2560
  %vm2567 = vcmp.lt.f32.partialorder %v2487, 0.0
  %vm2568 = vcmp.lt.f32.partialorder %v2489, 0.0
  %v2569 = vsub.f32 3.1415927, %v2565
  %v2570 = vsub.f32 3.1415927, %v2566
  %v2571 = vsel %vm2567, %v2569, %v2565
  %v2572 = vsel %vm2568, %v2570, %v2566
  %vm2573 = vcmp.lt.f32.partialorder %v2493, 0.0
  %vm2574 = vcmp.lt.f32.partialorder %v2495, 0.0
  %v2575 = vsub.f32 0.0, %v2571
  %v2576 = vsub.f32 0.0, %v2572
  %v2577 = vsel %vm2573, %v2575, %v2571
  %v2578 = vsel %vm2574, %v2576, %v2572
  %2579 = vst [vmem:[%s3] sm:$0xff] %v2577
  %2580 = vst [vmem:[%s3 + $0x8] sm:$0xff] %v2578
  // Predicated region
  $region14: #{phase_decoder_forward.1} parent=0 // pred_check
    _
  $region15: #{phase_decoder_forward.1} parent=0 // pred_check_branch
    %2582 = sbr.rel (0) target = $region17
  $region16: #{phase_decoder_forward.1} parent=0 // pred_region
    _
  $region17: #{phase_decoder_forward.1} parent=0 // pred_fallthru
    _
  // Predicated region
  $region18: #{phase_decoder_forward.1} parent=0 // pred_check
    _
  $region19: #{phase_decoder_forward.1} parent=0 // pred_check_branch
    %2584 = sbr.rel (0) target = $region21
  $region20: #{phase_decoder_forward.1} parent=0 // pred_region
    _
  $region21: #{phase_decoder_forward.1} parent=0 // pred_fallthru
    _

</llo_original>
